<compile_context>
chip_gen: v7x
topology: tpu7x:2x2x1
jax: 0.10.0
libtpu: 0.0.40
codegen_flags: <defaults>
</compile_context>

<pallas_src>
import functools

import jax
import jax.numpy as jnp
from jax.experimental import pallas as pl
from jax.experimental.pallas import tpu as pltpu


def _pad_lr(kernel_size, dilation):
    if kernel_size % 2 != 0:
        pad_l = dilation * (kernel_size - 1) // 2 + 1
        pad_r = dilation * (kernel_size - 1) // 2 + 1
    else:
        pad_l = dilation * (kernel_size - 2) // 2 + 1
        pad_r = dilation * kernel_size // 2 + 1
    return pad_l, pad_r


# ---------------------------------------------------------------------------
# Fused Pallas kernel: whole SCIBlock (4 branches + combines) per batch row.
# ---------------------------------------------------------------------------
def _sci_block_kernel(xe_ref, xo_ref, w1_ref, b1_ref, w2_ref, b2_ref,
                      even_out_ref, odd_out_ref, xp_scr,
                      *, K, dilation, pad_l, pad_r, L, L1, Lp, neg_slope):
    C = xe_ref.shape[-1]

    def branch(x, idx):
        # ---- ReplicationPad1d, in-kernel via VMEM scratch stores ----------
        xp_scr[pad_l:pad_l + L, :] = x
        xp_scr[0:pad_l, :] = jnp.broadcast_to(x[0:1, :], (pad_l, C))
        xp_scr[pad_l + L:Lp, :] = jnp.broadcast_to(x[L - 1:L, :], (pad_r, C))

        # ---- Conv1d(C -> D, kernel_size=K, dilation) as K shifted matmuls -
        h = jnp.dot(xp_scr[0:L1, :], w1_ref[idx * K + 0],
                    preferred_element_type=jnp.float32)
        for k in range(1, K):
            h = h + jnp.dot(xp_scr[k * dilation:k * dilation + L1, :],
                            w1_ref[idx * K + k],
                            preferred_element_type=jnp.float32)
        h = h + b1_ref[idx]                          # bias added once, at end
        h = jnp.where(h >= 0, h, neg_slope * h)      # LeakyReLU(0.01)
        # TODO(synk): Dropout is treated as identity (eval-mode semantics).

        # ---- Conv1d(D -> C, kernel_size=3, dilation=1) ---------------------
        o = jnp.dot(h[0:L, :], w2_ref[idx * 3 + 0],
                    preferred_element_type=jnp.float32)
        for k in range(1, 3):
            o = o + jnp.dot(h[k:k + L, :], w2_ref[idx * 3 + k],
                            preferred_element_type=jnp.float32)
        o = o + b2_ref[idx]
        return jnp.tanh(o)

    x_even = xe_ref[0].astype(jnp.float32)   # (L, C)
    x_odd = xo_ref[0].astype(jnp.float32)    # (L, C)

    # Stacked-weight branch order: 0 = phi, 1 = psi, 2 = rho, 3 = eta.
    x_odd_s = x_odd * jnp.exp(branch(x_even, 0))     # x_odd  * exp(phi(x_even))
    x_even_s = x_even * jnp.exp(branch(x_odd, 1))    # x_even * exp(psi(x_odd))
    x_even_update = x_even_s + branch(x_odd_s, 3)    # + eta(x_odd_s)
    x_odd_update = x_odd_s - branch(x_even_s, 2)     # - rho(x_even_s)

    even_out_ref[0] = x_even_update.astype(even_out_ref.dtype)
    odd_out_ref[0] = x_odd_update.astype(odd_out_ref.dtype)


# ---------------------------------------------------------------------------
# Wrapper: one pallas_call for the whole SCIBlock forward.
# ---------------------------------------------------------------------------
def sci_block(x, params, *, kernel_size=3, dilation=1):
    """SCIBlock forward. x: (B, T, C) -> (x_even_update, x_odd_update), each (B, T//2, C)."""
    B, T, C = x.shape
    assert T % 2 == 0, "seq_len must be even"
    L = T // 2
    K = kernel_size
    D = params["b1"].shape[-1]

    pad_l, pad_r = _pad_lr(K, dilation)
    Lp = L + pad_l + pad_r
    L1 = Lp - dilation * (K - 1)          # length after the first conv
    assert L1 - 2 == L, "second conv (k=3) must restore the original length"

    # TODO(synk): even/odd stride-2 split kept as cheap one-time wrapper-side
    # XLA slices instead of strided in-kernel loads.
    x_even = x[:, 0::2, :]
    x_odd = x[:, 1::2, :]

    kernel = functools.partial(
        _sci_block_kernel, K=K, dilation=dilation, pad_l=pad_l, pad_r=pad_r,
        L=L, L1=L1, Lp=Lp, neg_slope=0.01)

    even_up, odd_up = pl.pallas_call(
        kernel,
        out_shape=(jax.ShapeDtypeStruct((B, L, C), x.dtype),
                   jax.ShapeDtypeStruct((B, L, C), x.dtype)),
        grid_spec=pltpu.PrefetchScalarGridSpec(
            num_scalar_prefetch=0,
            grid=(B,),
            in_specs=[
                pl.BlockSpec((1, L, C), lambda b: (b, 0, 0)),       # x_even
                pl.BlockSpec((1, L, C), lambda b: (b, 0, 0)),       # x_odd
                pl.BlockSpec((4 * K, C, D), lambda b: (0, 0, 0)),   # conv1 weights (stacked)
                pl.BlockSpec((4, 1, D), lambda b: (0, 0, 0)),       # conv1 biases
                pl.BlockSpec((4 * 3, D, C), lambda b: (0, 0, 0)),   # conv2 weights (stacked)
                pl.BlockSpec((4, 1, C), lambda b: (0, 0, 0)),       # conv2 biases
            ],
            out_specs=[
                pl.BlockSpec((1, L, C), lambda b: (b, 0, 0)),       # x_even_update
                pl.BlockSpec((1, L, C), lambda b: (b, 0, 0)),       # x_odd_update
            ],
            scratch_shapes=[pltpu.VMEM((Lp, C), jnp.float32)],      # padded driver
        ),
        compiler_params=pltpu.CompilerParams(
            dimension_semantics=("parallel",)),
    )(x_even, x_odd, params["w1"], params["b1"], params["w2"], params["b2"])
    return even_up, odd_up


# ---------------------------------------------------------------------------
# Pure-JAX reference (same eval-mode semantics) for a correctness self-check.
# ---------------------------------------------------------------------------
def _branch_ref(x, w1, b1, w2, b2, *, K, dilation, pad_l, pad_r):
    B, L, C = x.shape
    xp = jnp.concatenate(
        [jnp.repeat(x[:, :1, :], pad_l, axis=1), x,
         jnp.repeat(x[:, -1:, :], pad_r, axis=1)], axis=1)
    L1 = xp.shape[1] - dilation * (K - 1)
    h = sum(jnp.einsum("blc,cd->bld", xp[:, k * dilation:k * dilation + L1, :], w1[k])
            for k in range(K)) + b1[None]
    h = jnp.where(h >= 0, h, 0.01 * h)
    o = sum(jnp.einsum("bld,dc->blc", h[:, k:k + L, :], w2[k])
            for k in range(3)) + b2[None]
    return jnp.tanh(o)


def sci_block_ref(x, params, *, kernel_size=3, dilation=1):
    B, T, C = x.shape
    L = T // 2
    K = kernel_size
    D = params["b1"].shape[-1]
    pad_l, pad_r = _pad_lr(K, dilation)
    x_even = x[:, 0::2, :]
    x_odd = x[:, 1::2, :]
    w1 = params["w1"].reshape(4, K, C, D)
    w2 = params["w2"].reshape(4, 3, D, C)
    b1, b2 = params["b1"], params["b2"]

    def br(xx, i):
        return _branch_ref(xx, w1[i], b1[i], w2[i], b2[i],
                           K=K, dilation=dilation, pad_l=pad_l, pad_r=pad_r)

    x_odd_s = x_odd * jnp.exp(br(x_even, 0))    # phi
    x_even_s = x_even * jnp.exp(br(x_odd, 1))   # psi
    x_even_update = x_even_s + br(x_odd_s, 3)   # eta
    x_odd_update = x_odd_s - br(x_even_s, 2)    # rho
    return x_even_update, x_odd_update


# ---------------------------------------------------------------------------
# Deterministic parameter init (shapes from the PyTorch module's __init__).
# Weights stored per-tap, transposed for (time, chan) @ (chan, out) matmuls:
#   w1[br*K + k, i, o] == torch.<branch>.conv1.weight[o, i, k]
#   w2[br*3 + k, j, o] == torch.<branch>.conv2.weight[o, j, k]
# Branch order in the stacks: phi, psi, rho, eta.
# ---------------------------------------------------------------------------
def init_sci_block(key, C, D, K=3):
    keys = jax.random.split(key, 4)
    w1s, b1s, w2s, b2s = [], [], [], []
    for kk in keys:
        k1, k2, k3, k4 = jax.random.split(kk, 4)
        w1s.append(jax.random.normal(k1, (K, C, D), jnp.float32) * (1.0 / (C * K)) ** 0.5)
        b1s.append(jax.random.normal(k2, (1, D), jnp.float32) * 0.05)
        w2s.append(jax.random.normal(k3, (3, D, C), jnp.float32) * (1.0 / (D * 3)) ** 0.5)
        b2s.append(jax.random.normal(k4, (1, C), jnp.float32) * 0.05)
    return dict(
        w1=jnp.concatenate(w1s, axis=0),   # (4*K, C, D)
        b1=jnp.stack(b1s, axis=0),         # (4, 1, D)
        w2=jnp.concatenate(w2s, axis=0),   # (4*3, D, C)
        b2=jnp.stack(b2s, axis=0),         # (4, 1, C)
    )


# ---------------------------------------------------------------------------
if __name__ == "__main__":
    B, T, C, D = 2, 16, 8, 32   # batch, seq_len, enc_in, d_model

    key = jax.random.PRNGKey(0)
    kx, kp = jax.random.split(key)
    x = jax.random.normal(kx, (B, T, C), jnp.float32)
    params = init_sci_block(kp, C, D, K=3)

    even_up, odd_up = jax.block_until_ready(jax.jit(sci_block)(x, params))

    assert even_up.shape == (B, T // 2, C), even_up.shape
    assert odd_up.shape == (B, T // 2, C), odd_up.shape
    assert bool(jnp.all(jnp.isfinite(even_up))) and bool(jnp.all(jnp.isfinite(odd_up)))

    # Self-check against a pure-JAX reference of the same eval-mode forward.
    ref_even, ref_odd = sci_block_ref(x, params)
    assert jnp.allclose(even_up, ref_even, atol=1e-4, rtol=1e-4)
    assert jnp.allclose(odd_up, ref_odd, atol=1e-4, rtol=1e-4)

    print("KERNEL_OK")
</pallas_src>

<mosaic_0001>
module attributes {stable_mosaic.version = 11 : i64} {
  func.func @_sci_block_kernel(%arg0: i32, %arg1: memref<1x8x8xf32, #tpu.memory_space<vmem>>, %arg2: memref<1x8x8xf32, #tpu.memory_space<vmem>>, %arg3: memref<12x8x32xf32, #tpu.memory_space<vmem>>, %arg4: memref<4x1x32xf32, #tpu.memory_space<vmem>>, %arg5: memref<12x32x8xf32, #tpu.memory_space<vmem>>, %arg6: memref<4x1x8xf32, #tpu.memory_space<vmem>>, %arg7: memref<1x8x8xf32, #tpu.memory_space<vmem>>, %arg8: memref<1x8x8xf32, #tpu.memory_space<vmem>>, %arg9: memref<12x8xf32, #tpu.memory_space<vmem>>) attributes {dimension_semantics = [#tpu.dimension_semantics<parallel>], iteration_bounds = array<i64: 2>, scalar_prefetch = 0 : i64, scratch_operands = 1 : i64, tpu.core_type = #tpu.core_type<tc>, window_params = [{transform_indices = @transform_0, window_bounds = array<i64: 1, 8, 8>}, {transform_indices = @transform_1, window_bounds = array<i64: 1, 8, 8>}, {pipeline_mode = #tpu.pipeline_mode<synchronous>, transform_indices = @transform_2, window_bounds = array<i64: 12, 8, 32>}, {pipeline_mode = #tpu.pipeline_mode<synchronous>, transform_indices = @transform_3, window_bounds = array<i64: 4, 1, 32>}, {pipeline_mode = #tpu.pipeline_mode<synchronous>, transform_indices = @transform_4, window_bounds = array<i64: 12, 32, 8>}, {pipeline_mode = #tpu.pipeline_mode<synchronous>, transform_indices = @transform_5, window_bounds = array<i64: 4, 1, 8>}, {transform_indices = @transform_6, window_bounds = array<i64: 1, 8, 8>}, {transform_indices = @transform_7, window_bounds = array<i64: 1, 8, 8>}]} {
    %c0 = arith.constant 0 : index
    %c0_0 = arith.constant 0 : index
    %c0_1 = arith.constant 0 : index
    %0 = vector.load %arg1[%c0, %c0_0, %c0_1] : memref<1x8x8xf32, #tpu.memory_space<vmem>>, vector<1x8x8xf32>
    %1 = vector.shape_cast %0 : vector<1x8x8xf32> to vector<8x8xf32>
    %c0_2 = arith.constant 0 : index
    %c0_3 = arith.constant 0 : index
    %c0_4 = arith.constant 0 : index
    %2 = vector.load %arg2[%c0_2, %c0_3, %c0_4] : memref<1x8x8xf32, #tpu.memory_space<vmem>>, vector<1x8x8xf32>
    %3 = vector.shape_cast %2 : vector<1x8x8xf32> to vector<8x8xf32>
    %c2 = arith.constant 2 : index
    %c0_5 = arith.constant 0 : index
    %4 = vector.load %arg9[%c2, %c0_5] : memref<12x8xf32, #tpu.memory_space<vmem>>, vector<8x8xf32>
    tpu.vector_store %arg9[%c2, %c0_5], %1 {strides = array<i32>} : memref<12x8xf32, #tpu.memory_space<vmem>>, vector<8x8xf32>,
    %5 = vector.extract_strided_slice %1 {offsets = [0, 0], sizes = [1, 8], strides = [1, 1]} : vector<8x8xf32> to vector<1x8xf32>
    %6 = vector.shape_cast %5 : vector<1x8xf32> to vector<1x8xf32>
    %7 = vector.broadcast %6 : vector<1x8xf32> to vector<2x8xf32>
    %c0_6 = arith.constant 0 : index
    %c0_7 = arith.constant 0 : index
    %8 = vector.load %arg9[%c0_6, %c0_7] : memref<12x8xf32, #tpu.memory_space<vmem>>, vector<2x8xf32>
    tpu.vector_store %arg9[%c0_6, %c0_7], %7 {strides = array<i32>} : memref<12x8xf32, #tpu.memory_space<vmem>>, vector<2x8xf32>,
    %9 = vector.extract_strided_slice %1 {offsets = [7, 0], sizes = [1, 8], strides = [1, 1]} : vector<8x8xf32> to vector<1x8xf32>
    %10 = vector.shape_cast %9 : vector<1x8xf32> to vector<1x8xf32>
    %11 = vector.broadcast %10 : vector<1x8xf32> to vector<2x8xf32>
    %c10 = arith.constant 10 : index
    %c0_8 = arith.constant 0 : index
    %12 = vector.load %arg9[%c10, %c0_8] : memref<12x8xf32, #tpu.memory_space<vmem>>, vector<2x8xf32>
    tpu.vector_store %arg9[%c10, %c0_8], %11 {strides = array<i32>} : memref<12x8xf32, #tpu.memory_space<vmem>>, vector<2x8xf32>,
    %c0_9 = arith.constant 0 : index
    %c0_10 = arith.constant 0 : index
    %13 = vector.load %arg9[%c0_9, %c0_10] : memref<12x8xf32, #tpu.memory_space<vmem>>, vector<10x8xf32>
    %c0_11 = arith.constant 0 : index
    %c0_12 = arith.constant 0 : index
    %c0_13 = arith.constant 0 : index
    %14 = vector.load %arg3[%c0_11, %c0_12, %c0_13] : memref<12x8x32xf32, #tpu.memory_space<vmem>>, vector<1x8x32xf32>
    %15 = vector.shape_cast %14 : vector<1x8x32xf32> to vector<8x32xf32>
    %cst = arith.constant dense<0.000000e+00> : vector<10x32xf32>
    %16 = tpu.matmul %13, %15, %cst {dimension_numbers = #tpu.dot_dimension_numbers<[1], [0], [0], [1], [0, 0, 1, 1], [], []>} : vector<10x8xf32>, vector<8x32xf32>, vector<10x32xf32> -> vector<10x32xf32>
    %c1 = arith.constant 1 : index
    %c0_14 = arith.constant 0 : index
    %17 = vector.load %arg9[%c1, %c0_14] : memref<12x8xf32, #tpu.memory_space<vmem>>, vector<10x8xf32>
    %c1_15 = arith.constant 1 : index
    %c0_16 = arith.constant 0 : index
    %c0_17 = arith.constant 0 : index
    %18 = vector.load %arg3[%c1_15, %c0_16, %c0_17] : memref<12x8x32xf32, #tpu.memory_space<vmem>>, vector<1x8x32xf32>
    %19 = vector.shape_cast %18 : vector<1x8x32xf32> to vector<8x32xf32>
    %cst_18 = arith.constant dense<0.000000e+00> : vector<10x32xf32>
    %20 = tpu.matmul %17, %19, %cst_18 {dimension_numbers = #tpu.dot_dimension_numbers<[1], [0], [0], [1], [0, 0, 1, 1], [], []>} : vector<10x8xf32>, vector<8x32xf32>, vector<10x32xf32> -> vector<10x32xf32>
    %21 = arith.addf %16, %20 : vector<10x32xf32>
    %c2_19 = arith.constant 2 : index
    %c0_20 = arith.constant 0 : index
    %22 = vector.load %arg9[%c2_19, %c0_20] : memref<12x8xf32, #tpu.memory_space<vmem>>, vector<10x8xf32>
    %c2_21 = arith.constant 2 : index
    %c0_22 = arith.constant 0 : index
    %c0_23 = arith.constant 0 : index
    %23 = vector.load %arg3[%c2_21, %c0_22, %c0_23] : memref<12x8x32xf32, #tpu.memory_space<vmem>>, vector<1x8x32xf32>
    %24 = vector.shape_cast %23 : vector<1x8x32xf32> to vector<8x32xf32>
    %cst_24 = arith.constant dense<0.000000e+00> : vector<10x32xf32>
    %25 = tpu.matmul %22, %24, %cst_24 {dimension_numbers = #tpu.dot_dimension_numbers<[1], [0], [0], [1], [0, 0, 1, 1], [], []>} : vector<10x8xf32>, vector<8x32xf32>, vector<10x32xf32> -> vector<10x32xf32>
    %26 = arith.addf %21, %25 : vector<10x32xf32>
    %c0_25 = arith.constant 0 : index
    %c0_26 = arith.constant 0 : index
    %c0_27 = arith.constant 0 : index
    %27 = vector.load %arg4[%c0_25, %c0_26, %c0_27] : memref<4x1x32xf32, #tpu.memory_space<vmem>>, vector<1x1x32xf32>
    %28 = vector.shape_cast %27 : vector<1x1x32xf32> to vector<1x32xf32>
    %29 = vector.broadcast %28 : vector<1x32xf32> to vector<10x32xf32>
    %30 = arith.addf %26, %29 : vector<10x32xf32>
    %cst_28 = arith.constant 0.000000e+00 : f32
    %31 = vector.broadcast %cst_28 : f32 to vector<10x32xf32>
    %32 = arith.cmpf oge, %30, %31 : vector<10x32xf32>
    %cst_29 = arith.constant 0.00999999977 : f32
    %33 = vector.broadcast %cst_29 : f32 to vector<10x32xf32>
    %34 = arith.mulf %33, %30 : vector<10x32xf32>
    %35 = arith.select %32, %30, %34 : vector<10x32xi1>, vector<10x32xf32>
    %36 = vector.extract_strided_slice %35 {offsets = [0, 0], sizes = [8, 32], strides = [1, 1]} : vector<10x32xf32> to vector<8x32xf32>
    %c0_30 = arith.constant 0 : index
    %c0_31 = arith.constant 0 : index
    %c0_32 = arith.constant 0 : index
    %37 = vector.load %arg5[%c0_30, %c0_31, %c0_32] : memref<12x32x8xf32, #tpu.memory_space<vmem>>, vector<1x32x8xf32>
    %38 = vector.shape_cast %37 : vector<1x32x8xf32> to vector<32x8xf32>
    %cst_33 = arith.constant dense<0.000000e+00> : vector<8x8xf32>
    %39 = tpu.matmul %36, %38, %cst_33 {dimension_numbers = #tpu.dot_dimension_numbers<[1], [0], [0], [1], [0, 0, 1, 1], [], []>} : vector<8x32xf32>, vector<32x8xf32>, vector<8x8xf32> -> vector<8x8xf32>
    %40 = vector.extract_strided_slice %35 {offsets = [1, 0], sizes = [8, 32], strides = [1, 1]} : vector<10x32xf32> to vector<8x32xf32>
    %c1_34 = arith.constant 1 : index
    %c0_35 = arith.constant 0 : index
    %c0_36 = arith.constant 0 : index
    %41 = vector.load %arg5[%c1_34, %c0_35, %c0_36] : memref<12x32x8xf32, #tpu.memory_space<vmem>>, vector<1x32x8xf32>
    %42 = vector.shape_cast %41 : vector<1x32x8xf32> to vector<32x8xf32>
    %cst_37 = arith.constant dense<0.000000e+00> : vector<8x8xf32>
    %43 = tpu.matmul %40, %42, %cst_37 {dimension_numbers = #tpu.dot_dimension_numbers<[1], [0], [0], [1], [0, 0, 1, 1], [], []>} : vector<8x32xf32>, vector<32x8xf32>, vector<8x8xf32> -> vector<8x8xf32>
    %44 = arith.addf %39, %43 : vector<8x8xf32>
    %45 = vector.extract_strided_slice %35 {offsets = [2, 0], sizes = [8, 32], strides = [1, 1]} : vector<10x32xf32> to vector<8x32xf32>
    %c2_38 = arith.constant 2 : index
    %c0_39 = arith.constant 0 : index
    %c0_40 = arith.constant 0 : index
    %46 = vector.load %arg5[%c2_38, %c0_39, %c0_40] : memref<12x32x8xf32, #tpu.memory_space<vmem>>, vector<1x32x8xf32>
    %47 = vector.shape_cast %46 : vector<1x32x8xf32> to vector<32x8xf32>
    %cst_41 = arith.constant dense<0.000000e+00> : vector<8x8xf32>
    %48 = tpu.matmul %45, %47, %cst_41 {dimension_numbers = #tpu.dot_dimension_numbers<[1], [0], [0], [1], [0, 0, 1, 1], [], []>} : vector<8x32xf32>, vector<32x8xf32>, vector<8x8xf32> -> vector<8x8xf32>
    %49 = arith.addf %44, %48 : vector<8x8xf32>
    %c0_42 = arith.constant 0 : index
    %c0_43 = arith.constant 0 : index
    %c0_44 = arith.constant 0 : index
    %50 = vector.load %arg6[%c0_42, %c0_43, %c0_44] : memref<4x1x8xf32, #tpu.memory_space<vmem>>, vector<1x1x8xf32>
    %51 = vector.shape_cast %50 : vector<1x1x8xf32> to vector<1x8xf32>
    %52 = vector.broadcast %51 : vector<1x8xf32> to vector<8x8xf32>
    %53 = arith.addf %49, %52 : vector<8x8xf32>
    %54 = math.tanh %53 : vector<8x8xf32>
    %55 = math.exp %54 : vector<8x8xf32>
    %56 = arith.mulf %3, %55 : vector<8x8xf32>
    %c2_45 = arith.constant 2 : index
    %c0_46 = arith.constant 0 : index
    %57 = vector.load %arg9[%c2_45, %c0_46] : memref<12x8xf32, #tpu.memory_space<vmem>>, vector<8x8xf32>
    tpu.vector_store %arg9[%c2_45, %c0_46], %3 {strides = array<i32>} : memref<12x8xf32, #tpu.memory_space<vmem>>, vector<8x8xf32>,
    %58 = vector.extract_strided_slice %3 {offsets = [0, 0], sizes = [1, 8], strides = [1, 1]} : vector<8x8xf32> to vector<1x8xf32>
    %59 = vector.shape_cast %58 : vector<1x8xf32> to vector<1x8xf32>
    %60 = vector.broadcast %59 : vector<1x8xf32> to vector<2x8xf32>
    %c0_47 = arith.constant 0 : index
    %c0_48 = arith.constant 0 : index
    %61 = vector.load %arg9[%c0_47, %c0_48] : memref<12x8xf32, #tpu.memory_space<vmem>>, vector<2x8xf32>
    tpu.vector_store %arg9[%c0_47, %c0_48], %60 {strides = array<i32>} : memref<12x8xf32, #tpu.memory_space<vmem>>, vector<2x8xf32>,
    %62 = vector.extract_strided_slice %3 {offsets = [7, 0], sizes = [1, 8], strides = [1, 1]} : vector<8x8xf32> to vector<1x8xf32>
    %63 = vector.shape_cast %62 : vector<1x8xf32> to vector<1x8xf32>
    %64 = vector.broadcast %63 : vector<1x8xf32> to vector<2x8xf32>
    %c10_49 = arith.constant 10 : index
    %c0_50 = arith.constant 0 : index
    %65 = vector.load %arg9[%c10_49, %c0_50] : memref<12x8xf32, #tpu.memory_space<vmem>>, vector<2x8xf32>
    tpu.vector_store %arg9[%c10_49, %c0_50], %64 {strides = array<i32>} : memref<12x8xf32, #tpu.memory_space<vmem>>, vector<2x8xf32>,
    %c0_51 = arith.constant 0 : index
    %c0_52 = arith.constant 0 : index
    %66 = vector.load %arg9[%c0_51, %c0_52] : memref<12x8xf32, #tpu.memory_space<vmem>>, vector<10x8xf32>
    %c3 = arith.constant 3 : index
    %c0_53 = arith.constant 0 : index
    %c0_54 = arith.constant 0 : index
    %67 = vector.load %arg3[%c3, %c0_53, %c0_54] : memref<12x8x32xf32, #tpu.memory_space<vmem>>, vector<1x8x32xf32>
    %68 = vector.shape_cast %67 : vector<1x8x32xf32> to vector<8x32xf32>
    %cst_55 = arith.constant dense<0.000000e+00> : vector<10x32xf32>
    %69 = tpu.matmul %66, %68, %cst_55 {dimension_numbers = #tpu.dot_dimension_numbers<[1], [0], [0], [1], [0, 0, 1, 1], [], []>} : vector<10x8xf32>, vector<8x32xf32>, vector<10x32xf32> -> vector<10x32xf32>
    %c1_56 = arith.constant 1 : index
    %c0_57 = arith.constant 0 : index
    %70 = vector.load %arg9[%c1_56, %c0_57] : memref<12x8xf32, #tpu.memory_space<vmem>>, vector<10x8xf32>
    %c4 = arith.constant 4 : index
    %c0_58 = arith.constant 0 : index
    %c0_59 = arith.constant 0 : index
    %71 = vector.load %arg3[%c4, %c0_58, %c0_59] : memref<12x8x32xf32, #tpu.memory_space<vmem>>, vector<1x8x32xf32>
    %72 = vector.shape_cast %71 : vector<1x8x32xf32> to vector<8x32xf32>
    %cst_60 = arith.constant dense<0.000000e+00> : vector<10x32xf32>
    %73 = tpu.matmul %70, %72, %cst_60 {dimension_numbers = #tpu.dot_dimension_numbers<[1], [0], [0], [1], [0, 0, 1, 1], [], []>} : vector<10x8xf32>, vector<8x32xf32>, vector<10x32xf32> -> vector<10x32xf32>
    %74 = arith.addf %69, %73 : vector<10x32xf32>
    %c2_61 = arith.constant 2 : index
    %c0_62 = arith.constant 0 : index
    %75 = vector.load %arg9[%c2_61, %c0_62] : memref<12x8xf32, #tpu.memory_space<vmem>>, vector<10x8xf32>
    %c5 = arith.constant 5 : index
    %c0_63 = arith.constant 0 : index
    %c0_64 = arith.constant 0 : index
    %76 = vector.load %arg3[%c5, %c0_63, %c0_64] : memref<12x8x32xf32, #tpu.memory_space<vmem>>, vector<1x8x32xf32>
    %77 = vector.shape_cast %76 : vector<1x8x32xf32> to vector<8x32xf32>
    %cst_65 = arith.constant dense<0.000000e+00> : vector<10x32xf32>
    %78 = tpu.matmul %75, %77, %cst_65 {dimension_numbers = #tpu.dot_dimension_numbers<[1], [0], [0], [1], [0, 0, 1, 1], [], []>} : vector<10x8xf32>, vector<8x32xf32>, vector<10x32xf32> -> vector<10x32xf32>
    %79 = arith.addf %74, %78 : vector<10x32xf32>
    %c1_66 = arith.constant 1 : index
    %c0_67 = arith.constant 0 : index
    %c0_68 = arith.constant 0 : index
    %80 = vector.load %arg4[%c1_66, %c0_67, %c0_68] : memref<4x1x32xf32, #tpu.memory_space<vmem>>, vector<1x1x32xf32>
    %81 = vector.shape_cast %80 : vector<1x1x32xf32> to vector<1x32xf32>
    %82 = vector.broadcast %81 : vector<1x32xf32> to vector<10x32xf32>
    %83 = arith.addf %79, %82 : vector<10x32xf32>
    %cst_69 = arith.constant 0.000000e+00 : f32
    %84 = vector.broadcast %cst_69 : f32 to vector<10x32xf32>
    %85 = arith.cmpf oge, %83, %84 : vector<10x32xf32>
    %cst_70 = arith.constant 0.00999999977 : f32
    %86 = vector.broadcast %cst_70 : f32 to vector<10x32xf32>
    %87 = arith.mulf %86, %83 : vector<10x32xf32>
    %88 = arith.select %85, %83, %87 : vector<10x32xi1>, vector<10x32xf32>
    %89 = vector.extract_strided_slice %88 {offsets = [0, 0], sizes = [8, 32], strides = [1, 1]} : vector<10x32xf32> to vector<8x32xf32>
    %c3_71 = arith.constant 3 : index
    %c0_72 = arith.constant 0 : index
    %c0_73 = arith.constant 0 : index
    %90 = vector.load %arg5[%c3_71, %c0_72, %c0_73] : memref<12x32x8xf32, #tpu.memory_space<vmem>>, vector<1x32x8xf32>
    %91 = vector.shape_cast %90 : vector<1x32x8xf32> to vector<32x8xf32>
    %cst_74 = arith.constant dense<0.000000e+00> : vector<8x8xf32>
    %92 = tpu.matmul %89, %91, %cst_74 {dimension_numbers = #tpu.dot_dimension_numbers<[1], [0], [0], [1], [0, 0, 1, 1], [], []>} : vector<8x32xf32>, vector<32x8xf32>, vector<8x8xf32> -> vector<8x8xf32>
    %93 = vector.extract_strided_slice %88 {offsets = [1, 0], sizes = [8, 32], strides = [1, 1]} : vector<10x32xf32> to vector<8x32xf32>
    %c4_75 = arith.constant 4 : index
    %c0_76 = arith.constant 0 : index
    %c0_77 = arith.constant 0 : index
    %94 = vector.load %arg5[%c4_75, %c0_76, %c0_77] : memref<12x32x8xf32, #tpu.memory_space<vmem>>, vector<1x32x8xf32>
    %95 = vector.shape_cast %94 : vector<1x32x8xf32> to vector<32x8xf32>
    %cst_78 = arith.constant dense<0.000000e+00> : vector<8x8xf32>
    %96 = tpu.matmul %93, %95, %cst_78 {dimension_numbers = #tpu.dot_dimension_numbers<[1], [0], [0], [1], [0, 0, 1, 1], [], []>} : vector<8x32xf32>, vector<32x8xf32>, vector<8x8xf32> -> vector<8x8xf32>
    %97 = arith.addf %92, %96 : vector<8x8xf32>
    %98 = vector.extract_strided_slice %88 {offsets = [2, 0], sizes = [8, 32], strides = [1, 1]} : vector<10x32xf32> to vector<8x32xf32>
    %c5_79 = arith.constant 5 : index
    %c0_80 = arith.constant 0 : index
    %c0_81 = arith.constant 0 : index
    %99 = vector.load %arg5[%c5_79, %c0_80, %c0_81] : memref<12x32x8xf32, #tpu.memory_space<vmem>>, vector<1x32x8xf32>
    %100 = vector.shape_cast %99 : vector<1x32x8xf32> to vector<32x8xf32>
    %cst_82 = arith.constant dense<0.000000e+00> : vector<8x8xf32>
    %101 = tpu.matmul %98, %100, %cst_82 {dimension_numbers = #tpu.dot_dimension_numbers<[1], [0], [0], [1], [0, 0, 1, 1], [], []>} : vector<8x32xf32>, vector<32x8xf32>, vector<8x8xf32> -> vector<8x8xf32>
    %102 = arith.addf %97, %101 : vector<8x8xf32>
    %c1_83 = arith.constant 1 : index
    %c0_84 = arith.constant 0 : index
    %c0_85 = arith.constant 0 : index
    %103 = vector.load %arg6[%c1_83, %c0_84, %c0_85] : memref<4x1x8xf32, #tpu.memory_space<vmem>>, vector<1x1x8xf32>
    %104 = vector.shape_cast %103 : vector<1x1x8xf32> to vector<1x8xf32>
    %105 = vector.broadcast %104 : vector<1x8xf32> to vector<8x8xf32>
    %106 = arith.addf %102, %105 : vector<8x8xf32>
    %107 = math.tanh %106 : vector<8x8xf32>
    %108 = math.exp %107 : vector<8x8xf32>
    %109 = arith.mulf %1, %108 : vector<8x8xf32>
    %c2_86 = arith.constant 2 : index
    %c0_87 = arith.constant 0 : index
    %110 = vector.load %arg9[%c2_86, %c0_87] : memref<12x8xf32, #tpu.memory_space<vmem>>, vector<8x8xf32>
    tpu.vector_store %arg9[%c2_86, %c0_87], %56 {strides = array<i32>} : memref<12x8xf32, #tpu.memory_space<vmem>>, vector<8x8xf32>,
    %111 = vector.extract_strided_slice %56 {offsets = [0, 0], sizes = [1, 8], strides = [1, 1]} : vector<8x8xf32> to vector<1x8xf32>
    %112 = vector.shape_cast %111 : vector<1x8xf32> to vector<1x8xf32>
    %113 = vector.broadcast %112 : vector<1x8xf32> to vector<2x8xf32>
    %c0_88 = arith.constant 0 : index
    %c0_89 = arith.constant 0 : index
    %114 = vector.load %arg9[%c0_88, %c0_89] : memref<12x8xf32, #tpu.memory_space<vmem>>, vector<2x8xf32>
    tpu.vector_store %arg9[%c0_88, %c0_89], %113 {strides = array<i32>} : memref<12x8xf32, #tpu.memory_space<vmem>>, vector<2x8xf32>,
    %115 = vector.extract_strided_slice %56 {offsets = [7, 0], sizes = [1, 8], strides = [1, 1]} : vector<8x8xf32> to vector<1x8xf32>
    %116 = vector.shape_cast %115 : vector<1x8xf32> to vector<1x8xf32>
    %117 = vector.broadcast %116 : vector<1x8xf32> to vector<2x8xf32>
    %c10_90 = arith.constant 10 : index
    %c0_91 = arith.constant 0 : index
    %118 = vector.load %arg9[%c10_90, %c0_91] : memref<12x8xf32, #tpu.memory_space<vmem>>, vector<2x8xf32>
    tpu.vector_store %arg9[%c10_90, %c0_91], %117 {strides = array<i32>} : memref<12x8xf32, #tpu.memory_space<vmem>>, vector<2x8xf32>,
    %c0_92 = arith.constant 0 : index
    %c0_93 = arith.constant 0 : index
    %119 = vector.load %arg9[%c0_92, %c0_93] : memref<12x8xf32, #tpu.memory_space<vmem>>, vector<10x8xf32>
    %c9 = arith.constant 9 : index
    %c0_94 = arith.constant 0 : index
    %c0_95 = arith.constant 0 : index
    %120 = vector.load %arg3[%c9, %c0_94, %c0_95] : memref<12x8x32xf32, #tpu.memory_space<vmem>>, vector<1x8x32xf32>
    %121 = vector.shape_cast %120 : vector<1x8x32xf32> to vector<8x32xf32>
    %cst_96 = arith.constant dense<0.000000e+00> : vector<10x32xf32>
    %122 = tpu.matmul %119, %121, %cst_96 {dimension_numbers = #tpu.dot_dimension_numbers<[1], [0], [0], [1], [0, 0, 1, 1], [], []>} : vector<10x8xf32>, vector<8x32xf32>, vector<10x32xf32> -> vector<10x32xf32>
    %c1_97 = arith.constant 1 : index
    %c0_98 = arith.constant 0 : index
    %123 = vector.load %arg9[%c1_97, %c0_98] : memref<12x8xf32, #tpu.memory_space<vmem>>, vector<10x8xf32>
    %c10_99 = arith.constant 10 : index
    %c0_100 = arith.constant 0 : index
    %c0_101 = arith.constant 0 : index
    %124 = vector.load %arg3[%c10_99, %c0_100, %c0_101] : memref<12x8x32xf32, #tpu.memory_space<vmem>>, vector<1x8x32xf32>
    %125 = vector.shape_cast %124 : vector<1x8x32xf32> to vector<8x32xf32>
    %cst_102 = arith.constant dense<0.000000e+00> : vector<10x32xf32>
    %126 = tpu.matmul %123, %125, %cst_102 {dimension_numbers = #tpu.dot_dimension_numbers<[1], [0], [0], [1], [0, 0, 1, 1], [], []>} : vector<10x8xf32>, vector<8x32xf32>, vector<10x32xf32> -> vector<10x32xf32>
    %127 = arith.addf %122, %126 : vector<10x32xf32>
    %c2_103 = arith.constant 2 : index
    %c0_104 = arith.constant 0 : index
    %128 = vector.load %arg9[%c2_103, %c0_104] : memref<12x8xf32, #tpu.memory_space<vmem>>, vector<10x8xf32>
    %c11 = arith.constant 11 : index
    %c0_105 = arith.constant 0 : index
    %c0_106 = arith.constant 0 : index
    %129 = vector.load %arg3[%c11, %c0_105, %c0_106] : memref<12x8x32xf32, #tpu.memory_space<vmem>>, vector<1x8x32xf32>
    %130 = vector.shape_cast %129 : vector<1x8x32xf32> to vector<8x32xf32>
    %cst_107 = arith.constant dense<0.000000e+00> : vector<10x32xf32>
    %131 = tpu.matmul %128, %130, %cst_107 {dimension_numbers = #tpu.dot_dimension_numbers<[1], [0], [0], [1], [0, 0, 1, 1], [], []>} : vector<10x8xf32>, vector<8x32xf32>, vector<10x32xf32> -> vector<10x32xf32>
    %132 = arith.addf %127, %131 : vector<10x32xf32>
    %c3_108 = arith.constant 3 : index
    %c0_109 = arith.constant 0 : index
    %c0_110 = arith.constant 0 : index
    %133 = vector.load %arg4[%c3_108, %c0_109, %c0_110] : memref<4x1x32xf32, #tpu.memory_space<vmem>>, vector<1x1x32xf32>
    %134 = vector.shape_cast %133 : vector<1x1x32xf32> to vector<1x32xf32>
    %135 = vector.broadcast %134 : vector<1x32xf32> to vector<10x32xf32>
    %136 = arith.addf %132, %135 : vector<10x32xf32>
    %cst_111 = arith.constant 0.000000e+00 : f32
    %137 = vector.broadcast %cst_111 : f32 to vector<10x32xf32>
    %138 = arith.cmpf oge, %136, %137 : vector<10x32xf32>
    %cst_112 = arith.constant 0.00999999977 : f32
    %139 = vector.broadcast %cst_112 : f32 to vector<10x32xf32>
    %140 = arith.mulf %139, %136 : vector<10x32xf32>
    %141 = arith.select %138, %136, %140 : vector<10x32xi1>, vector<10x32xf32>
    %142 = vector.extract_strided_slice %141 {offsets = [0, 0], sizes = [8, 32], strides = [1, 1]} : vector<10x32xf32> to vector<8x32xf32>
    %c9_113 = arith.constant 9 : index
    %c0_114 = arith.constant 0 : index
    %c0_115 = arith.constant 0 : index
    %143 = vector.load %arg5[%c9_113, %c0_114, %c0_115] : memref<12x32x8xf32, #tpu.memory_space<vmem>>, vector<1x32x8xf32>
    %144 = vector.shape_cast %143 : vector<1x32x8xf32> to vector<32x8xf32>
    %cst_116 = arith.constant dense<0.000000e+00> : vector<8x8xf32>
    %145 = tpu.matmul %142, %144, %cst_116 {dimension_numbers = #tpu.dot_dimension_numbers<[1], [0], [0], [1], [0, 0, 1, 1], [], []>} : vector<8x32xf32>, vector<32x8xf32>, vector<8x8xf32> -> vector<8x8xf32>
    %146 = vector.extract_strided_slice %141 {offsets = [1, 0], sizes = [8, 32], strides = [1, 1]} : vector<10x32xf32> to vector<8x32xf32>
    %c10_117 = arith.constant 10 : index
    %c0_118 = arith.constant 0 : index
    %c0_119 = arith.constant 0 : index
    %147 = vector.load %arg5[%c10_117, %c0_118, %c0_119] : memref<12x32x8xf32, #tpu.memory_space<vmem>>, vector<1x32x8xf32>
    %148 = vector.shape_cast %147 : vector<1x32x8xf32> to vector<32x8xf32>
    %cst_120 = arith.constant dense<0.000000e+00> : vector<8x8xf32>
    %149 = tpu.matmul %146, %148, %cst_120 {dimension_numbers = #tpu.dot_dimension_numbers<[1], [0], [0], [1], [0, 0, 1, 1], [], []>} : vector<8x32xf32>, vector<32x8xf32>, vector<8x8xf32> -> vector<8x8xf32>
    %150 = arith.addf %145, %149 : vector<8x8xf32>
    %151 = vector.extract_strided_slice %141 {offsets = [2, 0], sizes = [8, 32], strides = [1, 1]} : vector<10x32xf32> to vector<8x32xf32>
    %c11_121 = arith.constant 11 : index
    %c0_122 = arith.constant 0 : index
    %c0_123 = arith.constant 0 : index
    %152 = vector.load %arg5[%c11_121, %c0_122, %c0_123] : memref<12x32x8xf32, #tpu.memory_space<vmem>>, vector<1x32x8xf32>
    %153 = vector.shape_cast %152 : vector<1x32x8xf32> to vector<32x8xf32>
    %cst_124 = arith.constant dense<0.000000e+00> : vector<8x8xf32>
    %154 = tpu.matmul %151, %153, %cst_124 {dimension_numbers = #tpu.dot_dimension_numbers<[1], [0], [0], [1], [0, 0, 1, 1], [], []>} : vector<8x32xf32>, vector<32x8xf32>, vector<8x8xf32> -> vector<8x8xf32>
    %155 = arith.addf %150, %154 : vector<8x8xf32>
    %c3_125 = arith.constant 3 : index
    %c0_126 = arith.constant 0 : index
    %c0_127 = arith.constant 0 : index
    %156 = vector.load %arg6[%c3_125, %c0_126, %c0_127] : memref<4x1x8xf32, #tpu.memory_space<vmem>>, vector<1x1x8xf32>
    %157 = vector.shape_cast %156 : vector<1x1x8xf32> to vector<1x8xf32>
    %158 = vector.broadcast %157 : vector<1x8xf32> to vector<8x8xf32>
    %159 = arith.addf %155, %158 : vector<8x8xf32>
    %160 = math.tanh %159 : vector<8x8xf32>
    %161 = arith.addf %109, %160 : vector<8x8xf32>
    %c2_128 = arith.constant 2 : index
    %c0_129 = arith.constant 0 : index
    %162 = vector.load %arg9[%c2_128, %c0_129] : memref<12x8xf32, #tpu.memory_space<vmem>>, vector<8x8xf32>
    tpu.vector_store %arg9[%c2_128, %c0_129], %109 {strides = array<i32>} : memref<12x8xf32, #tpu.memory_space<vmem>>, vector<8x8xf32>,
    %163 = vector.extract_strided_slice %109 {offsets = [0, 0], sizes = [1, 8], strides = [1, 1]} : vector<8x8xf32> to vector<1x8xf32>
    %164 = vector.shape_cast %163 : vector<1x8xf32> to vector<1x8xf32>
    %165 = vector.broadcast %164 : vector<1x8xf32> to vector<2x8xf32>
    %c0_130 = arith.constant 0 : index
    %c0_131 = arith.constant 0 : index
    %166 = vector.load %arg9[%c0_130, %c0_131] : memref<12x8xf32, #tpu.memory_space<vmem>>, vector<2x8xf32>
    tpu.vector_store %arg9[%c0_130, %c0_131], %165 {strides = array<i32>} : memref<12x8xf32, #tpu.memory_space<vmem>>, vector<2x8xf32>,
    %167 = vector.extract_strided_slice %109 {offsets = [7, 0], sizes = [1, 8], strides = [1, 1]} : vector<8x8xf32> to vector<1x8xf32>
    %168 = vector.shape_cast %167 : vector<1x8xf32> to vector<1x8xf32>
    %169 = vector.broadcast %168 : vector<1x8xf32> to vector<2x8xf32>
    %c10_132 = arith.constant 10 : index
    %c0_133 = arith.constant 0 : index
    %170 = vector.load %arg9[%c10_132, %c0_133] : memref<12x8xf32, #tpu.memory_space<vmem>>, vector<2x8xf32>
    tpu.vector_store %arg9[%c10_132, %c0_133], %169 {strides = array<i32>} : memref<12x8xf32, #tpu.memory_space<vmem>>, vector<2x8xf32>,
    %c0_134 = arith.constant 0 : index
    %c0_135 = arith.constant 0 : index
    %171 = vector.load %arg9[%c0_134, %c0_135] : memref<12x8xf32, #tpu.memory_space<vmem>>, vector<10x8xf32>
    %c6 = arith.constant 6 : index
    %c0_136 = arith.constant 0 : index
    %c0_137 = arith.constant 0 : index
    %172 = vector.load %arg3[%c6, %c0_136, %c0_137] : memref<12x8x32xf32, #tpu.memory_space<vmem>>, vector<1x8x32xf32>
    %173 = vector.shape_cast %172 : vector<1x8x32xf32> to vector<8x32xf32>
    %cst_138 = arith.constant dense<0.000000e+00> : vector<10x32xf32>
    %174 = tpu.matmul %171, %173, %cst_138 {dimension_numbers = #tpu.dot_dimension_numbers<[1], [0], [0], [1], [0, 0, 1, 1], [], []>} : vector<10x8xf32>, vector<8x32xf32>, vector<10x32xf32> -> vector<10x32xf32>
    %c1_139 = arith.constant 1 : index
    %c0_140 = arith.constant 0 : index
    %175 = vector.load %arg9[%c1_139, %c0_140] : memref<12x8xf32, #tpu.memory_space<vmem>>, vector<10x8xf32>
    %c7 = arith.constant 7 : index
    %c0_141 = arith.constant 0 : index
    %c0_142 = arith.constant 0 : index
    %176 = vector.load %arg3[%c7, %c0_141, %c0_142] : memref<12x8x32xf32, #tpu.memory_space<vmem>>, vector<1x8x32xf32>
    %177 = vector.shape_cast %176 : vector<1x8x32xf32> to vector<8x32xf32>
    %cst_143 = arith.constant dense<0.000000e+00> : vector<10x32xf32>
    %178 = tpu.matmul %175, %177, %cst_143 {dimension_numbers = #tpu.dot_dimension_numbers<[1], [0], [0], [1], [0, 0, 1, 1], [], []>} : vector<10x8xf32>, vector<8x32xf32>, vector<10x32xf32> -> vector<10x32xf32>
    %179 = arith.addf %174, %178 : vector<10x32xf32>
    %c2_144 = arith.constant 2 : index
    %c0_145 = arith.constant 0 : index
    %180 = vector.load %arg9[%c2_144, %c0_145] : memref<12x8xf32, #tpu.memory_space<vmem>>, vector<10x8xf32>
    %c8 = arith.constant 8 : index
    %c0_146 = arith.constant 0 : index
    %c0_147 = arith.constant 0 : index
    %181 = vector.load %arg3[%c8, %c0_146, %c0_147] : memref<12x8x32xf32, #tpu.memory_space<vmem>>, vector<1x8x32xf32>
    %182 = vector.shape_cast %181 : vector<1x8x32xf32> to vector<8x32xf32>
    %cst_148 = arith.constant dense<0.000000e+00> : vector<10x32xf32>
    %183 = tpu.matmul %180, %182, %cst_148 {dimension_numbers = #tpu.dot_dimension_numbers<[1], [0], [0], [1], [0, 0, 1, 1], [], []>} : vector<10x8xf32>, vector<8x32xf32>, vector<10x32xf32> -> vector<10x32xf32>
    %184 = arith.addf %179, %183 : vector<10x32xf32>
    %c2_149 = arith.constant 2 : index
    %c0_150 = arith.constant 0 : index
    %c0_151 = arith.constant 0 : index
    %185 = vector.load %arg4[%c2_149, %c0_150, %c0_151] : memref<4x1x32xf32, #tpu.memory_space<vmem>>, vector<1x1x32xf32>
    %186 = vector.shape_cast %185 : vector<1x1x32xf32> to vector<1x32xf32>
    %187 = vector.broadcast %186 : vector<1x32xf32> to vector<10x32xf32>
    %188 = arith.addf %184, %187 : vector<10x32xf32>
    %cst_152 = arith.constant 0.000000e+00 : f32
    %189 = vector.broadcast %cst_152 : f32 to vector<10x32xf32>
    %190 = arith.cmpf oge, %188, %189 : vector<10x32xf32>
    %cst_153 = arith.constant 0.00999999977 : f32
    %191 = vector.broadcast %cst_153 : f32 to vector<10x32xf32>
    %192 = arith.mulf %191, %188 : vector<10x32xf32>
    %193 = arith.select %190, %188, %192 : vector<10x32xi1>, vector<10x32xf32>
    %194 = vector.extract_strided_slice %193 {offsets = [0, 0], sizes = [8, 32], strides = [1, 1]} : vector<10x32xf32> to vector<8x32xf32>
    %c6_154 = arith.constant 6 : index
    %c0_155 = arith.constant 0 : index
    %c0_156 = arith.constant 0 : index
    %195 = vector.load %arg5[%c6_154, %c0_155, %c0_156] : memref<12x32x8xf32, #tpu.memory_space<vmem>>, vector<1x32x8xf32>
    %196 = vector.shape_cast %195 : vector<1x32x8xf32> to vector<32x8xf32>
    %cst_157 = arith.constant dense<0.000000e+00> : vector<8x8xf32>
    %197 = tpu.matmul %194, %196, %cst_157 {dimension_numbers = #tpu.dot_dimension_numbers<[1], [0], [0], [1], [0, 0, 1, 1], [], []>} : vector<8x32xf32>, vector<32x8xf32>, vector<8x8xf32> -> vector<8x8xf32>
    %198 = vector.extract_strided_slice %193 {offsets = [1, 0], sizes = [8, 32], strides = [1, 1]} : vector<10x32xf32> to vector<8x32xf32>
    %c7_158 = arith.constant 7 : index
    %c0_159 = arith.constant 0 : index
    %c0_160 = arith.constant 0 : index
    %199 = vector.load %arg5[%c7_158, %c0_159, %c0_160] : memref<12x32x8xf32, #tpu.memory_space<vmem>>, vector<1x32x8xf32>
    %200 = vector.shape_cast %199 : vector<1x32x8xf32> to vector<32x8xf32>
    %cst_161 = arith.constant dense<0.000000e+00> : vector<8x8xf32>
    %201 = tpu.matmul %198, %200, %cst_161 {dimension_numbers = #tpu.dot_dimension_numbers<[1], [0], [0], [1], [0, 0, 1, 1], [], []>} : vector<8x32xf32>, vector<32x8xf32>, vector<8x8xf32> -> vector<8x8xf32>
    %202 = arith.addf %197, %201 : vector<8x8xf32>
    %203 = vector.extract_strided_slice %193 {offsets = [2, 0], sizes = [8, 32], strides = [1, 1]} : vector<10x32xf32> to vector<8x32xf32>
    %c8_162 = arith.constant 8 : index
    %c0_163 = arith.constant 0 : index
    %c0_164 = arith.constant 0 : index
    %204 = vector.load %arg5[%c8_162, %c0_163, %c0_164] : memref<12x32x8xf32, #tpu.memory_space<vmem>>, vector<1x32x8xf32>
    %205 = vector.shape_cast %204 : vector<1x32x8xf32> to vector<32x8xf32>
    %cst_165 = arith.constant dense<0.000000e+00> : vector<8x8xf32>
    %206 = tpu.matmul %203, %205, %cst_165 {dimension_numbers = #tpu.dot_dimension_numbers<[1], [0], [0], [1], [0, 0, 1, 1], [], []>} : vector<8x32xf32>, vector<32x8xf32>, vector<8x8xf32> -> vector<8x8xf32>
    %207 = arith.addf %202, %206 : vector<8x8xf32>
    %c2_166 = arith.constant 2 : index
    %c0_167 = arith.constant 0 : index
    %c0_168 = arith.constant 0 : index
    %208 = vector.load %arg6[%c2_166, %c0_167, %c0_168] : memref<4x1x8xf32, #tpu.memory_space<vmem>>, vector<1x1x8xf32>
    %209 = vector.shape_cast %208 : vector<1x1x8xf32> to vector<1x8xf32>
    %210 = vector.broadcast %209 : vector<1x8xf32> to vector<8x8xf32>
    %211 = arith.addf %207, %210 : vector<8x8xf32>
    %212 = math.tanh %211 : vector<8x8xf32>
    %213 = arith.subf %56, %212 : vector<8x8xf32>
    %c0_169 = arith.constant 0 : index
    %c0_170 = arith.constant 0 : index
    %c0_171 = arith.constant 0 : index
    %214 = vector.load %arg7[%c0_169, %c0_170, %c0_171] : memref<1x8x8xf32, #tpu.memory_space<vmem>>, vector<1x8x8xf32>
    %215 = vector.shape_cast %214 : vector<1x8x8xf32> to vector<8x8xf32>
    %216 = vector.shape_cast %161 : vector<8x8xf32> to vector<1x8x8xf32>
    tpu.vector_store %arg7[%c0_169, %c0_170, %c0_171], %216 {strides = array<i32>} : memref<1x8x8xf32, #tpu.memory_space<vmem>>, vector<1x8x8xf32>,
    %c0_172 = arith.constant 0 : index
    %c0_173 = arith.constant 0 : index
    %c0_174 = arith.constant 0 : index
    %217 = vector.load %arg8[%c0_172, %c0_173, %c0_174] : memref<1x8x8xf32, #tpu.memory_space<vmem>>, vector<1x8x8xf32>
    %218 = vector.shape_cast %217 : vector<1x8x8xf32> to vector<8x8xf32>
    %219 = vector.shape_cast %213 : vector<8x8xf32> to vector<1x8x8xf32>
    tpu.vector_store %arg8[%c0_172, %c0_173, %c0_174], %219 {strides = array<i32>} : memref<1x8x8xf32, #tpu.memory_space<vmem>>, vector<1x8x8xf32>,
    return
  }
  func.func @transform_0(%arg0: i32) -> (i32, i32, i32) {
    %c0_i32 = arith.constant 0 : i32
    %c0_i32_0 = arith.constant 0 : i32
    %c0_i32_1 = arith.constant 0 : i32
    return %arg0, %c0_i32, %c0_i32_0 : i32, i32, i32
  }
  func.func @transform_1(%arg0: i32) -> (i32, i32, i32) {
    %c0_i32 = arith.constant 0 : i32
    %c0_i32_0 = arith.constant 0 : i32
    %c0_i32_1 = arith.constant 0 : i32
    return %arg0, %c0_i32, %c0_i32_0 : i32, i32, i32
  }
  func.func @transform_2(%arg0: i32) -> (i32, i32, i32) {
    %c0_i32 = arith.constant 0 : i32
    %c0_i32_0 = arith.constant 0 : i32
    %c0_i32_1 = arith.constant 0 : i32
    %c0_i32_2 = arith.constant 0 : i32
    return %c0_i32, %c0_i32_0, %c0_i32_1 : i32, i32, i32
  }
  func.func @transform_3(%arg0: i32) -> (i32, i32, i32) {
    %c0_i32 = arith.constant 0 : i32
    %c0_i32_0 = arith.constant 0 : i32
    %c0_i32_1 = arith.constant 0 : i32
    %c0_i32_2 = arith.constant 0 : i32
    return %c0_i32, %c0_i32_0, %c0_i32_1 : i32, i32, i32
  }
  func.func @transform_4(%arg0: i32) -> (i32, i32, i32) {
    %c0_i32 = arith.constant 0 : i32
    %c0_i32_0 = arith.constant 0 : i32
    %c0_i32_1 = arith.constant 0 : i32
    %c0_i32_2 = arith.constant 0 : i32
    return %c0_i32, %c0_i32_0, %c0_i32_1 : i32, i32, i32
  }
  func.func @transform_5(%arg0: i32) -> (i32, i32, i32) {
    %c0_i32 = arith.constant 0 : i32
    %c0_i32_0 = arith.constant 0 : i32
    %c0_i32_1 = arith.constant 0 : i32
    %c0_i32_2 = arith.constant 0 : i32
    return %c0_i32, %c0_i32_0, %c0_i32_1 : i32, i32, i32
  }
  func.func @transform_6(%arg0: i32) -> (i32, i32, i32) {
    %c0_i32 = arith.constant 0 : i32
    %c0_i32_0 = arith.constant 0 : i32
    %c0_i32_1 = arith.constant 0 : i32
    return %arg0, %c0_i32, %c0_i32_0 : i32, i32, i32
  }
  func.func @transform_7(%arg0: i32) -> (i32, i32, i32) {
    %c0_i32 = arith.constant 0 : i32
    %c0_i32_0 = arith.constant 0 : i32
    %c0_i32_1 = arith.constant 0 : i32
    return %arg0, %c0_i32, %c0_i32_0 : i32, i32, i32
  }
}

</mosaic_0001>

<llo_original>
// kernel: sci_block.1
$region0: #{sci_block.1}
  #allocation0 [shape = 'u32[]', space=smem, size = 0x4, offset = 0x4, fixed_abs, tag = 'smem constant byte address 0x4 - core index']
  #allocation1 [shape = 'u32[144,128]{1,0:T(1,128)}', space=vmem, size = 0x12000, scoped, tag = 'internal scratch']
  #allocation2 [shape = 'f32[12,8]{1,0:T(8,128)}', space=vmem, size = 0x2000, scoped, tag = 'scratch operand']
  %s0 = inlined_call_operand.vmem [shape: f32[2,8,8], index: 0, kind: input, shape index: {}]
  %s1 = inlined_call_operand.vmem [shape: f32[2,8,8], index: 1, kind: input, shape index: {}]
  %s2 = inlined_call_operand.vmem [shape: f32[12,8,32], index: 2, kind: input, shape index: {}]
  %s3 = inlined_call_operand.vmem [shape: f32[4,1,32], index: 3, kind: input, shape index: {}]
  %s4 = inlined_call_operand.vmem [shape: f32[12,32,8], index: 4, kind: input, shape index: {}]
  %s5 = inlined_call_operand.vmem [shape: f32[4,1,8], index: 5, kind: input, shape index: {}]
  %s6 = inlined_call_operand.hbm [shape: f32[2,8,8], index: 6, kind: output, shape index: {0}]
  %s7 = inlined_call_operand.hbm [shape: f32[2,8,8], index: 7, kind: output, shape index: {1}]
  %8 = xla_tuple %s6, %s7
  %s9 = sld [smem:[#allocation0]]
  $region65: #{sci_block.1} parent=0
    _
  %s11 = ssub.s32 1, %s9
  %s12 = scalar_select 0, %s11, %s9
  $region1: #{sci_block.1} parent=0
    #allocation3 [shape = 'u8[8192]{0}', space=vmem, size = 0x2000, scoped, tag = 'output window, operand 0']
    #allocation4 [shape = 's32[2]{0}', space=sflag, size = 0x8, scoped, tag = 'scoped memory for sci_block.1']
    #allocation5 [shape = 'u8[8192]{0}', space=vmem, size = 0x2000, scoped, tag = 'output window, operand 1']
    #allocation6 [shape = 's32[2]{0}', space=sflag, size = 0x8, scoped, tag = 'scoped memory for sci_block.1']
    %13 = vsyncpa [#allocation4], 0
    %s14 = scalar_lea.sflag [#allocation4], 1
    %15 = vsyncpa %s14, 0
    %16 = vsyncpa [#allocation6], 0
    %s17 = scalar_lea.sflag [#allocation6], 1
    %18 = vsyncpa %s17, 0
    loop: start=0, step=1, limit=4
    $region2: #{sci_block.1} parent=1 // loop_pre_header
      _
    $region3: #{sci_block.1} parent=1 // loop_header
      %s20 = sphi 0, %s24
      %p21 = scmp.ge.s32.totalorder %s20, 4
      %s30 = sphi 0, %s32
      %s33 = sphi 0, %s30
      %s34 = sphi 0, %s33
      %s50 = sphi 0, %s34
      %s56 = sphi 0, %s58
      %s59 = sphi 0, %s56
      %s60 = sphi 0, %s59
      %s76 = sphi 0, %s60
      %s80 = sphi 0, %s80
      %s82 = sphi 0, %s80
      %s83 = sphi 0, %s82
      %s97 = sphi 0, %s83
      %s101 = sphi 0, %s101
      %s103 = sphi 0, %s101
      %s104 = sphi 0, %s103
      %s118 = sphi 0, %s104
      %s122 = sphi 0, %s122
      %s124 = sphi 0, %s122
      %s125 = sphi 0, %s124
      %s139 = sphi 0, %s125
      %s143 = sphi 0, %s143
      %s145 = sphi 0, %s143
      %s146 = sphi 0, %s145
      %s160 = sphi 0, %s146
      %s166 = sphi 0, %s168
      %s169 = sphi 0, %s166
      %s170 = sphi 0, %s169
      %s186 = sphi 0, %s170
      %s192 = sphi 0, %s194
      %s195 = sphi 0, %s192
      %s196 = sphi 0, %s195
      %s212 = sphi 0, %s196
    $region4: #{sci_block.1} parent=1 // loop_header_branch
      %23 = sbr.rel (%p21) target = $region8
    $region5: #{sci_block.1} parent=1 // loop_body
      %s25 = ssub.s32 %s20, 1
      %s26 = ssub.s32 %s20, 2
      %s27 = sadd.s32 %s20, 1
      %s28 = ssub.s32 %s20, %s27
      %p29 = scmp.eq.s32.totalorder %s28, 0
      %s31 = sadd.s32 %s30, 1
      %s32 = scalar_select %p29, %s30, %s31
      %p35 = pneg %p29
      %p36 = scmp.eq.s32.totalorder %s20, 1
      %p37 = por %p35, %p36
      %p38 = scmp.ne.s32.totalorder %s30, %s33
      %p39 = scmp.eq.s32.totalorder %s20, 0
      %p40 = por %p38, %p39
      %p41 = scmp.ne.s32.totalorder %s30, %s33
      %p42 = scmp.eq.s32.totalorder %s25, 1
      %p43 = por %p41, %p42
      %p44 = scmp.ne.s32.totalorder %s33, %s34
      %p45 = scmp.eq.s32.totalorder %s25, 0
      %p46 = por %p44, %p45
      %p47 = scmp.ne.s32.totalorder %s33, %s34
      %p48 = scmp.eq.s32.totalorder %s26, 1
      %p49 = por %p47, %p48
      %p51 = scmp.ne.s32.totalorder %s34, %s50
      %p52 = scmp.eq.s32.totalorder %s26, 0
      %p53 = por %p51, %p52
      %s54 = ssub.s32 %s20, %s27
      %p55 = scmp.eq.s32.totalorder %s54, 0
      %s57 = sadd.s32 %s56, 1
      %s58 = scalar_select %p55, %s56, %s57
      %p61 = pneg %p55
      %p62 = scmp.eq.s32.totalorder %s20, 1
      %p63 = por %p61, %p62
      %p64 = scmp.ne.s32.totalorder %s56, %s59
      %p65 = scmp.eq.s32.totalorder %s20, 0
      %p66 = por %p64, %p65
      %p67 = scmp.ne.s32.totalorder %s56, %s59
      %p68 = scmp.eq.s32.totalorder %s25, 1
      %p69 = por %p67, %p68
      %p70 = scmp.ne.s32.totalorder %s59, %s60
      %p71 = scmp.eq.s32.totalorder %s25, 0
      %p72 = por %p70, %p71
      %p73 = scmp.ne.s32.totalorder %s59, %s60
      %p74 = scmp.eq.s32.totalorder %s26, 1
      %p75 = por %p73, %p74
      %p77 = scmp.ne.s32.totalorder %s60, %s76
      %p78 = scmp.eq.s32.totalorder %s26, 0
      %p79 = por %p77, %p78
      %s81 = sadd.s32 %s80, 1
      %p84 = scmp.eq.s32.totalorder %s20, 1
      %p85 = scmp.ne.s32.totalorder %s80, %s82
      %p86 = scmp.eq.s32.totalorder %s20, 0
      %p87 = por %p85, %p86
      %p88 = scmp.ne.s32.totalorder %s80, %s82
      %p89 = scmp.eq.s32.totalorder %s25, 1
      %p90 = por %p88, %p89
      %p91 = scmp.ne.s32.totalorder %s82, %s83
      %p92 = scmp.eq.s32.totalorder %s25, 0
      %p93 = por %p91, %p92
      %p94 = scmp.ne.s32.totalorder %s82, %s83
      %p95 = scmp.eq.s32.totalorder %s26, 1
      %p96 = por %p94, %p95
      %p98 = scmp.ne.s32.totalorder %s83, %s97
      %p99 = scmp.eq.s32.totalorder %s26, 0
      %p100 = por %p98, %p99
      %s102 = sadd.s32 %s101, 1
      %p105 = scmp.eq.s32.totalorder %s20, 1
      %p106 = scmp.ne.s32.totalorder %s101, %s103
      %p107 = scmp.eq.s32.totalorder %s20, 0
      %p108 = por %p106, %p107
      %p109 = scmp.ne.s32.totalorder %s101, %s103
      %p110 = scmp.eq.s32.totalorder %s25, 1
      %p111 = por %p109, %p110
      %p112 = scmp.ne.s32.totalorder %s103, %s104
      %p113 = scmp.eq.s32.totalorder %s25, 0
      %p114 = por %p112, %p113
      %p115 = scmp.ne.s32.totalorder %s103, %s104
      %p116 = scmp.eq.s32.totalorder %s26, 1
      %p117 = por %p115, %p116
      %p119 = scmp.ne.s32.totalorder %s104, %s118
      %p120 = scmp.eq.s32.totalorder %s26, 0
      %p121 = por %p119, %p120
      %s123 = sadd.s32 %s122, 1
      %p126 = scmp.eq.s32.totalorder %s20, 1
      %p127 = scmp.ne.s32.totalorder %s122, %s124
      %p128 = scmp.eq.s32.totalorder %s20, 0
      %p129 = por %p127, %p128
      %p130 = scmp.ne.s32.totalorder %s122, %s124
      %p131 = scmp.eq.s32.totalorder %s25, 1
      %p132 = por %p130, %p131
      %p133 = scmp.ne.s32.totalorder %s124, %s125
      %p134 = scmp.eq.s32.totalorder %s25, 0
      %p135 = por %p133, %p134
      %p136 = scmp.ne.s32.totalorder %s124, %s125
      %p137 = scmp.eq.s32.totalorder %s26, 1
      %p138 = por %p136, %p137
      %p140 = scmp.ne.s32.totalorder %s125, %s139
      %p141 = scmp.eq.s32.totalorder %s26, 0
      %p142 = por %p140, %p141
      %s144 = sadd.s32 %s143, 1
      %p147 = scmp.eq.s32.totalorder %s20, 1
      %p148 = scmp.ne.s32.totalorder %s143, %s145
      %p149 = scmp.eq.s32.totalorder %s20, 0
      %p150 = por %p148, %p149
      %p151 = scmp.ne.s32.totalorder %s143, %s145
      %p152 = scmp.eq.s32.totalorder %s25, 1
      %p153 = por %p151, %p152
      %p154 = scmp.ne.s32.totalorder %s145, %s146
      %p155 = scmp.eq.s32.totalorder %s25, 0
      %p156 = por %p154, %p155
      %p157 = scmp.ne.s32.totalorder %s145, %s146
      %p158 = scmp.eq.s32.totalorder %s26, 1
      %p159 = por %p157, %p158
      %p161 = scmp.ne.s32.totalorder %s146, %s160
      %p162 = scmp.eq.s32.totalorder %s26, 0
      %p163 = por %p161, %p162
      %s164 = ssub.s32 %s20, %s27
      %p165 = scmp.eq.s32.totalorder %s164, 0
      %s167 = sadd.s32 %s166, 1
      %s168 = scalar_select %p165, %s166, %s167
      %p171 = pneg %p165
      %p172 = scmp.eq.s32.totalorder %s20, 1
      %p173 = por %p171, %p172
      %p174 = scmp.ne.s32.totalorder %s166, %s169
      %p175 = scmp.eq.s32.totalorder %s20, 0
      %p176 = por %p174, %p175
      %p177 = scmp.ne.s32.totalorder %s166, %s169
      %p178 = scmp.eq.s32.totalorder %s25, 1
      %p179 = por %p177, %p178
      %p180 = scmp.ne.s32.totalorder %s169, %s170
      %p181 = scmp.eq.s32.totalorder %s25, 0
      %p182 = por %p180, %p181
      %p183 = scmp.ne.s32.totalorder %s169, %s170
      %p184 = scmp.eq.s32.totalorder %s26, 1
      %p185 = por %p183, %p184
      %p187 = scmp.ne.s32.totalorder %s170, %s186
      %p188 = scmp.eq.s32.totalorder %s26, 0
      %p189 = por %p187, %p188
      %s190 = ssub.s32 %s20, %s27
      %p191 = scmp.eq.s32.totalorder %s190, 0
      %s193 = sadd.s32 %s192, 1
      %s194 = scalar_select %p191, %s192, %s193
      %p197 = pneg %p191
      %p198 = scmp.eq.s32.totalorder %s20, 1
      %p199 = por %p197, %p198
      %p200 = scmp.ne.s32.totalorder %s192, %s195
      %p201 = scmp.eq.s32.totalorder %s20, 0
      %p202 = por %p200, %p201
      %p203 = scmp.ne.s32.totalorder %s192, %s195
      %p204 = scmp.eq.s32.totalorder %s25, 1
      %p205 = por %p203, %p204
      %p206 = scmp.ne.s32.totalorder %s195, %s196
      %p207 = scmp.eq.s32.totalorder %s25, 0
      %p208 = por %p206, %p207
      %p209 = scmp.ne.s32.totalorder %s195, %s196
      %p210 = scmp.eq.s32.totalorder %s26, 1
      %p211 = por %p209, %p210
      %p213 = scmp.ne.s32.totalorder %s196, %s212
      %p214 = scmp.eq.s32.totalorder %s26, 0
      %p215 = por %p213, %p214
      %p216 = scmp.le.s32.totalorder 1, %s20
      %p217 = scmp.lt.s32.totalorder %s20, 3
      %p218 = pnand %p216, %p217
      %p219 = pneg %p218
      // Predicated region
      $region9: #{sci_block.1} parent=5 // pred_check
        _
      $region10: #{sci_block.1} parent=5 // pred_check_branch
        %221 = sbr.rel (%p218) target = $region12
      $region11: #{sci_block.1} parent=5 // pred_region
        %s222 = ssub.s32 %s20, 1
        // Predicated region
        $region13: #{sci_block.1} parent=11 // pred_check
          %p223 = pneg %p93
        $region14: #{sci_block.1} parent=11 // pred_check_branch
          %225 = sbr.rel (%p223) target = $region16
        $region15: #{sci_block.1} parent=11 // pred_region
          _
        $region16: #{sci_block.1} parent=11 // pred_fallthru
          _
        // Predicated region
        $region17: #{sci_block.1} parent=11 // pred_check
          %p226 = pneg %p114
        $region18: #{sci_block.1} parent=11 // pred_check_branch
          %228 = sbr.rel (%p226) target = $region20
        $region19: #{sci_block.1} parent=11 // pred_region
          _
        $region20: #{sci_block.1} parent=11 // pred_fallthru
          _
        // Predicated region
        $region21: #{sci_block.1} parent=11 // pred_check
          %p229 = pneg %p135
        $region22: #{sci_block.1} parent=11 // pred_check_branch
          %231 = sbr.rel (%p229) target = $region24
        $region23: #{sci_block.1} parent=11 // pred_region
          _
        $region24: #{sci_block.1} parent=11 // pred_fallthru
          _
        // Predicated region
        $region25: #{sci_block.1} parent=11 // pred_check
          %p232 = pneg %p156
        $region26: #{sci_block.1} parent=11 // pred_check_branch
          %234 = sbr.rel (%p232) target = $region28
        $region27: #{sci_block.1} parent=11 // pred_region
          _
        $region28: #{sci_block.1} parent=11 // pred_fallthru
          _
      $region12: #{sci_block.1} parent=5 // pred_fallthru
        _
      %p235 = scmp.lt.s32.totalorder %s20, 2
      // Predicated region
      $region29: #{sci_block.1} parent=5 // pred_check
        %p236 = pneg %p235
      $region30: #{sci_block.1} parent=5 // pred_check_branch
        %238 = sbr.rel (%p236) target = $region32
      $region31: #{sci_block.1} parent=5 // pred_region
        // Predicated region
        $region33: #{sci_block.1} parent=31 // pred_check
          %p239 = pneg %p40
        $region34: #{sci_block.1} parent=31 // pred_check_branch
          %241 = sbr.rel (%p239) target = $region36
        $region35: #{sci_block.1} parent=31 // pred_region
          %p242 = scmp.lt.s32.totalorder %s20, 1
          %s243 = scalar_select %p242, %s20, 1
          %s244 = smul.addr %s243, 8
          %s245 = scalar_lea.vmem %s0, %s244
        $region36: #{sci_block.1} parent=31 // pred_fallthru
          _
        // Predicated region
        $region37: #{sci_block.1} parent=31 // pred_check
          %p246 = pneg %p66
        $region38: #{sci_block.1} parent=31 // pred_check_branch
          %248 = sbr.rel (%p246) target = $region40
        $region39: #{sci_block.1} parent=31 // pred_region
          %p249 = scmp.lt.s32.totalorder %s20, 1
          %s250 = scalar_select %p249, %s20, 1
          %s251 = smul.addr %s250, 8
          %s252 = scalar_lea.vmem %s1, %s251
        $region40: #{sci_block.1} parent=31 // pred_fallthru
          _
      $region32: #{sci_block.1} parent=5 // pred_fallthru
        _
      %p253 = scmp.le.s32.totalorder 1, %s20
      %p254 = scmp.lt.s32.totalorder %s20, 3
      %p255 = pnand %p253, %p254
      %p256 = pneg %p255
      // Predicated region
      $region41: #{sci_block.1} parent=5 // pred_check
        _
      $region42: #{sci_block.1} parent=5 // pred_check_branch
        %258 = sbr.rel (%p255) target = $region44
      $region43: #{sci_block.1} parent=5 // pred_region
        %s259 = ssub.s32 %s20, 1
        %p260 = scmp.lt.s32.totalorder %s25, 1
        %s261 = scalar_select %p260, %s25, 1
        %s262 = smul.addr %s261, 8
        %s263 = scalar_lea.vmem %s0, %s262
        %p264 = pneg %p46
        %p265 = pneg %p43
        %p266 = scmp.lt.s32.totalorder %s25, 1
        %s267 = scalar_select %p266, %s25, 1
        %s268 = smul.addr %s267, 8
        %s269 = scalar_lea.vmem %s1, %s268
        %p270 = pneg %p72
        %p271 = pneg %p69
        %p272 = pneg %p93
        %p273 = pneg %p90
        %p274 = pneg %p114
        %p275 = pneg %p111
        %p276 = pneg %p135
        %p277 = pneg %p132
        %p278 = pneg %p156
        %p279 = pneg %p153
        %p280 = pneg %p182
        %p281 = pneg %p179
        %s282 = sand.u32 %s169, 1
        %s283 = scalar_lea.sflag [#allocation4], %s282
        %s284 = sand.u32 %s169, 1
        %s285 = smul.addr %s284, 8
        %s286 = scalar_lea.vmem [#allocation3], %s285
        %p287 = pneg %p208
        %p288 = pneg %p205
        %s289 = sand.u32 %s195, 1
        %s290 = scalar_lea.sflag [#allocation6], %s289
        %s291 = sand.u32 %s195, 1
        %s292 = smul.addr %s291, 8
        %s293 = scalar_lea.vmem [#allocation5], %s292
        %p294 = scmp.lt.s32.totalorder %s25, 1
        %s295 = scalar_select %p294, %s25, 1
        %s296 = smul.addr %s295, 8
        %s297 = scalar_lea.vmem %s0, %s296
        %p298 = scmp.lt.s32.totalorder %s25, 1
        %s299 = scalar_select %p298, %s25, 1
        %s300 = smul.addr %s299, 8
        %s301 = scalar_lea.vmem %s1, %s300
        %v302 = vld [vmem:[%s297] sm:$0xff]
        %v303 = vld [vmem:[%s301] sm:$0xff]
        %vm304 = vcmask 64512
        %305 = vst.msk [vmem:[#allocation2 + $0x2] sm:$0xff] %vm304, %v302
        %v306 = vlaneseq
        %v307 = vshrl.u32 %v306, 7
        %v308 = vsub.s32 0, %v307
        %v309 = vrot.slane %v302, %v308
        %vm310 = vcmask 58368
        %311 = vst.msk [vmem:[#allocation2] sm:$0x3] %vm310, %v309
        %v312 = vlaneseq
        %v313 = vshrl.u32 %v312, 7
        %v314 = vsub.s32 7, %v313
        %v315 = vrot.slane %v302, %v314
        %316 = vst.msk [vmem:[#allocation2 + $0xa] sm:$0x3] %vm310, %v315
        %v317 = vld [vmem:[#allocation2] sm:$0xff]
        %v318 = vld [vmem:[#allocation2 + $0x8] sm:$0x3]
        %v319 = vld [vmem:[%s2] sm:$0xff]
        %v320 = vld [vmem:[#allocation2 + $0x1] sm:$0xff]
        %v321 = vld [vmem:[#allocation2 + $0x9] sm:$0x3]
        %s322 = scalar_lea.vmem %s2, 8
        %v323 = vld [vmem:[%s322] sm:$0xff]
        %v325 = vsel %vm304, %v320, 0
        %v328 = vsel %vm304, %v321, 0
        %330 = vmatprep.subr.mxu0 0.0
        %331 = vmatpush1.msra.mxu0 %v323
        %332 = vmatprep.subr.mxu0 0.0
        %333 = vmatpush1.msra.mxu0 0.0
        %334 = vmatprep.subr.mxu0 0.0
        %335 = vmatpush1.msra.mxu0 0.0
        %336 = vmatprep.subr.mxu0 0.0
        %337 = vmatpush1.msra.mxu0 0.0
        %338 = vmatprep.subr.mxu0 0.0
        %339 = vmatpush1.msra.mxu0 0.0
        %340 = vmatprep.subr.mxu0 0.0
        %341 = vmatpush1.msra.mxu0 0.0
        %342 = vmatprep.subr.mxu0 0.0
        %343 = vmatpush1.msra.mxu0 0.0
        %344 = vmatprep.subr.mxu0 0.0
        %345 = vmatpush1.msra.mxu0 0.0
        %346 = vmatprep.subr.mxu0 0.0
        %347 = vmatpush1.msra.mxu0 0.0
        %348 = vmatprep.subr.mxu0 0.0
        %349 = vmatpush1.msra.mxu0 0.0
        %350 = vmatprep.subr.mxu0 0.0
        %351 = vmatpush1.msra.mxu0 0.0
        %352 = vmatprep.subr.mxu0 0.0
        %353 = vmatpush1.msra.mxu0 0.0
        %354 = vmatprep.subr.mxu0 0.0
        %355 = vmatpush1.msra.mxu0 0.0
        %356 = vmatprep.subr.mxu0 0.0
        %357 = vmatpush1.msra.mxu0 0.0
        %358 = vmatprep.subr.mxu0 0.0
        %359 = vmatpush1.msra.mxu0 0.0
        %360 = vmatprep.subr.mxu0 0.0
        %361 = vmatpush1.msra.mxu0 0.0
        %362 = vmatprep.subr.mxu0 0.0
        %363 = vmatpush1.msra.mxu0 0.0
        %364 = vmatprep.subr.mxu0 0.0
        %365 = vmatpush1.msra.mxu0 0.0
        %366 = vmatprep.subr.mxu0 0.0
        %367 = vmatpush1.msra.mxu0 0.0
        %368 = vmatprep.subr.mxu0 0.0
        %369 = vmatpush1.msra.mxu0 0.0
        %370 = vmatprep.subr.mxu0 0.0
        %371 = vmatpush1.msra.mxu0 0.0
        %372 = vmatprep.subr.mxu0 0.0
        %373 = vmatpush1.msra.mxu0 0.0
        %374 = vmatprep.subr.mxu0 0.0
        %375 = vmatpush1.msra.mxu0 0.0
        %376 = vmatprep.subr.mxu0 0.0
        %377 = vmatpush1.msra.mxu0 0.0
        %378 = vmatprep.subr.mxu0 0.0
        %379 = vmatpush1.msra.mxu0 0.0
        %380 = vmatprep.subr.mxu0 0.0
        %381 = vmatpush1.msra.mxu0 0.0
        %382 = vmatprep.subr.mxu0 0.0
        %383 = vmatpush1.msra.mxu0 0.0
        %384 = vmatprep.subr.mxu0 0.0
        %385 = vmatpush1.msra.mxu0 0.0
        %386 = vmatprep.subr.mxu0 0.0
        %387 = vmatpush1.msra.mxu0 0.0
        %388 = vmatprep.subr.mxu0 0.0
        %389 = vmatpush1.msra.mxu0 0.0
        %390 = vmatprep.subr.mxu0 0.0
        %391 = vmatpush1.msra.mxu0 0.0
        %392 = vmatprep.subr.mxu0 0.0
        %393 = vmatpush1.msra.mxu0 0.0
        %394 = vmatprep.mubr.f32.mxu0 0.0
        %395 = vmatmul.mubr.f32.gmra.mrb[0].mxu0 %v325
        %v396 = vpop.f32.mrb[0].mxu0
        %v397 = vadd.f32 0.0, %v396
        %v398 = vpop.f32.mrb[0].mxu0
        %399 = vmatprep.mubr.f32.mxu0 0.0
        %400 = vmatmul.mubr.f32.gmra.mrb[0].mxu0 %v328
        %v401 = vpop.f32.mrb[0].mxu0
        %v402 = vadd.f32 0.0, %v401
        %v403 = vpop.f32.mrb[0].mxu0
        %404 = vdwg.mxu0
        %v406 = vsel %vm304, %v317, 0
        %v409 = vsel %vm304, %v318, 0
        %411 = vmatprep.subr.mxu0 0.0
        %412 = vmatpush1.msra.mxu0 %v319
        %413 = vmatprep.subr.mxu0 0.0
        %414 = vmatpush1.msra.mxu0 0.0
        %415 = vmatprep.subr.mxu0 0.0
        %416 = vmatpush1.msra.mxu0 0.0
        %417 = vmatprep.subr.mxu0 0.0
        %418 = vmatpush1.msra.mxu0 0.0
        %419 = vmatprep.subr.mxu0 0.0
        %420 = vmatpush1.msra.mxu0 0.0
        %421 = vmatprep.subr.mxu0 0.0
        %422 = vmatpush1.msra.mxu0 0.0
        %423 = vmatprep.subr.mxu0 0.0
        %424 = vmatpush1.msra.mxu0 0.0
        %425 = vmatprep.subr.mxu0 0.0
        %426 = vmatpush1.msra.mxu0 0.0
        %427 = vmatprep.subr.mxu0 0.0
        %428 = vmatpush1.msra.mxu0 0.0
        %429 = vmatprep.subr.mxu0 0.0
        %430 = vmatpush1.msra.mxu0 0.0
        %431 = vmatprep.subr.mxu0 0.0
        %432 = vmatpush1.msra.mxu0 0.0
        %433 = vmatprep.subr.mxu0 0.0
        %434 = vmatpush1.msra.mxu0 0.0
        %435 = vmatprep.subr.mxu0 0.0
        %436 = vmatpush1.msra.mxu0 0.0
        %437 = vmatprep.subr.mxu0 0.0
        %438 = vmatpush1.msra.mxu0 0.0
        %439 = vmatprep.subr.mxu0 0.0
        %440 = vmatpush1.msra.mxu0 0.0
        %441 = vmatprep.subr.mxu0 0.0
        %442 = vmatpush1.msra.mxu0 0.0
        %443 = vmatprep.subr.mxu0 0.0
        %444 = vmatpush1.msra.mxu0 0.0
        %445 = vmatprep.subr.mxu0 0.0
        %446 = vmatpush1.msra.mxu0 0.0
        %447 = vmatprep.subr.mxu0 0.0
        %448 = vmatpush1.msra.mxu0 0.0
        %449 = vmatprep.subr.mxu0 0.0
        %450 = vmatpush1.msra.mxu0 0.0
        %451 = vmatprep.subr.mxu0 0.0
        %452 = vmatpush1.msra.mxu0 0.0
        %453 = vmatprep.subr.mxu0 0.0
        %454 = vmatpush1.msra.mxu0 0.0
        %455 = vmatprep.subr.mxu0 0.0
        %456 = vmatpush1.msra.mxu0 0.0
        %457 = vmatprep.subr.mxu0 0.0
        %458 = vmatpush1.msra.mxu0 0.0
        %459 = vmatprep.subr.mxu0 0.0
        %460 = vmatpush1.msra.mxu0 0.0
        %461 = vmatprep.subr.mxu0 0.0
        %462 = vmatpush1.msra.mxu0 0.0
        %463 = vmatprep.subr.mxu0 0.0
        %464 = vmatpush1.msra.mxu0 0.0
        %465 = vmatprep.subr.mxu0 0.0
        %466 = vmatpush1.msra.mxu0 0.0
        %467 = vmatprep.subr.mxu0 0.0
        %468 = vmatpush1.msra.mxu0 0.0
        %469 = vmatprep.subr.mxu0 0.0
        %470 = vmatpush1.msra.mxu0 0.0
        %471 = vmatprep.subr.mxu0 0.0
        %472 = vmatpush1.msra.mxu0 0.0
        %473 = vmatprep.subr.mxu0 0.0
        %474 = vmatpush1.msra.mxu0 0.0
        %475 = vmatprep.mubr.f32.mxu0 0.0
        %476 = vmatmul.mubr.f32.gmra.mrb[0].mxu0 %v406
        %v477 = vpop.f32.mrb[0].mxu0
        %v478 = vadd.f32 %v397, %v477
        %v479 = vpop.f32.mrb[0].mxu0
        %480 = vmatprep.mubr.f32.mxu0 0.0
        %481 = vmatmul.mubr.f32.gmra.mrb[0].mxu0 %v409
        %v482 = vpop.f32.mrb[0].mxu0
        %v483 = vadd.f32 %v402, %v482
        %v484 = vpop.f32.mrb[0].mxu0
        %485 = vdwg.mxu0
        %v486 = vld [vmem:[#allocation2 + $0x2] sm:$0xff]
        %v487 = vld [vmem:[#allocation2 + $0xa] sm:$0x3]
        %s488 = scalar_lea.vmem %s2, 16
        %v489 = vld [vmem:[%s488] sm:$0xff]
        %v491 = vsel %vm304, %v486, 0
        %v494 = vsel %vm304, %v487, 0
        %496 = vmatprep.subr.mxu0 0.0
        %497 = vmatpush1.msra.mxu0 %v489
        %498 = vmatprep.subr.mxu0 0.0
        %499 = vmatpush1.msra.mxu0 0.0
        %500 = vmatprep.subr.mxu0 0.0
        %501 = vmatpush1.msra.mxu0 0.0
        %502 = vmatprep.subr.mxu0 0.0
        %503 = vmatpush1.msra.mxu0 0.0
        %504 = vmatprep.subr.mxu0 0.0
        %505 = vmatpush1.msra.mxu0 0.0
        %506 = vmatprep.subr.mxu0 0.0
        %507 = vmatpush1.msra.mxu0 0.0
        %508 = vmatprep.subr.mxu0 0.0
        %509 = vmatpush1.msra.mxu0 0.0
        %510 = vmatprep.subr.mxu0 0.0
        %511 = vmatpush1.msra.mxu0 0.0
        %512 = vmatprep.subr.mxu0 0.0
        %513 = vmatpush1.msra.mxu0 0.0
        %514 = vmatprep.subr.mxu0 0.0
        %515 = vmatpush1.msra.mxu0 0.0
        %516 = vmatprep.subr.mxu0 0.0
        %517 = vmatpush1.msra.mxu0 0.0
        %518 = vmatprep.subr.mxu0 0.0
        %519 = vmatpush1.msra.mxu0 0.0
        %520 = vmatprep.subr.mxu0 0.0
        %521 = vmatpush1.msra.mxu0 0.0
        %522 = vmatprep.subr.mxu0 0.0
        %523 = vmatpush1.msra.mxu0 0.0
        %524 = vmatprep.subr.mxu0 0.0
        %525 = vmatpush1.msra.mxu0 0.0
        %526 = vmatprep.subr.mxu0 0.0
        %527 = vmatpush1.msra.mxu0 0.0
        %528 = vmatprep.subr.mxu0 0.0
        %529 = vmatpush1.msra.mxu0 0.0
        %530 = vmatprep.subr.mxu0 0.0
        %531 = vmatpush1.msra.mxu0 0.0
        %532 = vmatprep.subr.mxu0 0.0
        %533 = vmatpush1.msra.mxu0 0.0
        %534 = vmatprep.subr.mxu0 0.0
        %535 = vmatpush1.msra.mxu0 0.0
        %536 = vmatprep.subr.mxu0 0.0
        %537 = vmatpush1.msra.mxu0 0.0
        %538 = vmatprep.subr.mxu0 0.0
        %539 = vmatpush1.msra.mxu0 0.0
        %540 = vmatprep.subr.mxu0 0.0
        %541 = vmatpush1.msra.mxu0 0.0
        %542 = vmatprep.subr.mxu0 0.0
        %543 = vmatpush1.msra.mxu0 0.0
        %544 = vmatprep.subr.mxu0 0.0
        %545 = vmatpush1.msra.mxu0 0.0
        %546 = vmatprep.subr.mxu0 0.0
        %547 = vmatpush1.msra.mxu0 0.0
        %548 = vmatprep.subr.mxu0 0.0
        %549 = vmatpush1.msra.mxu0 0.0
        %550 = vmatprep.subr.mxu0 0.0
        %551 = vmatpush1.msra.mxu0 0.0
        %552 = vmatprep.subr.mxu0 0.0
        %553 = vmatpush1.msra.mxu0 0.0
        %554 = vmatprep.subr.mxu0 0.0
        %555 = vmatpush1.msra.mxu0 0.0
        %556 = vmatprep.subr.mxu0 0.0
        %557 = vmatpush1.msra.mxu0 0.0
        %558 = vmatprep.subr.mxu0 0.0
        %559 = vmatpush1.msra.mxu0 0.0
        %560 = vmatprep.mubr.f32.mxu0 0.0
        %561 = vmatmul.mubr.f32.gmra.mrb[0].mxu0 %v491
        %v562 = vpop.f32.mrb[0].mxu0
        %v563 = vadd.f32 0.0, %v562
        %v564 = vpop.f32.mrb[0].mxu0
        %565 = vmatprep.mubr.f32.mxu0 0.0
        %566 = vmatmul.mubr.f32.gmra.mrb[0].mxu0 %v494
        %v567 = vpop.f32.mrb[0].mxu0
        %v568 = vadd.f32 0.0, %v567
        %v569 = vpop.f32.mrb[0].mxu0
        %570 = vdwg.mxu0
        %v571 = vadd.f32 %v478, %v563
        %v572 = vadd.f32 %v483, %v568
        %v573 = vld [vmem:[%s3] sm:$0x1]
        %v575 = vlaneseq
        %v576 = vshrl.u32 %v575, 7
        %v577 = vsub.s32 0, %v576
        %v578 = vrot.slane %v573, %v577
        %v580 = vadd.f32 %v571, %v578
        %v581 = vadd.f32 %v572, %v578
        %vm582 = vcmp.ge.f32.partialorder %v580, 0.0
        %vm583 = vcmp.ge.f32.partialorder %v581, 0.0
        %v584 = vmul.f32 %v580, 0.01
        %v585 = vmul.f32 %v581, 0.01
        %v586 = vsel %vm582, %v580, %v584
        %v587 = vsel %vm583, %v581, %v585
        %v588 = vld [vmem:[%s4] sm:$0xff]
        %v589 = vld [vmem:[%s4 + $0x8] sm:$0xff]
        %v590 = vld [vmem:[%s4 + $0x10] sm:$0xff]
        %v591 = vld [vmem:[%s4 + $0x18] sm:$0xff]
        %s592 = scalar_lea.vmem %s4, 32
        %v593 = vld [vmem:[%s592] sm:$0xff]
        %v594 = vld [vmem:[%s592 + $0x8] sm:$0xff]
        %v595 = vld [vmem:[%s592 + $0x10] sm:$0xff]
        %v596 = vld [vmem:[%s592 + $0x18] sm:$0xff]
        %vm599 = vcmask 1046528
        %v600 = vrot.slane %v586, 1
        %v601 = vrot.slane %v587, 1
        %v602 = vsel %vm599, %v600, %v601
        %vm603 = vcmask 261120
        %v604 = vsel %vm603, %v602, 0
        %606 = vmatprep.subr.mxu0 0.0
        %607 = vmatpush1.msra.mxu0 %v593
        %608 = vmatprep.subr.mxu0 0.0
        %609 = vmatpush1.msra.mxu0 %v594
        %610 = vmatprep.subr.mxu0 0.0
        %611 = vmatpush1.msra.mxu0 %v595
        %612 = vmatprep.subr.mxu0 0.0
        %613 = vmatpush1.msra.mxu0 %v596
        %614 = vmatprep.subr.mxu0 0.0
        %615 = vmatpush1.msra.mxu0 0.0
        %616 = vmatprep.subr.mxu0 0.0
        %617 = vmatpush1.msra.mxu0 0.0
        %618 = vmatprep.subr.mxu0 0.0
        %619 = vmatpush1.msra.mxu0 0.0
        %620 = vmatprep.subr.mxu0 0.0
        %621 = vmatpush1.msra.mxu0 0.0
        %622 = vmatprep.subr.mxu0 0.0
        %623 = vmatpush1.msra.mxu0 0.0
        %624 = vmatprep.subr.mxu0 0.0
        %625 = vmatpush1.msra.mxu0 0.0
        %626 = vmatprep.subr.mxu0 0.0
        %627 = vmatpush1.msra.mxu0 0.0
        %628 = vmatprep.subr.mxu0 0.0
        %629 = vmatpush1.msra.mxu0 0.0
        %630 = vmatprep.subr.mxu0 0.0
        %631 = vmatpush1.msra.mxu0 0.0
        %632 = vmatprep.subr.mxu0 0.0
        %633 = vmatpush1.msra.mxu0 0.0
        %634 = vmatprep.subr.mxu0 0.0
        %635 = vmatpush1.msra.mxu0 0.0
        %636 = vmatprep.subr.mxu0 0.0
        %637 = vmatpush1.msra.mxu0 0.0
        %638 = vmatprep.subr.mxu0 0.0
        %639 = vmatpush1.msra.mxu0 0.0
        %640 = vmatprep.subr.mxu0 0.0
        %641 = vmatpush1.msra.mxu0 0.0
        %642 = vmatprep.subr.mxu0 0.0
        %643 = vmatpush1.msra.mxu0 0.0
        %644 = vmatprep.subr.mxu0 0.0
        %645 = vmatpush1.msra.mxu0 0.0
        %646 = vmatprep.subr.mxu0 0.0
        %647 = vmatpush1.msra.mxu0 0.0
        %648 = vmatprep.subr.mxu0 0.0
        %649 = vmatpush1.msra.mxu0 0.0
        %650 = vmatprep.subr.mxu0 0.0
        %651 = vmatpush1.msra.mxu0 0.0
        %652 = vmatprep.subr.mxu0 0.0
        %653 = vmatpush1.msra.mxu0 0.0
        %654 = vmatprep.subr.mxu0 0.0
        %655 = vmatpush1.msra.mxu0 0.0
        %656 = vmatprep.subr.mxu0 0.0
        %657 = vmatpush1.msra.mxu0 0.0
        %658 = vmatprep.subr.mxu0 0.0
        %659 = vmatpush1.msra.mxu0 0.0
        %660 = vmatprep.subr.mxu0 0.0
        %661 = vmatpush1.msra.mxu0 0.0
        %662 = vmatprep.subr.mxu0 0.0
        %663 = vmatpush1.msra.mxu0 0.0
        %664 = vmatprep.subr.mxu0 0.0
        %665 = vmatpush1.msra.mxu0 0.0
        %666 = vmatprep.subr.mxu0 0.0
        %667 = vmatpush1.msra.mxu0 0.0
        %668 = vmatprep.subr.mxu0 0.0
        %669 = vmatpush1.msra.mxu0 0.0
        %670 = vmatprep.mubr.f32.mxu0 0.0
        %671 = vmatmul.mubr.f32.gmra.mrb[0].mxu0 %v604
        %v672 = vpop.f32.mrb[0].mxu0
        %v673 = vadd.f32 0.0, %v672
        %v674 = vpop.f32.mrb[0].mxu0
        %675 = vdwg.mxu0
        %v676 = vsel %vm603, %v586, 0
        %678 = vmatprep.subr.mxu0 0.0
        %679 = vmatpush1.msra.mxu0 %v588
        %680 = vmatprep.subr.mxu0 0.0
        %681 = vmatpush1.msra.mxu0 %v589
        %682 = vmatprep.subr.mxu0 0.0
        %683 = vmatpush1.msra.mxu0 %v590
        %684 = vmatprep.subr.mxu0 0.0
        %685 = vmatpush1.msra.mxu0 %v591
        %686 = vmatprep.subr.mxu0 0.0
        %687 = vmatpush1.msra.mxu0 0.0
        %688 = vmatprep.subr.mxu0 0.0
        %689 = vmatpush1.msra.mxu0 0.0
        %690 = vmatprep.subr.mxu0 0.0
        %691 = vmatpush1.msra.mxu0 0.0
        %692 = vmatprep.subr.mxu0 0.0
        %693 = vmatpush1.msra.mxu0 0.0
        %694 = vmatprep.subr.mxu0 0.0
        %695 = vmatpush1.msra.mxu0 0.0
        %696 = vmatprep.subr.mxu0 0.0
        %697 = vmatpush1.msra.mxu0 0.0
        %698 = vmatprep.subr.mxu0 0.0
        %699 = vmatpush1.msra.mxu0 0.0
        %700 = vmatprep.subr.mxu0 0.0
        %701 = vmatpush1.msra.mxu0 0.0
        %702 = vmatprep.subr.mxu0 0.0
        %703 = vmatpush1.msra.mxu0 0.0
        %704 = vmatprep.subr.mxu0 0.0
        %705 = vmatpush1.msra.mxu0 0.0
        %706 = vmatprep.subr.mxu0 0.0
        %707 = vmatpush1.msra.mxu0 0.0
        %708 = vmatprep.subr.mxu0 0.0
        %709 = vmatpush1.msra.mxu0 0.0
        %710 = vmatprep.subr.mxu0 0.0
        %711 = vmatpush1.msra.mxu0 0.0
        %712 = vmatprep.subr.mxu0 0.0
        %713 = vmatpush1.msra.mxu0 0.0
        %714 = vmatprep.subr.mxu0 0.0
        %715 = vmatpush1.msra.mxu0 0.0
        %716 = vmatprep.subr.mxu0 0.0
        %717 = vmatpush1.msra.mxu0 0.0
        %718 = vmatprep.subr.mxu0 0.0
        %719 = vmatpush1.msra.mxu0 0.0
        %720 = vmatprep.subr.mxu0 0.0
        %721 = vmatpush1.msra.mxu0 0.0
        %722 = vmatprep.subr.mxu0 0.0
        %723 = vmatpush1.msra.mxu0 0.0
        %724 = vmatprep.subr.mxu0 0.0
        %725 = vmatpush1.msra.mxu0 0.0
        %726 = vmatprep.subr.mxu0 0.0
        %727 = vmatpush1.msra.mxu0 0.0
        %728 = vmatprep.subr.mxu0 0.0
        %729 = vmatpush1.msra.mxu0 0.0
        %730 = vmatprep.subr.mxu0 0.0
        %731 = vmatpush1.msra.mxu0 0.0
        %732 = vmatprep.subr.mxu0 0.0
        %733 = vmatpush1.msra.mxu0 0.0
        %734 = vmatprep.subr.mxu0 0.0
        %735 = vmatpush1.msra.mxu0 0.0
        %736 = vmatprep.subr.mxu0 0.0
        %737 = vmatpush1.msra.mxu0 0.0
        %738 = vmatprep.subr.mxu0 0.0
        %739 = vmatpush1.msra.mxu0 0.0
        %740 = vmatprep.subr.mxu0 0.0
        %741 = vmatpush1.msra.mxu0 0.0
        %742 = vmatprep.mubr.f32.mxu0 0.0
        %743 = vmatmul.mubr.f32.gmra.mrb[0].mxu0 %v676
        %v744 = vpop.f32.mrb[0].mxu0
        %v745 = vadd.f32 %v673, %v744
        %v746 = vpop.f32.mrb[0].mxu0
        %747 = vdwg.mxu0
        %s748 = scalar_lea.vmem %s4, 64
        %v749 = vld [vmem:[%s748] sm:$0xff]
        %v750 = vld [vmem:[%s748 + $0x8] sm:$0xff]
        %v751 = vld [vmem:[%s748 + $0x10] sm:$0xff]
        %v752 = vld [vmem:[%s748 + $0x18] sm:$0xff]
        %vm753 = vcmask 1045504
        %v754 = vrot.slane %v586, 2
        %v755 = vrot.slane %v587, 2
        %v756 = vsel %vm753, %v754, %v755
        %v757 = vsel %vm603, %v756, 0
        %759 = vmatprep.subr.mxu0 0.0
        %760 = vmatpush1.msra.mxu0 %v749
        %761 = vmatprep.subr.mxu0 0.0
        %762 = vmatpush1.msra.mxu0 %v750
        %763 = vmatprep.subr.mxu0 0.0
        %764 = vmatpush1.msra.mxu0 %v751
        %765 = vmatprep.subr.mxu0 0.0
        %766 = vmatpush1.msra.mxu0 %v752
        %767 = vmatprep.subr.mxu0 0.0
        %768 = vmatpush1.msra.mxu0 0.0
        %769 = vmatprep.subr.mxu0 0.0
        %770 = vmatpush1.msra.mxu0 0.0
        %771 = vmatprep.subr.mxu0 0.0
        %772 = vmatpush1.msra.mxu0 0.0
        %773 = vmatprep.subr.mxu0 0.0
        %774 = vmatpush1.msra.mxu0 0.0
        %775 = vmatprep.subr.mxu0 0.0
        %776 = vmatpush1.msra.mxu0 0.0
        %777 = vmatprep.subr.mxu0 0.0
        %778 = vmatpush1.msra.mxu0 0.0
        %779 = vmatprep.subr.mxu0 0.0
        %780 = vmatpush1.msra.mxu0 0.0
        %781 = vmatprep.subr.mxu0 0.0
        %782 = vmatpush1.msra.mxu0 0.0
        %783 = vmatprep.subr.mxu0 0.0
        %784 = vmatpush1.msra.mxu0 0.0
        %785 = vmatprep.subr.mxu0 0.0
        %786 = vmatpush1.msra.mxu0 0.0
        %787 = vmatprep.subr.mxu0 0.0
        %788 = vmatpush1.msra.mxu0 0.0
        %789 = vmatprep.subr.mxu0 0.0
        %790 = vmatpush1.msra.mxu0 0.0
        %791 = vmatprep.subr.mxu0 0.0
        %792 = vmatpush1.msra.mxu0 0.0
        %793 = vmatprep.subr.mxu0 0.0
        %794 = vmatpush1.msra.mxu0 0.0
        %795 = vmatprep.subr.mxu0 0.0
        %796 = vmatpush1.msra.mxu0 0.0
        %797 = vmatprep.subr.mxu0 0.0
        %798 = vmatpush1.msra.mxu0 0.0
        %799 = vmatprep.subr.mxu0 0.0
        %800 = vmatpush1.msra.mxu0 0.0
        %801 = vmatprep.subr.mxu0 0.0
        %802 = vmatpush1.msra.mxu0 0.0
        %803 = vmatprep.subr.mxu0 0.0
        %804 = vmatpush1.msra.mxu0 0.0
        %805 = vmatprep.subr.mxu0 0.0
        %806 = vmatpush1.msra.mxu0 0.0
        %807 = vmatprep.subr.mxu0 0.0
        %808 = vmatpush1.msra.mxu0 0.0
        %809 = vmatprep.subr.mxu0 0.0
        %810 = vmatpush1.msra.mxu0 0.0
        %811 = vmatprep.subr.mxu0 0.0
        %812 = vmatpush1.msra.mxu0 0.0
        %813 = vmatprep.subr.mxu0 0.0
        %814 = vmatpush1.msra.mxu0 0.0
        %815 = vmatprep.subr.mxu0 0.0
        %816 = vmatpush1.msra.mxu0 0.0
        %817 = vmatprep.subr.mxu0 0.0
        %818 = vmatpush1.msra.mxu0 0.0
        %819 = vmatprep.subr.mxu0 0.0
        %820 = vmatpush1.msra.mxu0 0.0
        %821 = vmatprep.subr.mxu0 0.0
        %822 = vmatpush1.msra.mxu0 0.0
        %823 = vmatprep.mubr.f32.mxu0 0.0
        %824 = vmatmul.mubr.f32.gmra.mrb[0].mxu0 %v757
        %v825 = vpop.f32.mrb[0].mxu0
        %v826 = vadd.f32 0.0, %v825
        %v827 = vpop.f32.mrb[0].mxu0
        %828 = vdwg.mxu0
        %v829 = vadd.f32 %v745, %v826
        %v830 = vld [vmem:[%s5] sm:$0x1]
        %v832 = vlaneseq
        %v833 = vshrl.u32 %v832, 7
        %v834 = vsub.s32 0, %v833
        %v835 = vrot.slane %v830, %v834
        %v837 = vadd.f32 %v829, %v835
        %v838 = vtanh.pop %v837
        %v839 = vmul.f32 %v838, 1.442695
        %v840 = vpow.pop %v839
        %v841 = vmul.f32 %v303, %v840
        %842 = vst.msk [vmem:[#allocation2 + $0x2] sm:$0xff] %vm304, %v303
        %v843 = vlaneseq
        %v844 = vshrl.u32 %v843, 7
        %v845 = vsub.s32 0, %v844
        %v846 = vrot.slane %v303, %v845
        %847 = vst.msk [vmem:[#allocation2] sm:$0x3] %vm310, %v846
        %v848 = vlaneseq
        %v849 = vshrl.u32 %v848, 7
        %v850 = vsub.s32 7, %v849
        %v851 = vrot.slane %v303, %v850
        %852 = vst.msk [vmem:[#allocation2 + $0xa] sm:$0x3] %vm310, %v851
        %v853 = vld [vmem:[#allocation2] sm:$0xff]
        %v854 = vld [vmem:[#allocation2 + $0x8] sm:$0x3]
        %s855 = scalar_lea.vmem %s2, 24
        %v856 = vld [vmem:[%s855] sm:$0xff]
        %v857 = vld [vmem:[#allocation2 + $0x1] sm:$0xff]
        %v858 = vld [vmem:[#allocation2 + $0x9] sm:$0x3]
        %s859 = scalar_lea.vmem %s2, 32
        %v860 = vld [vmem:[%s859] sm:$0xff]
        %v862 = vsel %vm304, %v857, 0
        %v865 = vsel %vm304, %v858, 0
        %867 = vmatprep.subr.mxu0 0.0
        %868 = vmatpush1.msra.mxu0 %v860
        %869 = vmatprep.subr.mxu0 0.0
        %870 = vmatpush1.msra.mxu0 0.0
        %871 = vmatprep.subr.mxu0 0.0
        %872 = vmatpush1.msra.mxu0 0.0
        %873 = vmatprep.subr.mxu0 0.0
        %874 = vmatpush1.msra.mxu0 0.0
        %875 = vmatprep.subr.mxu0 0.0
        %876 = vmatpush1.msra.mxu0 0.0
        %877 = vmatprep.subr.mxu0 0.0
        %878 = vmatpush1.msra.mxu0 0.0
        %879 = vmatprep.subr.mxu0 0.0
        %880 = vmatpush1.msra.mxu0 0.0
        %881 = vmatprep.subr.mxu0 0.0
        %882 = vmatpush1.msra.mxu0 0.0
        %883 = vmatprep.subr.mxu0 0.0
        %884 = vmatpush1.msra.mxu0 0.0
        %885 = vmatprep.subr.mxu0 0.0
        %886 = vmatpush1.msra.mxu0 0.0
        %887 = vmatprep.subr.mxu0 0.0
        %888 = vmatpush1.msra.mxu0 0.0
        %889 = vmatprep.subr.mxu0 0.0
        %890 = vmatpush1.msra.mxu0 0.0
        %891 = vmatprep.subr.mxu0 0.0
        %892 = vmatpush1.msra.mxu0 0.0
        %893 = vmatprep.subr.mxu0 0.0
        %894 = vmatpush1.msra.mxu0 0.0
        %895 = vmatprep.subr.mxu0 0.0
        %896 = vmatpush1.msra.mxu0 0.0
        %897 = vmatprep.subr.mxu0 0.0
        %898 = vmatpush1.msra.mxu0 0.0
        %899 = vmatprep.subr.mxu0 0.0
        %900 = vmatpush1.msra.mxu0 0.0
        %901 = vmatprep.subr.mxu0 0.0
        %902 = vmatpush1.msra.mxu0 0.0
        %903 = vmatprep.subr.mxu0 0.0
        %904 = vmatpush1.msra.mxu0 0.0
        %905 = vmatprep.subr.mxu0 0.0
        %906 = vmatpush1.msra.mxu0 0.0
        %907 = vmatprep.subr.mxu0 0.0
        %908 = vmatpush1.msra.mxu0 0.0
        %909 = vmatprep.subr.mxu0 0.0
        %910 = vmatpush1.msra.mxu0 0.0
        %911 = vmatprep.subr.mxu0 0.0
        %912 = vmatpush1.msra.mxu0 0.0
        %913 = vmatprep.subr.mxu0 0.0
        %914 = vmatpush1.msra.mxu0 0.0
        %915 = vmatprep.subr.mxu0 0.0
        %916 = vmatpush1.msra.mxu0 0.0
        %917 = vmatprep.subr.mxu0 0.0
        %918 = vmatpush1.msra.mxu0 0.0
        %919 = vmatprep.subr.mxu0 0.0
        %920 = vmatpush1.msra.mxu0 0.0
        %921 = vmatprep.subr.mxu0 0.0
        %922 = vmatpush1.msra.mxu0 0.0
        %923 = vmatprep.subr.mxu0 0.0
        %924 = vmatpush1.msra.mxu0 0.0
        %925 = vmatprep.subr.mxu0 0.0
        %926 = vmatpush1.msra.mxu0 0.0
        %927 = vmatprep.subr.mxu0 0.0
        %928 = vmatpush1.msra.mxu0 0.0
        %929 = vmatprep.subr.mxu0 0.0
        %930 = vmatpush1.msra.mxu0 0.0
        %931 = vmatprep.mubr.f32.mxu0 0.0
        %932 = vmatmul.mubr.f32.gmra.mrb[0].mxu0 %v862
        %v933 = vpop.f32.mrb[0].mxu0
        %v934 = vadd.f32 0.0, %v933
        %v935 = vpop.f32.mrb[0].mxu0
        %936 = vmatprep.mubr.f32.mxu0 0.0
        %937 = vmatmul.mubr.f32.gmra.mrb[0].mxu0 %v865
        %v938 = vpop.f32.mrb[0].mxu0
        %v939 = vadd.f32 0.0, %v938
        %v940 = vpop.f32.mrb[0].mxu0
        %941 = vdwg.mxu0
        %v943 = vsel %vm304, %v853, 0
        %v946 = vsel %vm304, %v854, 0
        %948 = vmatprep.subr.mxu0 0.0
        %949 = vmatpush1.msra.mxu0 %v856
        %950 = vmatprep.subr.mxu0 0.0
        %951 = vmatpush1.msra.mxu0 0.0
        %952 = vmatprep.subr.mxu0 0.0
        %953 = vmatpush1.msra.mxu0 0.0
        %954 = vmatprep.subr.mxu0 0.0
        %955 = vmatpush1.msra.mxu0 0.0
        %956 = vmatprep.subr.mxu0 0.0
        %957 = vmatpush1.msra.mxu0 0.0
        %958 = vmatprep.subr.mxu0 0.0
        %959 = vmatpush1.msra.mxu0 0.0
        %960 = vmatprep.subr.mxu0 0.0
        %961 = vmatpush1.msra.mxu0 0.0
        %962 = vmatprep.subr.mxu0 0.0
        %963 = vmatpush1.msra.mxu0 0.0
        %964 = vmatprep.subr.mxu0 0.0
        %965 = vmatpush1.msra.mxu0 0.0
        %966 = vmatprep.subr.mxu0 0.0
        %967 = vmatpush1.msra.mxu0 0.0
        %968 = vmatprep.subr.mxu0 0.0
        %969 = vmatpush1.msra.mxu0 0.0
        %970 = vmatprep.subr.mxu0 0.0
        %971 = vmatpush1.msra.mxu0 0.0
        %972 = vmatprep.subr.mxu0 0.0
        %973 = vmatpush1.msra.mxu0 0.0
        %974 = vmatprep.subr.mxu0 0.0
        %975 = vmatpush1.msra.mxu0 0.0
        %976 = vmatprep.subr.mxu0 0.0
        %977 = vmatpush1.msra.mxu0 0.0
        %978 = vmatprep.subr.mxu0 0.0
        %979 = vmatpush1.msra.mxu0 0.0
        %980 = vmatprep.subr.mxu0 0.0
        %981 = vmatpush1.msra.mxu0 0.0
        %982 = vmatprep.subr.mxu0 0.0
        %983 = vmatpush1.msra.mxu0 0.0
        %984 = vmatprep.subr.mxu0 0.0
        %985 = vmatpush1.msra.mxu0 0.0
        %986 = vmatprep.subr.mxu0 0.0
        %987 = vmatpush1.msra.mxu0 0.0
        %988 = vmatprep.subr.mxu0 0.0
        %989 = vmatpush1.msra.mxu0 0.0
        %990 = vmatprep.subr.mxu0 0.0
        %991 = vmatpush1.msra.mxu0 0.0
        %992 = vmatprep.subr.mxu0 0.0
        %993 = vmatpush1.msra.mxu0 0.0
        %994 = vmatprep.subr.mxu0 0.0
        %995 = vmatpush1.msra.mxu0 0.0
        %996 = vmatprep.subr.mxu0 0.0
        %997 = vmatpush1.msra.mxu0 0.0
        %998 = vmatprep.subr.mxu0 0.0
        %999 = vmatpush1.msra.mxu0 0.0
        %1000 = vmatprep.subr.mxu0 0.0
        %1001 = vmatpush1.msra.mxu0 0.0
        %1002 = vmatprep.subr.mxu0 0.0
        %1003 = vmatpush1.msra.mxu0 0.0
        %1004 = vmatprep.subr.mxu0 0.0
        %1005 = vmatpush1.msra.mxu0 0.0
        %1006 = vmatprep.subr.mxu0 0.0
        %1007 = vmatpush1.msra.mxu0 0.0
        %1008 = vmatprep.subr.mxu0 0.0
        %1009 = vmatpush1.msra.mxu0 0.0
        %1010 = vmatprep.subr.mxu0 0.0
        %1011 = vmatpush1.msra.mxu0 0.0
        %1012 = vmatprep.mubr.f32.mxu0 0.0
        %1013 = vmatmul.mubr.f32.gmra.mrb[0].mxu0 %v943
        %v1014 = vpop.f32.mrb[0].mxu0
        %v1015 = vadd.f32 %v934, %v1014
        %v1016 = vpop.f32.mrb[0].mxu0
        %1017 = vmatprep.mubr.f32.mxu0 0.0
        %1018 = vmatmul.mubr.f32.gmra.mrb[0].mxu0 %v946
        %v1019 = vpop.f32.mrb[0].mxu0
        %v1020 = vadd.f32 %v939, %v1019
        %v1021 = vpop.f32.mrb[0].mxu0
        %1022 = vdwg.mxu0
        %v1023 = vld [vmem:[#allocation2 + $0x2] sm:$0xff]
        %v1024 = vld [vmem:[#allocation2 + $0xa] sm:$0x3]
        %s1025 = scalar_lea.vmem %s2, 40
        %v1026 = vld [vmem:[%s1025] sm:$0xff]
        %v1028 = vsel %vm304, %v1023, 0
        %v1031 = vsel %vm304, %v1024, 0
        %1033 = vmatprep.subr.mxu0 0.0
        %1034 = vmatpush1.msra.mxu0 %v1026
        %1035 = vmatprep.subr.mxu0 0.0
        %1036 = vmatpush1.msra.mxu0 0.0
        %1037 = vmatprep.subr.mxu0 0.0
        %1038 = vmatpush1.msra.mxu0 0.0
        %1039 = vmatprep.subr.mxu0 0.0
        %1040 = vmatpush1.msra.mxu0 0.0
        %1041 = vmatprep.subr.mxu0 0.0
        %1042 = vmatpush1.msra.mxu0 0.0
        %1043 = vmatprep.subr.mxu0 0.0
        %1044 = vmatpush1.msra.mxu0 0.0
        %1045 = vmatprep.subr.mxu0 0.0
        %1046 = vmatpush1.msra.mxu0 0.0
        %1047 = vmatprep.subr.mxu0 0.0
        %1048 = vmatpush1.msra.mxu0 0.0
        %1049 = vmatprep.subr.mxu0 0.0
        %1050 = vmatpush1.msra.mxu0 0.0
        %1051 = vmatprep.subr.mxu0 0.0
        %1052 = vmatpush1.msra.mxu0 0.0
        %1053 = vmatprep.subr.mxu0 0.0
        %1054 = vmatpush1.msra.mxu0 0.0
        %1055 = vmatprep.subr.mxu0 0.0
        %1056 = vmatpush1.msra.mxu0 0.0
        %1057 = vmatprep.subr.mxu0 0.0
        %1058 = vmatpush1.msra.mxu0 0.0
        %1059 = vmatprep.subr.mxu0 0.0
        %1060 = vmatpush1.msra.mxu0 0.0
        %1061 = vmatprep.subr.mxu0 0.0
        %1062 = vmatpush1.msra.mxu0 0.0
        %1063 = vmatprep.subr.mxu0 0.0
        %1064 = vmatpush1.msra.mxu0 0.0
        %1065 = vmatprep.subr.mxu0 0.0
        %1066 = vmatpush1.msra.mxu0 0.0
        %1067 = vmatprep.subr.mxu0 0.0
        %1068 = vmatpush1.msra.mxu0 0.0
        %1069 = vmatprep.subr.mxu0 0.0
        %1070 = vmatpush1.msra.mxu0 0.0
        %1071 = vmatprep.subr.mxu0 0.0
        %1072 = vmatpush1.msra.mxu0 0.0
        %1073 = vmatprep.subr.mxu0 0.0
        %1074 = vmatpush1.msra.mxu0 0.0
        %1075 = vmatprep.subr.mxu0 0.0
        %1076 = vmatpush1.msra.mxu0 0.0
        %1077 = vmatprep.subr.mxu0 0.0
        %1078 = vmatpush1.msra.mxu0 0.0
        %1079 = vmatprep.subr.mxu0 0.0
        %1080 = vmatpush1.msra.mxu0 0.0
        %1081 = vmatprep.subr.mxu0 0.0
        %1082 = vmatpush1.msra.mxu0 0.0
        %1083 = vmatprep.subr.mxu0 0.0
        %1084 = vmatpush1.msra.mxu0 0.0
        %1085 = vmatprep.subr.mxu0 0.0
        %1086 = vmatpush1.msra.mxu0 0.0
        %1087 = vmatprep.subr.mxu0 0.0
        %1088 = vmatpush1.msra.mxu0 0.0
        %1089 = vmatprep.subr.mxu0 0.0
        %1090 = vmatpush1.msra.mxu0 0.0
        %1091 = vmatprep.subr.mxu0 0.0
        %1092 = vmatpush1.msra.mxu0 0.0
        %1093 = vmatprep.subr.mxu0 0.0
        %1094 = vmatpush1.msra.mxu0 0.0
        %1095 = vmatprep.subr.mxu0 0.0
        %1096 = vmatpush1.msra.mxu0 0.0
        %1097 = vmatprep.mubr.f32.mxu0 0.0
        %1098 = vmatmul.mubr.f32.gmra.mrb[0].mxu0 %v1028
        %v1099 = vpop.f32.mrb[0].mxu0
        %v1100 = vadd.f32 0.0, %v1099
        %v1101 = vpop.f32.mrb[0].mxu0
        %1102 = vmatprep.mubr.f32.mxu0 0.0
        %1103 = vmatmul.mubr.f32.gmra.mrb[0].mxu0 %v1031
        %v1104 = vpop.f32.mrb[0].mxu0
        %v1105 = vadd.f32 0.0, %v1104
        %v1106 = vpop.f32.mrb[0].mxu0
        %1107 = vdwg.mxu0
        %v1108 = vadd.f32 %v1015, %v1100
        %v1109 = vadd.f32 %v1020, %v1105
        %s1110 = scalar_lea.vmem %s3, 1
        %v1111 = vld [vmem:[%s1110] sm:$0x1]
        %v1113 = vlaneseq
        %v1114 = vshrl.u32 %v1113, 7
        %v1115 = vsub.s32 0, %v1114
        %v1116 = vrot.slane %v1111, %v1115
        %v1118 = vadd.f32 %v1108, %v1116
        %v1119 = vadd.f32 %v1109, %v1116
        %vm1120 = vcmp.ge.f32.partialorder %v1118, 0.0
        %vm1121 = vcmp.ge.f32.partialorder %v1119, 0.0
        %v1122 = vmul.f32 %v1118, 0.01
        %v1123 = vmul.f32 %v1119, 0.01
        %v1124 = vsel %vm1120, %v1118, %v1122
        %v1125 = vsel %vm1121, %v1119, %v1123
        %s1126 = scalar_lea.vmem %s4, 96
        %v1127 = vld [vmem:[%s1126] sm:$0xff]
        %v1128 = vld [vmem:[%s1126 + $0x8] sm:$0xff]
        %v1129 = vld [vmem:[%s1126 + $0x10] sm:$0xff]
        %v1130 = vld [vmem:[%s1126 + $0x18] sm:$0xff]
        %s1131 = scalar_lea.vmem %s4, 128
        %v1132 = vld [vmem:[%s1131] sm:$0xff]
        %v1133 = vld [vmem:[%s1131 + $0x8] sm:$0xff]
        %v1134 = vld [vmem:[%s1131 + $0x10] sm:$0xff]
        %v1135 = vld [vmem:[%s1131 + $0x18] sm:$0xff]
        %v1138 = vrot.slane %v1124, 1
        %v1139 = vrot.slane %v1125, 1
        %v1140 = vsel %vm599, %v1138, %v1139
        %v1141 = vsel %vm603, %v1140, 0
        %1143 = vmatprep.subr.mxu0 0.0
        %1144 = vmatpush1.msra.mxu0 %v1132
        %1145 = vmatprep.subr.mxu0 0.0
        %1146 = vmatpush1.msra.mxu0 %v1133
        %1147 = vmatprep.subr.mxu0 0.0
        %1148 = vmatpush1.msra.mxu0 %v1134
        %1149 = vmatprep.subr.mxu0 0.0
        %1150 = vmatpush1.msra.mxu0 %v1135
        %1151 = vmatprep.subr.mxu0 0.0
        %1152 = vmatpush1.msra.mxu0 0.0
        %1153 = vmatprep.subr.mxu0 0.0
        %1154 = vmatpush1.msra.mxu0 0.0
        %1155 = vmatprep.subr.mxu0 0.0
        %1156 = vmatpush1.msra.mxu0 0.0
        %1157 = vmatprep.subr.mxu0 0.0
        %1158 = vmatpush1.msra.mxu0 0.0
        %1159 = vmatprep.subr.mxu0 0.0
        %1160 = vmatpush1.msra.mxu0 0.0
        %1161 = vmatprep.subr.mxu0 0.0
        %1162 = vmatpush1.msra.mxu0 0.0
        %1163 = vmatprep.subr.mxu0 0.0
        %1164 = vmatpush1.msra.mxu0 0.0
        %1165 = vmatprep.subr.mxu0 0.0
        %1166 = vmatpush1.msra.mxu0 0.0
        %1167 = vmatprep.subr.mxu0 0.0
        %1168 = vmatpush1.msra.mxu0 0.0
        %1169 = vmatprep.subr.mxu0 0.0
        %1170 = vmatpush1.msra.mxu0 0.0
        %1171 = vmatprep.subr.mxu0 0.0
        %1172 = vmatpush1.msra.mxu0 0.0
        %1173 = vmatprep.subr.mxu0 0.0
        %1174 = vmatpush1.msra.mxu0 0.0
        %1175 = vmatprep.subr.mxu0 0.0
        %1176 = vmatpush1.msra.mxu0 0.0
        %1177 = vmatprep.subr.mxu0 0.0
        %1178 = vmatpush1.msra.mxu0 0.0
        %1179 = vmatprep.subr.mxu0 0.0
        %1180 = vmatpush1.msra.mxu0 0.0
        %1181 = vmatprep.subr.mxu0 0.0
        %1182 = vmatpush1.msra.mxu0 0.0
        %1183 = vmatprep.subr.mxu0 0.0
        %1184 = vmatpush1.msra.mxu0 0.0
        %1185 = vmatprep.subr.mxu0 0.0
        %1186 = vmatpush1.msra.mxu0 0.0
        %1187 = vmatprep.subr.mxu0 0.0
        %1188 = vmatpush1.msra.mxu0 0.0
        %1189 = vmatprep.subr.mxu0 0.0
        %1190 = vmatpush1.msra.mxu0 0.0
        %1191 = vmatprep.subr.mxu0 0.0
        %1192 = vmatpush1.msra.mxu0 0.0
        %1193 = vmatprep.subr.mxu0 0.0
        %1194 = vmatpush1.msra.mxu0 0.0
        %1195 = vmatprep.subr.mxu0 0.0
        %1196 = vmatpush1.msra.mxu0 0.0
        %1197 = vmatprep.subr.mxu0 0.0
        %1198 = vmatpush1.msra.mxu0 0.0
        %1199 = vmatprep.subr.mxu0 0.0
        %1200 = vmatpush1.msra.mxu0 0.0
        %1201 = vmatprep.subr.mxu0 0.0
        %1202 = vmatpush1.msra.mxu0 0.0
        %1203 = vmatprep.subr.mxu0 0.0
        %1204 = vmatpush1.msra.mxu0 0.0
        %1205 = vmatprep.subr.mxu0 0.0
        %1206 = vmatpush1.msra.mxu0 0.0
        %1207 = vmatprep.mubr.f32.mxu0 0.0
        %1208 = vmatmul.mubr.f32.gmra.mrb[0].mxu0 %v1141
        %v1209 = vpop.f32.mrb[0].mxu0
        %v1210 = vadd.f32 0.0, %v1209
        %v1211 = vpop.f32.mrb[0].mxu0
        %1212 = vdwg.mxu0
        %v1213 = vsel %vm603, %v1124, 0
        %1215 = vmatprep.subr.mxu0 0.0
        %1216 = vmatpush1.msra.mxu0 %v1127
        %1217 = vmatprep.subr.mxu0 0.0
        %1218 = vmatpush1.msra.mxu0 %v1128
        %1219 = vmatprep.subr.mxu0 0.0
        %1220 = vmatpush1.msra.mxu0 %v1129
        %1221 = vmatprep.subr.mxu0 0.0
        %1222 = vmatpush1.msra.mxu0 %v1130
        %1223 = vmatprep.subr.mxu0 0.0
        %1224 = vmatpush1.msra.mxu0 0.0
        %1225 = vmatprep.subr.mxu0 0.0
        %1226 = vmatpush1.msra.mxu0 0.0
        %1227 = vmatprep.subr.mxu0 0.0
        %1228 = vmatpush1.msra.mxu0 0.0
        %1229 = vmatprep.subr.mxu0 0.0
        %1230 = vmatpush1.msra.mxu0 0.0
        %1231 = vmatprep.subr.mxu0 0.0
        %1232 = vmatpush1.msra.mxu0 0.0
        %1233 = vmatprep.subr.mxu0 0.0
        %1234 = vmatpush1.msra.mxu0 0.0
        %1235 = vmatprep.subr.mxu0 0.0
        %1236 = vmatpush1.msra.mxu0 0.0
        %1237 = vmatprep.subr.mxu0 0.0
        %1238 = vmatpush1.msra.mxu0 0.0
        %1239 = vmatprep.subr.mxu0 0.0
        %1240 = vmatpush1.msra.mxu0 0.0
        %1241 = vmatprep.subr.mxu0 0.0
        %1242 = vmatpush1.msra.mxu0 0.0
        %1243 = vmatprep.subr.mxu0 0.0
        %1244 = vmatpush1.msra.mxu0 0.0
        %1245 = vmatprep.subr.mxu0 0.0
        %1246 = vmatpush1.msra.mxu0 0.0
        %1247 = vmatprep.subr.mxu0 0.0
        %1248 = vmatpush1.msra.mxu0 0.0
        %1249 = vmatprep.subr.mxu0 0.0
        %1250 = vmatpush1.msra.mxu0 0.0
        %1251 = vmatprep.subr.mxu0 0.0
        %1252 = vmatpush1.msra.mxu0 0.0
        %1253 = vmatprep.subr.mxu0 0.0
        %1254 = vmatpush1.msra.mxu0 0.0
        %1255 = vmatprep.subr.mxu0 0.0
        %1256 = vmatpush1.msra.mxu0 0.0
        %1257 = vmatprep.subr.mxu0 0.0
        %1258 = vmatpush1.msra.mxu0 0.0
        %1259 = vmatprep.subr.mxu0 0.0
        %1260 = vmatpush1.msra.mxu0 0.0
        %1261 = vmatprep.subr.mxu0 0.0
        %1262 = vmatpush1.msra.mxu0 0.0
        %1263 = vmatprep.subr.mxu0 0.0
        %1264 = vmatpush1.msra.mxu0 0.0
        %1265 = vmatprep.subr.mxu0 0.0
        %1266 = vmatpush1.msra.mxu0 0.0
        %1267 = vmatprep.subr.mxu0 0.0
        %1268 = vmatpush1.msra.mxu0 0.0
        %1269 = vmatprep.subr.mxu0 0.0
        %1270 = vmatpush1.msra.mxu0 0.0
        %1271 = vmatprep.subr.mxu0 0.0
        %1272 = vmatpush1.msra.mxu0 0.0
        %1273 = vmatprep.subr.mxu0 0.0
        %1274 = vmatpush1.msra.mxu0 0.0
        %1275 = vmatprep.subr.mxu0 0.0
        %1276 = vmatpush1.msra.mxu0 0.0
        %1277 = vmatprep.subr.mxu0 0.0
        %1278 = vmatpush1.msra.mxu0 0.0
        %1279 = vmatprep.mubr.f32.mxu0 0.0
        %1280 = vmatmul.mubr.f32.gmra.mrb[0].mxu0 %v1213
        %v1281 = vpop.f32.mrb[0].mxu0
        %v1282 = vadd.f32 %v1210, %v1281
        %v1283 = vpop.f32.mrb[0].mxu0
        %1284 = vdwg.mxu0
        %s1285 = scalar_lea.vmem %s4, 160
        %v1286 = vld [vmem:[%s1285] sm:$0xff]
        %v1287 = vld [vmem:[%s1285 + $0x8] sm:$0xff]
        %v1288 = vld [vmem:[%s1285 + $0x10] sm:$0xff]
        %v1289 = vld [vmem:[%s1285 + $0x18] sm:$0xff]
        %v1290 = vrot.slane %v1124, 2
        %v1291 = vrot.slane %v1125, 2
        %v1292 = vsel %vm753, %v1290, %v1291
        %v1293 = vsel %vm603, %v1292, 0
        %1295 = vmatprep.subr.mxu0 0.0
        %1296 = vmatpush1.msra.mxu0 %v1286
        %1297 = vmatprep.subr.mxu0 0.0
        %1298 = vmatpush1.msra.mxu0 %v1287
        %1299 = vmatprep.subr.mxu0 0.0
        %1300 = vmatpush1.msra.mxu0 %v1288
        %1301 = vmatprep.subr.mxu0 0.0
        %1302 = vmatpush1.msra.mxu0 %v1289
        %1303 = vmatprep.subr.mxu0 0.0
        %1304 = vmatpush1.msra.mxu0 0.0
        %1305 = vmatprep.subr.mxu0 0.0
        %1306 = vmatpush1.msra.mxu0 0.0
        %1307 = vmatprep.subr.mxu0 0.0
        %1308 = vmatpush1.msra.mxu0 0.0
        %1309 = vmatprep.subr.mxu0 0.0
        %1310 = vmatpush1.msra.mxu0 0.0
        %1311 = vmatprep.subr.mxu0 0.0
        %1312 = vmatpush1.msra.mxu0 0.0
        %1313 = vmatprep.subr.mxu0 0.0
        %1314 = vmatpush1.msra.mxu0 0.0
        %1315 = vmatprep.subr.mxu0 0.0
        %1316 = vmatpush1.msra.mxu0 0.0
        %1317 = vmatprep.subr.mxu0 0.0
        %1318 = vmatpush1.msra.mxu0 0.0
        %1319 = vmatprep.subr.mxu0 0.0
        %1320 = vmatpush1.msra.mxu0 0.0
        %1321 = vmatprep.subr.mxu0 0.0
        %1322 = vmatpush1.msra.mxu0 0.0
        %1323 = vmatprep.subr.mxu0 0.0
        %1324 = vmatpush1.msra.mxu0 0.0
        %1325 = vmatprep.subr.mxu0 0.0
        %1326 = vmatpush1.msra.mxu0 0.0
        %1327 = vmatprep.subr.mxu0 0.0
        %1328 = vmatpush1.msra.mxu0 0.0
        %1329 = vmatprep.subr.mxu0 0.0
        %1330 = vmatpush1.msra.mxu0 0.0
        %1331 = vmatprep.subr.mxu0 0.0
        %1332 = vmatpush1.msra.mxu0 0.0
        %1333 = vmatprep.subr.mxu0 0.0
        %1334 = vmatpush1.msra.mxu0 0.0
        %1335 = vmatprep.subr.mxu0 0.0
        %1336 = vmatpush1.msra.mxu0 0.0
        %1337 = vmatprep.subr.mxu0 0.0
        %1338 = vmatpush1.msra.mxu0 0.0
        %1339 = vmatprep.subr.mxu0 0.0
        %1340 = vmatpush1.msra.mxu0 0.0
        %1341 = vmatprep.subr.mxu0 0.0
        %1342 = vmatpush1.msra.mxu0 0.0
        %1343 = vmatprep.subr.mxu0 0.0
        %1344 = vmatpush1.msra.mxu0 0.0
        %1345 = vmatprep.subr.mxu0 0.0
        %1346 = vmatpush1.msra.mxu0 0.0
        %1347 = vmatprep.subr.mxu0 0.0
        %1348 = vmatpush1.msra.mxu0 0.0
        %1349 = vmatprep.subr.mxu0 0.0
        %1350 = vmatpush1.msra.mxu0 0.0
        %1351 = vmatprep.subr.mxu0 0.0
        %1352 = vmatpush1.msra.mxu0 0.0
        %1353 = vmatprep.subr.mxu0 0.0
        %1354 = vmatpush1.msra.mxu0 0.0
        %1355 = vmatprep.subr.mxu0 0.0
        %1356 = vmatpush1.msra.mxu0 0.0
        %1357 = vmatprep.subr.mxu0 0.0
        %1358 = vmatpush1.msra.mxu0 0.0
        %1359 = vmatprep.mubr.f32.mxu0 0.0
        %1360 = vmatmul.mubr.f32.gmra.mrb[0].mxu0 %v1293
        %v1361 = vpop.f32.mrb[0].mxu0
        %v1362 = vadd.f32 0.0, %v1361
        %v1363 = vpop.f32.mrb[0].mxu0
        %1364 = vdwg.mxu0
        %v1365 = vadd.f32 %v1282, %v1362
        %s1366 = scalar_lea.vmem %s5, 1
        %v1367 = vld [vmem:[%s1366] sm:$0x1]
        %v1369 = vlaneseq
        %v1370 = vshrl.u32 %v1369, 7
        %v1371 = vsub.s32 0, %v1370
        %v1372 = vrot.slane %v1367, %v1371
        %v1374 = vadd.f32 %v1365, %v1372
        %v1375 = vtanh.pop %v1374
        %v1376 = vmul.f32 %v1375, 1.442695
        %v1377 = vpow.pop %v1376
        %v1378 = vmul.f32 %v302, %v1377
        %1379 = vst.msk [vmem:[#allocation2 + $0x2] sm:$0xff] %vm304, %v841
        %v1380 = vlaneseq
        %v1381 = vshrl.u32 %v1380, 7
        %v1382 = vsub.s32 0, %v1381
        %v1383 = vrot.slane %v841, %v1382
        %1384 = vst.msk [vmem:[#allocation2] sm:$0x3] %vm310, %v1383
        %v1385 = vlaneseq
        %v1386 = vshrl.u32 %v1385, 7
        %v1387 = vsub.s32 7, %v1386
        %v1388 = vrot.slane %v841, %v1387
        %1389 = vst.msk [vmem:[#allocation2 + $0xa] sm:$0x3] %vm310, %v1388
        %v1390 = vld [vmem:[#allocation2] sm:$0xff]
        %v1391 = vld [vmem:[#allocation2 + $0x8] sm:$0x3]
        %s1392 = scalar_lea.vmem %s2, 72
        %v1393 = vld [vmem:[%s1392] sm:$0xff]
        %v1394 = vld [vmem:[#allocation2 + $0x1] sm:$0xff]
        %v1395 = vld [vmem:[#allocation2 + $0x9] sm:$0x3]
        %s1396 = scalar_lea.vmem %s2, 80
        %v1397 = vld [vmem:[%s1396] sm:$0xff]
        %v1399 = vsel %vm304, %v1394, 0
        %v1402 = vsel %vm304, %v1395, 0
        %1404 = vmatprep.subr.mxu0 0.0
        %1405 = vmatpush1.msra.mxu0 %v1397
        %1406 = vmatprep.subr.mxu0 0.0
        %1407 = vmatpush1.msra.mxu0 0.0
        %1408 = vmatprep.subr.mxu0 0.0
        %1409 = vmatpush1.msra.mxu0 0.0
        %1410 = vmatprep.subr.mxu0 0.0
        %1411 = vmatpush1.msra.mxu0 0.0
        %1412 = vmatprep.subr.mxu0 0.0
        %1413 = vmatpush1.msra.mxu0 0.0
        %1414 = vmatprep.subr.mxu0 0.0
        %1415 = vmatpush1.msra.mxu0 0.0
        %1416 = vmatprep.subr.mxu0 0.0
        %1417 = vmatpush1.msra.mxu0 0.0
        %1418 = vmatprep.subr.mxu0 0.0
        %1419 = vmatpush1.msra.mxu0 0.0
        %1420 = vmatprep.subr.mxu0 0.0
        %1421 = vmatpush1.msra.mxu0 0.0
        %1422 = vmatprep.subr.mxu0 0.0
        %1423 = vmatpush1.msra.mxu0 0.0
        %1424 = vmatprep.subr.mxu0 0.0
        %1425 = vmatpush1.msra.mxu0 0.0
        %1426 = vmatprep.subr.mxu0 0.0
        %1427 = vmatpush1.msra.mxu0 0.0
        %1428 = vmatprep.subr.mxu0 0.0
        %1429 = vmatpush1.msra.mxu0 0.0
        %1430 = vmatprep.subr.mxu0 0.0
        %1431 = vmatpush1.msra.mxu0 0.0
        %1432 = vmatprep.subr.mxu0 0.0
        %1433 = vmatpush1.msra.mxu0 0.0
        %1434 = vmatprep.subr.mxu0 0.0
        %1435 = vmatpush1.msra.mxu0 0.0
        %1436 = vmatprep.subr.mxu0 0.0
        %1437 = vmatpush1.msra.mxu0 0.0
        %1438 = vmatprep.subr.mxu0 0.0
        %1439 = vmatpush1.msra.mxu0 0.0
        %1440 = vmatprep.subr.mxu0 0.0
        %1441 = vmatpush1.msra.mxu0 0.0
        %1442 = vmatprep.subr.mxu0 0.0
        %1443 = vmatpush1.msra.mxu0 0.0
        %1444 = vmatprep.subr.mxu0 0.0
        %1445 = vmatpush1.msra.mxu0 0.0
        %1446 = vmatprep.subr.mxu0 0.0
        %1447 = vmatpush1.msra.mxu0 0.0
        %1448 = vmatprep.subr.mxu0 0.0
        %1449 = vmatpush1.msra.mxu0 0.0
        %1450 = vmatprep.subr.mxu0 0.0
        %1451 = vmatpush1.msra.mxu0 0.0
        %1452 = vmatprep.subr.mxu0 0.0
        %1453 = vmatpush1.msra.mxu0 0.0
        %1454 = vmatprep.subr.mxu0 0.0
        %1455 = vmatpush1.msra.mxu0 0.0
        %1456 = vmatprep.subr.mxu0 0.0
        %1457 = vmatpush1.msra.mxu0 0.0
        %1458 = vmatprep.subr.mxu0 0.0
        %1459 = vmatpush1.msra.mxu0 0.0
        %1460 = vmatprep.subr.mxu0 0.0
        %1461 = vmatpush1.msra.mxu0 0.0
        %1462 = vmatprep.subr.mxu0 0.0
        %1463 = vmatpush1.msra.mxu0 0.0
        %1464 = vmatprep.subr.mxu0 0.0
        %1465 = vmatpush1.msra.mxu0 0.0
        %1466 = vmatprep.subr.mxu0 0.0
        %1467 = vmatpush1.msra.mxu0 0.0
        %1468 = vmatprep.mubr.f32.mxu0 0.0
        %1469 = vmatmul.mubr.f32.gmra.mrb[0].mxu0 %v1399
        %v1470 = vpop.f32.mrb[0].mxu0
        %v1471 = vadd.f32 0.0, %v1470
        %v1472 = vpop.f32.mrb[0].mxu0
        %1473 = vmatprep.mubr.f32.mxu0 0.0
        %1474 = vmatmul.mubr.f32.gmra.mrb[0].mxu0 %v1402
        %v1475 = vpop.f32.mrb[0].mxu0
        %v1476 = vadd.f32 0.0, %v1475
        %v1477 = vpop.f32.mrb[0].mxu0
        %1478 = vdwg.mxu0
        %v1480 = vsel %vm304, %v1390, 0
        %v1483 = vsel %vm304, %v1391, 0
        %1485 = vmatprep.subr.mxu0 0.0
        %1486 = vmatpush1.msra.mxu0 %v1393
        %1487 = vmatprep.subr.mxu0 0.0
        %1488 = vmatpush1.msra.mxu0 0.0
        %1489 = vmatprep.subr.mxu0 0.0
        %1490 = vmatpush1.msra.mxu0 0.0
        %1491 = vmatprep.subr.mxu0 0.0
        %1492 = vmatpush1.msra.mxu0 0.0
        %1493 = vmatprep.subr.mxu0 0.0
        %1494 = vmatpush1.msra.mxu0 0.0
        %1495 = vmatprep.subr.mxu0 0.0
        %1496 = vmatpush1.msra.mxu0 0.0
        %1497 = vmatprep.subr.mxu0 0.0
        %1498 = vmatpush1.msra.mxu0 0.0
        %1499 = vmatprep.subr.mxu0 0.0
        %1500 = vmatpush1.msra.mxu0 0.0
        %1501 = vmatprep.subr.mxu0 0.0
        %1502 = vmatpush1.msra.mxu0 0.0
        %1503 = vmatprep.subr.mxu0 0.0
        %1504 = vmatpush1.msra.mxu0 0.0
        %1505 = vmatprep.subr.mxu0 0.0
        %1506 = vmatpush1.msra.mxu0 0.0
        %1507 = vmatprep.subr.mxu0 0.0
        %1508 = vmatpush1.msra.mxu0 0.0
        %1509 = vmatprep.subr.mxu0 0.0
        %1510 = vmatpush1.msra.mxu0 0.0
        %1511 = vmatprep.subr.mxu0 0.0
        %1512 = vmatpush1.msra.mxu0 0.0
        %1513 = vmatprep.subr.mxu0 0.0
        %1514 = vmatpush1.msra.mxu0 0.0
        %1515 = vmatprep.subr.mxu0 0.0
        %1516 = vmatpush1.msra.mxu0 0.0
        %1517 = vmatprep.subr.mxu0 0.0
        %1518 = vmatpush1.msra.mxu0 0.0
        %1519 = vmatprep.subr.mxu0 0.0
        %1520 = vmatpush1.msra.mxu0 0.0
        %1521 = vmatprep.subr.mxu0 0.0
        %1522 = vmatpush1.msra.mxu0 0.0
        %1523 = vmatprep.subr.mxu0 0.0
        %1524 = vmatpush1.msra.mxu0 0.0
        %1525 = vmatprep.subr.mxu0 0.0
        %1526 = vmatpush1.msra.mxu0 0.0
        %1527 = vmatprep.subr.mxu0 0.0
        %1528 = vmatpush1.msra.mxu0 0.0
        %1529 = vmatprep.subr.mxu0 0.0
        %1530 = vmatpush1.msra.mxu0 0.0
        %1531 = vmatprep.subr.mxu0 0.0
        %1532 = vmatpush1.msra.mxu0 0.0
        %1533 = vmatprep.subr.mxu0 0.0
        %1534 = vmatpush1.msra.mxu0 0.0
        %1535 = vmatprep.subr.mxu0 0.0
        %1536 = vmatpush1.msra.mxu0 0.0
        %1537 = vmatprep.subr.mxu0 0.0
        %1538 = vmatpush1.msra.mxu0 0.0
        %1539 = vmatprep.subr.mxu0 0.0
        %1540 = vmatpush1.msra.mxu0 0.0
        %1541 = vmatprep.subr.mxu0 0.0
        %1542 = vmatpush1.msra.mxu0 0.0
        %1543 = vmatprep.subr.mxu0 0.0
        %1544 = vmatpush1.msra.mxu0 0.0
        %1545 = vmatprep.subr.mxu0 0.0
        %1546 = vmatpush1.msra.mxu0 0.0
        %1547 = vmatprep.subr.mxu0 0.0
        %1548 = vmatpush1.msra.mxu0 0.0
        %1549 = vmatprep.mubr.f32.mxu0 0.0
        %1550 = vmatmul.mubr.f32.gmra.mrb[0].mxu0 %v1480
        %v1551 = vpop.f32.mrb[0].mxu0
        %v1552 = vadd.f32 %v1471, %v1551
        %v1553 = vpop.f32.mrb[0].mxu0
        %1554 = vmatprep.mubr.f32.mxu0 0.0
        %1555 = vmatmul.mubr.f32.gmra.mrb[0].mxu0 %v1483
        %v1556 = vpop.f32.mrb[0].mxu0
        %v1557 = vadd.f32 %v1476, %v1556
        %v1558 = vpop.f32.mrb[0].mxu0
        %1559 = vdwg.mxu0
        %v1560 = vld [vmem:[#allocation2 + $0x2] sm:$0xff]
        %v1561 = vld [vmem:[#allocation2 + $0xa] sm:$0x3]
        %s1562 = scalar_lea.vmem %s2, 88
        %v1563 = vld [vmem:[%s1562] sm:$0xff]
        %v1565 = vsel %vm304, %v1560, 0
        %v1568 = vsel %vm304, %v1561, 0
        %1570 = vmatprep.subr.mxu0 0.0
        %1571 = vmatpush1.msra.mxu0 %v1563
        %1572 = vmatprep.subr.mxu0 0.0
        %1573 = vmatpush1.msra.mxu0 0.0
        %1574 = vmatprep.subr.mxu0 0.0
        %1575 = vmatpush1.msra.mxu0 0.0
        %1576 = vmatprep.subr.mxu0 0.0
        %1577 = vmatpush1.msra.mxu0 0.0
        %1578 = vmatprep.subr.mxu0 0.0
        %1579 = vmatpush1.msra.mxu0 0.0
        %1580 = vmatprep.subr.mxu0 0.0
        %1581 = vmatpush1.msra.mxu0 0.0
        %1582 = vmatprep.subr.mxu0 0.0
        %1583 = vmatpush1.msra.mxu0 0.0
        %1584 = vmatprep.subr.mxu0 0.0
        %1585 = vmatpush1.msra.mxu0 0.0
        %1586 = vmatprep.subr.mxu0 0.0
        %1587 = vmatpush1.msra.mxu0 0.0
        %1588 = vmatprep.subr.mxu0 0.0
        %1589 = vmatpush1.msra.mxu0 0.0
        %1590 = vmatprep.subr.mxu0 0.0
        %1591 = vmatpush1.msra.mxu0 0.0
        %1592 = vmatprep.subr.mxu0 0.0
        %1593 = vmatpush1.msra.mxu0 0.0
        %1594 = vmatprep.subr.mxu0 0.0
        %1595 = vmatpush1.msra.mxu0 0.0
        %1596 = vmatprep.subr.mxu0 0.0
        %1597 = vmatpush1.msra.mxu0 0.0
        %1598 = vmatprep.subr.mxu0 0.0
        %1599 = vmatpush1.msra.mxu0 0.0
        %1600 = vmatprep.subr.mxu0 0.0
        %1601 = vmatpush1.msra.mxu0 0.0
        %1602 = vmatprep.subr.mxu0 0.0
        %1603 = vmatpush1.msra.mxu0 0.0
        %1604 = vmatprep.subr.mxu0 0.0
        %1605 = vmatpush1.msra.mxu0 0.0
        %1606 = vmatprep.subr.mxu0 0.0
        %1607 = vmatpush1.msra.mxu0 0.0
        %1608 = vmatprep.subr.mxu0 0.0
        %1609 = vmatpush1.msra.mxu0 0.0
        %1610 = vmatprep.subr.mxu0 0.0
        %1611 = vmatpush1.msra.mxu0 0.0
        %1612 = vmatprep.subr.mxu0 0.0
        %1613 = vmatpush1.msra.mxu0 0.0
        %1614 = vmatprep.subr.mxu0 0.0
        %1615 = vmatpush1.msra.mxu0 0.0
        %1616 = vmatprep.subr.mxu0 0.0
        %1617 = vmatpush1.msra.mxu0 0.0
        %1618 = vmatprep.subr.mxu0 0.0
        %1619 = vmatpush1.msra.mxu0 0.0
        %1620 = vmatprep.subr.mxu0 0.0
        %1621 = vmatpush1.msra.mxu0 0.0
        %1622 = vmatprep.subr.mxu0 0.0
        %1623 = vmatpush1.msra.mxu0 0.0
        %1624 = vmatprep.subr.mxu0 0.0
        %1625 = vmatpush1.msra.mxu0 0.0
        %1626 = vmatprep.subr.mxu0 0.0
        %1627 = vmatpush1.msra.mxu0 0.0
        %1628 = vmatprep.subr.mxu0 0.0
        %1629 = vmatpush1.msra.mxu0 0.0
        %1630 = vmatprep.subr.mxu0 0.0
        %1631 = vmatpush1.msra.mxu0 0.0
        %1632 = vmatprep.subr.mxu0 0.0
        %1633 = vmatpush1.msra.mxu0 0.0
        %1634 = vmatprep.mubr.f32.mxu0 0.0
        %1635 = vmatmul.mubr.f32.gmra.mrb[0].mxu0 %v1565
        %v1636 = vpop.f32.mrb[0].mxu0
        %v1637 = vadd.f32 0.0, %v1636
        %v1638 = vpop.f32.mrb[0].mxu0
        %1639 = vmatprep.mubr.f32.mxu0 0.0
        %1640 = vmatmul.mubr.f32.gmra.mrb[0].mxu0 %v1568
        %v1641 = vpop.f32.mrb[0].mxu0
        %v1642 = vadd.f32 0.0, %v1641
        %v1643 = vpop.f32.mrb[0].mxu0
        %1644 = vdwg.mxu0
        %v1645 = vadd.f32 %v1552, %v1637
        %v1646 = vadd.f32 %v1557, %v1642
        %s1647 = scalar_lea.vmem %s3, 3
        %v1648 = vld [vmem:[%s1647] sm:$0x1]
        %v1650 = vlaneseq
        %v1651 = vshrl.u32 %v1650, 7
        %v1652 = vsub.s32 0, %v1651
        %v1653 = vrot.slane %v1648, %v1652
        %v1655 = vadd.f32 %v1645, %v1653
        %v1656 = vadd.f32 %v1646, %v1653
        %vm1657 = vcmp.ge.f32.partialorder %v1655, 0.0
        %vm1658 = vcmp.ge.f32.partialorder %v1656, 0.0
        %v1659 = vmul.f32 %v1655, 0.01
        %v1660 = vmul.f32 %v1656, 0.01
        %v1661 = vsel %vm1657, %v1655, %v1659
        %v1662 = vsel %vm1658, %v1656, %v1660
        %s1663 = scalar_lea.vmem %s4, 288
        %v1664 = vld [vmem:[%s1663] sm:$0xff]
        %v1665 = vld [vmem:[%s1663 + $0x8] sm:$0xff]
        %v1666 = vld [vmem:[%s1663 + $0x10] sm:$0xff]
        %v1667 = vld [vmem:[%s1663 + $0x18] sm:$0xff]
        %s1668 = scalar_lea.vmem %s4, 320
        %v1669 = vld [vmem:[%s1668] sm:$0xff]
        %v1670 = vld [vmem:[%s1668 + $0x8] sm:$0xff]
        %v1671 = vld [vmem:[%s1668 + $0x10] sm:$0xff]
        %v1672 = vld [vmem:[%s1668 + $0x18] sm:$0xff]
        %v1675 = vrot.slane %v1661, 1
        %v1676 = vrot.slane %v1662, 1
        %v1677 = vsel %vm599, %v1675, %v1676
        %v1678 = vsel %vm603, %v1677, 0
        %1680 = vmatprep.subr.mxu0 0.0
        %1681 = vmatpush1.msra.mxu0 %v1669
        %1682 = vmatprep.subr.mxu0 0.0
        %1683 = vmatpush1.msra.mxu0 %v1670
        %1684 = vmatprep.subr.mxu0 0.0
        %1685 = vmatpush1.msra.mxu0 %v1671
        %1686 = vmatprep.subr.mxu0 0.0
        %1687 = vmatpush1.msra.mxu0 %v1672
        %1688 = vmatprep.subr.mxu0 0.0
        %1689 = vmatpush1.msra.mxu0 0.0
        %1690 = vmatprep.subr.mxu0 0.0
        %1691 = vmatpush1.msra.mxu0 0.0
        %1692 = vmatprep.subr.mxu0 0.0
        %1693 = vmatpush1.msra.mxu0 0.0
        %1694 = vmatprep.subr.mxu0 0.0
        %1695 = vmatpush1.msra.mxu0 0.0
        %1696 = vmatprep.subr.mxu0 0.0
        %1697 = vmatpush1.msra.mxu0 0.0
        %1698 = vmatprep.subr.mxu0 0.0
        %1699 = vmatpush1.msra.mxu0 0.0
        %1700 = vmatprep.subr.mxu0 0.0
        %1701 = vmatpush1.msra.mxu0 0.0
        %1702 = vmatprep.subr.mxu0 0.0
        %1703 = vmatpush1.msra.mxu0 0.0
        %1704 = vmatprep.subr.mxu0 0.0
        %1705 = vmatpush1.msra.mxu0 0.0
        %1706 = vmatprep.subr.mxu0 0.0
        %1707 = vmatpush1.msra.mxu0 0.0
        %1708 = vmatprep.subr.mxu0 0.0
        %1709 = vmatpush1.msra.mxu0 0.0
        %1710 = vmatprep.subr.mxu0 0.0
        %1711 = vmatpush1.msra.mxu0 0.0
        %1712 = vmatprep.subr.mxu0 0.0
        %1713 = vmatpush1.msra.mxu0 0.0
        %1714 = vmatprep.subr.mxu0 0.0
        %1715 = vmatpush1.msra.mxu0 0.0
        %1716 = vmatprep.subr.mxu0 0.0
        %1717 = vmatpush1.msra.mxu0 0.0
        %1718 = vmatprep.subr.mxu0 0.0
        %1719 = vmatpush1.msra.mxu0 0.0
        %1720 = vmatprep.subr.mxu0 0.0
        %1721 = vmatpush1.msra.mxu0 0.0
        %1722 = vmatprep.subr.mxu0 0.0
        %1723 = vmatpush1.msra.mxu0 0.0
        %1724 = vmatprep.subr.mxu0 0.0
        %1725 = vmatpush1.msra.mxu0 0.0
        %1726 = vmatprep.subr.mxu0 0.0
        %1727 = vmatpush1.msra.mxu0 0.0
        %1728 = vmatprep.subr.mxu0 0.0
        %1729 = vmatpush1.msra.mxu0 0.0
        %1730 = vmatprep.subr.mxu0 0.0
        %1731 = vmatpush1.msra.mxu0 0.0
        %1732 = vmatprep.subr.mxu0 0.0
        %1733 = vmatpush1.msra.mxu0 0.0
        %1734 = vmatprep.subr.mxu0 0.0
        %1735 = vmatpush1.msra.mxu0 0.0
        %1736 = vmatprep.subr.mxu0 0.0
        %1737 = vmatpush1.msra.mxu0 0.0
        %1738 = vmatprep.subr.mxu0 0.0
        %1739 = vmatpush1.msra.mxu0 0.0
        %1740 = vmatprep.subr.mxu0 0.0
        %1741 = vmatpush1.msra.mxu0 0.0
        %1742 = vmatprep.subr.mxu0 0.0
        %1743 = vmatpush1.msra.mxu0 0.0
        %1744 = vmatprep.mubr.f32.mxu0 0.0
        %1745 = vmatmul.mubr.f32.gmra.mrb[0].mxu0 %v1678
        %v1746 = vpop.f32.mrb[0].mxu0
        %v1747 = vadd.f32 0.0, %v1746
        %v1748 = vpop.f32.mrb[0].mxu0
        %1749 = vdwg.mxu0
        %v1750 = vsel %vm603, %v1661, 0
        %1752 = vmatprep.subr.mxu0 0.0
        %1753 = vmatpush1.msra.mxu0 %v1664
        %1754 = vmatprep.subr.mxu0 0.0
        %1755 = vmatpush1.msra.mxu0 %v1665
        %1756 = vmatprep.subr.mxu0 0.0
        %1757 = vmatpush1.msra.mxu0 %v1666
        %1758 = vmatprep.subr.mxu0 0.0
        %1759 = vmatpush1.msra.mxu0 %v1667
        %1760 = vmatprep.subr.mxu0 0.0
        %1761 = vmatpush1.msra.mxu0 0.0
        %1762 = vmatprep.subr.mxu0 0.0
        %1763 = vmatpush1.msra.mxu0 0.0
        %1764 = vmatprep.subr.mxu0 0.0
        %1765 = vmatpush1.msra.mxu0 0.0
        %1766 = vmatprep.subr.mxu0 0.0
        %1767 = vmatpush1.msra.mxu0 0.0
        %1768 = vmatprep.subr.mxu0 0.0
        %1769 = vmatpush1.msra.mxu0 0.0
        %1770 = vmatprep.subr.mxu0 0.0
        %1771 = vmatpush1.msra.mxu0 0.0
        %1772 = vmatprep.subr.mxu0 0.0
        %1773 = vmatpush1.msra.mxu0 0.0
        %1774 = vmatprep.subr.mxu0 0.0
        %1775 = vmatpush1.msra.mxu0 0.0
        %1776 = vmatprep.subr.mxu0 0.0
        %1777 = vmatpush1.msra.mxu0 0.0
        %1778 = vmatprep.subr.mxu0 0.0
        %1779 = vmatpush1.msra.mxu0 0.0
        %1780 = vmatprep.subr.mxu0 0.0
        %1781 = vmatpush1.msra.mxu0 0.0
        %1782 = vmatprep.subr.mxu0 0.0
        %1783 = vmatpush1.msra.mxu0 0.0
        %1784 = vmatprep.subr.mxu0 0.0
        %1785 = vmatpush1.msra.mxu0 0.0
        %1786 = vmatprep.subr.mxu0 0.0
        %1787 = vmatpush1.msra.mxu0 0.0
        %1788 = vmatprep.subr.mxu0 0.0
        %1789 = vmatpush1.msra.mxu0 0.0
        %1790 = vmatprep.subr.mxu0 0.0
        %1791 = vmatpush1.msra.mxu0 0.0
        %1792 = vmatprep.subr.mxu0 0.0
        %1793 = vmatpush1.msra.mxu0 0.0
        %1794 = vmatprep.subr.mxu0 0.0
        %1795 = vmatpush1.msra.mxu0 0.0
        %1796 = vmatprep.subr.mxu0 0.0
        %1797 = vmatpush1.msra.mxu0 0.0
        %1798 = vmatprep.subr.mxu0 0.0
        %1799 = vmatpush1.msra.mxu0 0.0
        %1800 = vmatprep.subr.mxu0 0.0
        %1801 = vmatpush1.msra.mxu0 0.0
        %1802 = vmatprep.subr.mxu0 0.0
        %1803 = vmatpush1.msra.mxu0 0.0
        %1804 = vmatprep.subr.mxu0 0.0
        %1805 = vmatpush1.msra.mxu0 0.0
        %1806 = vmatprep.subr.mxu0 0.0
        %1807 = vmatpush1.msra.mxu0 0.0
        %1808 = vmatprep.subr.mxu0 0.0
        %1809 = vmatpush1.msra.mxu0 0.0
        %1810 = vmatprep.subr.mxu0 0.0
        %1811 = vmatpush1.msra.mxu0 0.0
        %1812 = vmatprep.subr.mxu0 0.0
        %1813 = vmatpush1.msra.mxu0 0.0
        %1814 = vmatprep.subr.mxu0 0.0
        %1815 = vmatpush1.msra.mxu0 0.0
        %1816 = vmatprep.mubr.f32.mxu0 0.0
        %1817 = vmatmul.mubr.f32.gmra.mrb[0].mxu0 %v1750
        %v1818 = vpop.f32.mrb[0].mxu0
        %v1819 = vadd.f32 %v1747, %v1818
        %v1820 = vpop.f32.mrb[0].mxu0
        %1821 = vdwg.mxu0
        %s1822 = scalar_lea.vmem %s4, 352
        %v1823 = vld [vmem:[%s1822] sm:$0xff]
        %v1824 = vld [vmem:[%s1822 + $0x8] sm:$0xff]
        %v1825 = vld [vmem:[%s1822 + $0x10] sm:$0xff]
        %v1826 = vld [vmem:[%s1822 + $0x18] sm:$0xff]
        %v1827 = vrot.slane %v1661, 2
        %v1828 = vrot.slane %v1662, 2
        %v1829 = vsel %vm753, %v1827, %v1828
        %v1830 = vsel %vm603, %v1829, 0
        %1832 = vmatprep.subr.mxu0 0.0
        %1833 = vmatpush1.msra.mxu0 %v1823
        %1834 = vmatprep.subr.mxu0 0.0
        %1835 = vmatpush1.msra.mxu0 %v1824
        %1836 = vmatprep.subr.mxu0 0.0
        %1837 = vmatpush1.msra.mxu0 %v1825
        %1838 = vmatprep.subr.mxu0 0.0
        %1839 = vmatpush1.msra.mxu0 %v1826
        %1840 = vmatprep.subr.mxu0 0.0
        %1841 = vmatpush1.msra.mxu0 0.0
        %1842 = vmatprep.subr.mxu0 0.0
        %1843 = vmatpush1.msra.mxu0 0.0
        %1844 = vmatprep.subr.mxu0 0.0
        %1845 = vmatpush1.msra.mxu0 0.0
        %1846 = vmatprep.subr.mxu0 0.0
        %1847 = vmatpush1.msra.mxu0 0.0
        %1848 = vmatprep.subr.mxu0 0.0
        %1849 = vmatpush1.msra.mxu0 0.0
        %1850 = vmatprep.subr.mxu0 0.0
        %1851 = vmatpush1.msra.mxu0 0.0
        %1852 = vmatprep.subr.mxu0 0.0
        %1853 = vmatpush1.msra.mxu0 0.0
        %1854 = vmatprep.subr.mxu0 0.0
        %1855 = vmatpush1.msra.mxu0 0.0
        %1856 = vmatprep.subr.mxu0 0.0
        %1857 = vmatpush1.msra.mxu0 0.0
        %1858 = vmatprep.subr.mxu0 0.0
        %1859 = vmatpush1.msra.mxu0 0.0
        %1860 = vmatprep.subr.mxu0 0.0
        %1861 = vmatpush1.msra.mxu0 0.0
        %1862 = vmatprep.subr.mxu0 0.0
        %1863 = vmatpush1.msra.mxu0 0.0
        %1864 = vmatprep.subr.mxu0 0.0
        %1865 = vmatpush1.msra.mxu0 0.0
        %1866 = vmatprep.subr.mxu0 0.0
        %1867 = vmatpush1.msra.mxu0 0.0
        %1868 = vmatprep.subr.mxu0 0.0
        %1869 = vmatpush1.msra.mxu0 0.0
        %1870 = vmatprep.subr.mxu0 0.0
        %1871 = vmatpush1.msra.mxu0 0.0
        %1872 = vmatprep.subr.mxu0 0.0
        %1873 = vmatpush1.msra.mxu0 0.0
        %1874 = vmatprep.subr.mxu0 0.0
        %1875 = vmatpush1.msra.mxu0 0.0
        %1876 = vmatprep.subr.mxu0 0.0
        %1877 = vmatpush1.msra.mxu0 0.0
        %1878 = vmatprep.subr.mxu0 0.0
        %1879 = vmatpush1.msra.mxu0 0.0
        %1880 = vmatprep.subr.mxu0 0.0
        %1881 = vmatpush1.msra.mxu0 0.0
        %1882 = vmatprep.subr.mxu0 0.0
        %1883 = vmatpush1.msra.mxu0 0.0
        %1884 = vmatprep.subr.mxu0 0.0
        %1885 = vmatpush1.msra.mxu0 0.0
        %1886 = vmatprep.subr.mxu0 0.0
        %1887 = vmatpush1.msra.mxu0 0.0
        %1888 = vmatprep.subr.mxu0 0.0
        %1889 = vmatpush1.msra.mxu0 0.0
        %1890 = vmatprep.subr.mxu0 0.0
        %1891 = vmatpush1.msra.mxu0 0.0
        %1892 = vmatprep.subr.mxu0 0.0
        %1893 = vmatpush1.msra.mxu0 0.0
        %1894 = vmatprep.subr.mxu0 0.0
        %1895 = vmatpush1.msra.mxu0 0.0
        %1896 = vmatprep.mubr.f32.mxu0 0.0
        %1897 = vmatmul.mubr.f32.gmra.mrb[0].mxu0 %v1830
        %v1898 = vpop.f32.mrb[0].mxu0
        %v1899 = vadd.f32 0.0, %v1898
        %v1900 = vpop.f32.mrb[0].mxu0
        %1901 = vdwg.mxu0
        %v1902 = vadd.f32 %v1819, %v1899
        %s1903 = scalar_lea.vmem %s5, 3
        %v1904 = vld [vmem:[%s1903] sm:$0x1]
        %v1906 = vlaneseq
        %v1907 = vshrl.u32 %v1906, 7
        %v1908 = vsub.s32 0, %v1907
        %v1909 = vrot.slane %v1904, %v1908
        %v1911 = vadd.f32 %v1902, %v1909
        %v1912 = vtanh.pop %v1911
        %v1913 = vadd.f32 %v1378, %v1912
        %1914 = vst.msk [vmem:[#allocation2 + $0x2] sm:$0xff] %vm304, %v1378
        %v1915 = vlaneseq
        %v1916 = vshrl.u32 %v1915, 7
        %v1917 = vsub.s32 0, %v1916
        %v1918 = vrot.slane %v1378, %v1917
        %1919 = vst.msk [vmem:[#allocation2] sm:$0x3] %vm310, %v1918
        %v1920 = vlaneseq
        %v1921 = vshrl.u32 %v1920, 7
        %v1922 = vsub.s32 7, %v1921
        %v1923 = vrot.slane %v1378, %v1922
        %1924 = vst.msk [vmem:[#allocation2 + $0xa] sm:$0x3] %vm310, %v1923
        %v1925 = vld [vmem:[#allocation2] sm:$0xff]
        %v1926 = vld [vmem:[#allocation2 + $0x8] sm:$0x3]
        %s1927 = scalar_lea.vmem %s2, 48
        %v1928 = vld [vmem:[%s1927] sm:$0xff]
        %v1929 = vld [vmem:[#allocation2 + $0x1] sm:$0xff]
        %v1930 = vld [vmem:[#allocation2 + $0x9] sm:$0x3]
        %s1931 = scalar_lea.vmem %s2, 56
        %v1932 = vld [vmem:[%s1931] sm:$0xff]
        %v1934 = vsel %vm304, %v1929, 0
        %v1937 = vsel %vm304, %v1930, 0
        %1939 = vmatprep.subr.mxu0 0.0
        %1940 = vmatpush1.msra.mxu0 %v1932
        %1941 = vmatprep.subr.mxu0 0.0
        %1942 = vmatpush1.msra.mxu0 0.0
        %1943 = vmatprep.subr.mxu0 0.0
        %1944 = vmatpush1.msra.mxu0 0.0
        %1945 = vmatprep.subr.mxu0 0.0
        %1946 = vmatpush1.msra.mxu0 0.0
        %1947 = vmatprep.subr.mxu0 0.0
        %1948 = vmatpush1.msra.mxu0 0.0
        %1949 = vmatprep.subr.mxu0 0.0
        %1950 = vmatpush1.msra.mxu0 0.0
        %1951 = vmatprep.subr.mxu0 0.0
        %1952 = vmatpush1.msra.mxu0 0.0
        %1953 = vmatprep.subr.mxu0 0.0
        %1954 = vmatpush1.msra.mxu0 0.0
        %1955 = vmatprep.subr.mxu0 0.0
        %1956 = vmatpush1.msra.mxu0 0.0
        %1957 = vmatprep.subr.mxu0 0.0
        %1958 = vmatpush1.msra.mxu0 0.0
        %1959 = vmatprep.subr.mxu0 0.0
        %1960 = vmatpush1.msra.mxu0 0.0
        %1961 = vmatprep.subr.mxu0 0.0
        %1962 = vmatpush1.msra.mxu0 0.0
        %1963 = vmatprep.subr.mxu0 0.0
        %1964 = vmatpush1.msra.mxu0 0.0
        %1965 = vmatprep.subr.mxu0 0.0
        %1966 = vmatpush1.msra.mxu0 0.0
        %1967 = vmatprep.subr.mxu0 0.0
        %1968 = vmatpush1.msra.mxu0 0.0
        %1969 = vmatprep.subr.mxu0 0.0
        %1970 = vmatpush1.msra.mxu0 0.0
        %1971 = vmatprep.subr.mxu0 0.0
        %1972 = vmatpush1.msra.mxu0 0.0
        %1973 = vmatprep.subr.mxu0 0.0
        %1974 = vmatpush1.msra.mxu0 0.0
        %1975 = vmatprep.subr.mxu0 0.0
        %1976 = vmatpush1.msra.mxu0 0.0
        %1977 = vmatprep.subr.mxu0 0.0
        %1978 = vmatpush1.msra.mxu0 0.0
        %1979 = vmatprep.subr.mxu0 0.0
        %1980 = vmatpush1.msra.mxu0 0.0
        %1981 = vmatprep.subr.mxu0 0.0
        %1982 = vmatpush1.msra.mxu0 0.0
        %1983 = vmatprep.subr.mxu0 0.0
        %1984 = vmatpush1.msra.mxu0 0.0
        %1985 = vmatprep.subr.mxu0 0.0
        %1986 = vmatpush1.msra.mxu0 0.0
        %1987 = vmatprep.subr.mxu0 0.0
        %1988 = vmatpush1.msra.mxu0 0.0
        %1989 = vmatprep.subr.mxu0 0.0
        %1990 = vmatpush1.msra.mxu0 0.0
        %1991 = vmatprep.subr.mxu0 0.0
        %1992 = vmatpush1.msra.mxu0 0.0
        %1993 = vmatprep.subr.mxu0 0.0
        %1994 = vmatpush1.msra.mxu0 0.0
        %1995 = vmatprep.subr.mxu0 0.0
        %1996 = vmatpush1.msra.mxu0 0.0
        %1997 = vmatprep.subr.mxu0 0.0
        %1998 = vmatpush1.msra.mxu0 0.0
        %1999 = vmatprep.subr.mxu0 0.0
        %2000 = vmatpush1.msra.mxu0 0.0
        %2001 = vmatprep.subr.mxu0 0.0
        %2002 = vmatpush1.msra.mxu0 0.0
        %2003 = vmatprep.mubr.f32.mxu0 0.0
        %2004 = vmatmul.mubr.f32.gmra.mrb[0].mxu0 %v1934
        %v2005 = vpop.f32.mrb[0].mxu0
        %v2006 = vadd.f32 0.0, %v2005
        %v2007 = vpop.f32.mrb[0].mxu0
        %2008 = vmatprep.mubr.f32.mxu0 0.0
        %2009 = vmatmul.mubr.f32.gmra.mrb[0].mxu0 %v1937
        %v2010 = vpop.f32.mrb[0].mxu0
        %v2011 = vadd.f32 0.0, %v2010
        %v2012 = vpop.f32.mrb[0].mxu0
        %2013 = vdwg.mxu0
        %v2015 = vsel %vm304, %v1925, 0
        %v2018 = vsel %vm304, %v1926, 0
        %2020 = vmatprep.subr.mxu0 0.0
        %2021 = vmatpush1.msra.mxu0 %v1928
        %2022 = vmatprep.subr.mxu0 0.0
        %2023 = vmatpush1.msra.mxu0 0.0
        %2024 = vmatprep.subr.mxu0 0.0
        %2025 = vmatpush1.msra.mxu0 0.0
        %2026 = vmatprep.subr.mxu0 0.0
        %2027 = vmatpush1.msra.mxu0 0.0
        %2028 = vmatprep.subr.mxu0 0.0
        %2029 = vmatpush1.msra.mxu0 0.0
        %2030 = vmatprep.subr.mxu0 0.0
        %2031 = vmatpush1.msra.mxu0 0.0
        %2032 = vmatprep.subr.mxu0 0.0
        %2033 = vmatpush1.msra.mxu0 0.0
        %2034 = vmatprep.subr.mxu0 0.0
        %2035 = vmatpush1.msra.mxu0 0.0
        %2036 = vmatprep.subr.mxu0 0.0
        %2037 = vmatpush1.msra.mxu0 0.0
        %2038 = vmatprep.subr.mxu0 0.0
        %2039 = vmatpush1.msra.mxu0 0.0
        %2040 = vmatprep.subr.mxu0 0.0
        %2041 = vmatpush1.msra.mxu0 0.0
        %2042 = vmatprep.subr.mxu0 0.0
        %2043 = vmatpush1.msra.mxu0 0.0
        %2044 = vmatprep.subr.mxu0 0.0
        %2045 = vmatpush1.msra.mxu0 0.0
        %2046 = vmatprep.subr.mxu0 0.0
        %2047 = vmatpush1.msra.mxu0 0.0
        %2048 = vmatprep.subr.mxu0 0.0
        %2049 = vmatpush1.msra.mxu0 0.0
        %2050 = vmatprep.subr.mxu0 0.0
        %2051 = vmatpush1.msra.mxu0 0.0
        %2052 = vmatprep.subr.mxu0 0.0
        %2053 = vmatpush1.msra.mxu0 0.0
        %2054 = vmatprep.subr.mxu0 0.0
        %2055 = vmatpush1.msra.mxu0 0.0
        %2056 = vmatprep.subr.mxu0 0.0
        %2057 = vmatpush1.msra.mxu0 0.0
        %2058 = vmatprep.subr.mxu0 0.0
        %2059 = vmatpush1.msra.mxu0 0.0
        %2060 = vmatprep.subr.mxu0 0.0
        %2061 = vmatpush1.msra.mxu0 0.0
        %2062 = vmatprep.subr.mxu0 0.0
        %2063 = vmatpush1.msra.mxu0 0.0
        %2064 = vmatprep.subr.mxu0 0.0
        %2065 = vmatpush1.msra.mxu0 0.0
        %2066 = vmatprep.subr.mxu0 0.0
        %2067 = vmatpush1.msra.mxu0 0.0
        %2068 = vmatprep.subr.mxu0 0.0
        %2069 = vmatpush1.msra.mxu0 0.0
        %2070 = vmatprep.subr.mxu0 0.0
        %2071 = vmatpush1.msra.mxu0 0.0
        %2072 = vmatprep.subr.mxu0 0.0
        %2073 = vmatpush1.msra.mxu0 0.0
        %2074 = vmatprep.subr.mxu0 0.0
        %2075 = vmatpush1.msra.mxu0 0.0
        %2076 = vmatprep.subr.mxu0 0.0
        %2077 = vmatpush1.msra.mxu0 0.0
        %2078 = vmatprep.subr.mxu0 0.0
        %2079 = vmatpush1.msra.mxu0 0.0
        %2080 = vmatprep.subr.mxu0 0.0
        %2081 = vmatpush1.msra.mxu0 0.0
        %2082 = vmatprep.subr.mxu0 0.0
        %2083 = vmatpush1.msra.mxu0 0.0
        %2084 = vmatprep.mubr.f32.mxu0 0.0
        %2085 = vmatmul.mubr.f32.gmra.mrb[0].mxu0 %v2015
        %v2086 = vpop.f32.mrb[0].mxu0
        %v2087 = vadd.f32 %v2006, %v2086
        %v2088 = vpop.f32.mrb[0].mxu0
        %2089 = vmatprep.mubr.f32.mxu0 0.0
        %2090 = vmatmul.mubr.f32.gmra.mrb[0].mxu0 %v2018
        %v2091 = vpop.f32.mrb[0].mxu0
        %v2092 = vadd.f32 %v2011, %v2091
        %v2093 = vpop.f32.mrb[0].mxu0
        %2094 = vdwg.mxu0
        %v2095 = vld [vmem:[#allocation2 + $0x2] sm:$0xff]
        %v2096 = vld [vmem:[#allocation2 + $0xa] sm:$0x3]
        %s2097 = scalar_lea.vmem %s2, 64
        %v2098 = vld [vmem:[%s2097] sm:$0xff]
        %v2100 = vsel %vm304, %v2095, 0
        %v2103 = vsel %vm304, %v2096, 0
        %2105 = vmatprep.subr.mxu0 0.0
        %2106 = vmatpush1.msra.mxu0 %v2098
        %2107 = vmatprep.subr.mxu0 0.0
        %2108 = vmatpush1.msra.mxu0 0.0
        %2109 = vmatprep.subr.mxu0 0.0
        %2110 = vmatpush1.msra.mxu0 0.0
        %2111 = vmatprep.subr.mxu0 0.0
        %2112 = vmatpush1.msra.mxu0 0.0
        %2113 = vmatprep.subr.mxu0 0.0
        %2114 = vmatpush1.msra.mxu0 0.0
        %2115 = vmatprep.subr.mxu0 0.0
        %2116 = vmatpush1.msra.mxu0 0.0
        %2117 = vmatprep.subr.mxu0 0.0
        %2118 = vmatpush1.msra.mxu0 0.0
        %2119 = vmatprep.subr.mxu0 0.0
        %2120 = vmatpush1.msra.mxu0 0.0
        %2121 = vmatprep.subr.mxu0 0.0
        %2122 = vmatpush1.msra.mxu0 0.0
        %2123 = vmatprep.subr.mxu0 0.0
        %2124 = vmatpush1.msra.mxu0 0.0
        %2125 = vmatprep.subr.mxu0 0.0
        %2126 = vmatpush1.msra.mxu0 0.0
        %2127 = vmatprep.subr.mxu0 0.0
        %2128 = vmatpush1.msra.mxu0 0.0
        %2129 = vmatprep.subr.mxu0 0.0
        %2130 = vmatpush1.msra.mxu0 0.0
        %2131 = vmatprep.subr.mxu0 0.0
        %2132 = vmatpush1.msra.mxu0 0.0
        %2133 = vmatprep.subr.mxu0 0.0
        %2134 = vmatpush1.msra.mxu0 0.0
        %2135 = vmatprep.subr.mxu0 0.0
        %2136 = vmatpush1.msra.mxu0 0.0
        %2137 = vmatprep.subr.mxu0 0.0
        %2138 = vmatpush1.msra.mxu0 0.0
        %2139 = vmatprep.subr.mxu0 0.0
        %2140 = vmatpush1.msra.mxu0 0.0
        %2141 = vmatprep.subr.mxu0 0.0
        %2142 = vmatpush1.msra.mxu0 0.0
        %2143 = vmatprep.subr.mxu0 0.0
        %2144 = vmatpush1.msra.mxu0 0.0
        %2145 = vmatprep.subr.mxu0 0.0
        %2146 = vmatpush1.msra.mxu0 0.0
        %2147 = vmatprep.subr.mxu0 0.0
        %2148 = vmatpush1.msra.mxu0 0.0
        %2149 = vmatprep.subr.mxu0 0.0
        %2150 = vmatpush1.msra.mxu0 0.0
        %2151 = vmatprep.subr.mxu0 0.0
        %2152 = vmatpush1.msra.mxu0 0.0
        %2153 = vmatprep.subr.mxu0 0.0
        %2154 = vmatpush1.msra.mxu0 0.0
        %2155 = vmatprep.subr.mxu0 0.0
        %2156 = vmatpush1.msra.mxu0 0.0
        %2157 = vmatprep.subr.mxu0 0.0
        %2158 = vmatpush1.msra.mxu0 0.0
        %2159 = vmatprep.subr.mxu0 0.0
        %2160 = vmatpush1.msra.mxu0 0.0
        %2161 = vmatprep.subr.mxu0 0.0
        %2162 = vmatpush1.msra.mxu0 0.0
        %2163 = vmatprep.subr.mxu0 0.0
        %2164 = vmatpush1.msra.mxu0 0.0
        %2165 = vmatprep.subr.mxu0 0.0
        %2166 = vmatpush1.msra.mxu0 0.0
        %2167 = vmatprep.subr.mxu0 0.0
        %2168 = vmatpush1.msra.mxu0 0.0
        %2169 = vmatprep.mubr.f32.mxu0 0.0
        %2170 = vmatmul.mubr.f32.gmra.mrb[0].mxu0 %v2100
        %v2171 = vpop.f32.mrb[0].mxu0
        %v2172 = vadd.f32 0.0, %v2171
        %v2173 = vpop.f32.mrb[0].mxu0
        %2174 = vmatprep.mubr.f32.mxu0 0.0
        %2175 = vmatmul.mubr.f32.gmra.mrb[0].mxu0 %v2103
        %v2176 = vpop.f32.mrb[0].mxu0
        %v2177 = vadd.f32 0.0, %v2176
        %v2178 = vpop.f32.mrb[0].mxu0
        %2179 = vdwg.mxu0
        %v2180 = vadd.f32 %v2087, %v2172
        %v2181 = vadd.f32 %v2092, %v2177
        %s2182 = scalar_lea.vmem %s3, 2
        %v2183 = vld [vmem:[%s2182] sm:$0x1]
        %v2185 = vlaneseq
        %v2186 = vshrl.u32 %v2185, 7
        %v2187 = vsub.s32 0, %v2186
        %v2188 = vrot.slane %v2183, %v2187
        %v2190 = vadd.f32 %v2180, %v2188
        %v2191 = vadd.f32 %v2181, %v2188
        %vm2192 = vcmp.ge.f32.partialorder %v2190, 0.0
        %vm2193 = vcmp.ge.f32.partialorder %v2191, 0.0
        %v2194 = vmul.f32 %v2190, 0.01
        %v2195 = vmul.f32 %v2191, 0.01
        %v2196 = vsel %vm2192, %v2190, %v2194
        %v2197 = vsel %vm2193, %v2191, %v2195
        %s2198 = scalar_lea.vmem %s4, 192
        %v2199 = vld [vmem:[%s2198] sm:$0xff]
        %v2200 = vld [vmem:[%s2198 + $0x8] sm:$0xff]
        %v2201 = vld [vmem:[%s2198 + $0x10] sm:$0xff]
        %v2202 = vld [vmem:[%s2198 + $0x18] sm:$0xff]
        %s2203 = scalar_lea.vmem %s4, 224
        %v2204 = vld [vmem:[%s2203] sm:$0xff]
        %v2205 = vld [vmem:[%s2203 + $0x8] sm:$0xff]
        %v2206 = vld [vmem:[%s2203 + $0x10] sm:$0xff]
        %v2207 = vld [vmem:[%s2203 + $0x18] sm:$0xff]
        %v2210 = vrot.slane %v2196, 1
        %v2211 = vrot.slane %v2197, 1
        %v2212 = vsel %vm599, %v2210, %v2211
        %v2213 = vsel %vm603, %v2212, 0
        %2215 = vmatprep.subr.mxu0 0.0
        %2216 = vmatpush1.msra.mxu0 %v2204
        %2217 = vmatprep.subr.mxu0 0.0
        %2218 = vmatpush1.msra.mxu0 %v2205
        %2219 = vmatprep.subr.mxu0 0.0
        %2220 = vmatpush1.msra.mxu0 %v2206
        %2221 = vmatprep.subr.mxu0 0.0
        %2222 = vmatpush1.msra.mxu0 %v2207
        %2223 = vmatprep.subr.mxu0 0.0
        %2224 = vmatpush1.msra.mxu0 0.0
        %2225 = vmatprep.subr.mxu0 0.0
        %2226 = vmatpush1.msra.mxu0 0.0
        %2227 = vmatprep.subr.mxu0 0.0
        %2228 = vmatpush1.msra.mxu0 0.0
        %2229 = vmatprep.subr.mxu0 0.0
        %2230 = vmatpush1.msra.mxu0 0.0
        %2231 = vmatprep.subr.mxu0 0.0
        %2232 = vmatpush1.msra.mxu0 0.0
        %2233 = vmatprep.subr.mxu0 0.0
        %2234 = vmatpush1.msra.mxu0 0.0
        %2235 = vmatprep.subr.mxu0 0.0
        %2236 = vmatpush1.msra.mxu0 0.0
        %2237 = vmatprep.subr.mxu0 0.0
        %2238 = vmatpush1.msra.mxu0 0.0
        %2239 = vmatprep.subr.mxu0 0.0
        %2240 = vmatpush1.msra.mxu0 0.0
        %2241 = vmatprep.subr.mxu0 0.0
        %2242 = vmatpush1.msra.mxu0 0.0
        %2243 = vmatprep.subr.mxu0 0.0
        %2244 = vmatpush1.msra.mxu0 0.0
        %2245 = vmatprep.subr.mxu0 0.0
        %2246 = vmatpush1.msra.mxu0 0.0
        %2247 = vmatprep.subr.mxu0 0.0
        %2248 = vmatpush1.msra.mxu0 0.0
        %2249 = vmatprep.subr.mxu0 0.0
        %2250 = vmatpush1.msra.mxu0 0.0
        %2251 = vmatprep.subr.mxu0 0.0
        %2252 = vmatpush1.msra.mxu0 0.0
        %2253 = vmatprep.subr.mxu0 0.0
        %2254 = vmatpush1.msra.mxu0 0.0
        %2255 = vmatprep.subr.mxu0 0.0
        %2256 = vmatpush1.msra.mxu0 0.0
        %2257 = vmatprep.subr.mxu0 0.0
        %2258 = vmatpush1.msra.mxu0 0.0
        %2259 = vmatprep.subr.mxu0 0.0
        %2260 = vmatpush1.msra.mxu0 0.0
        %2261 = vmatprep.subr.mxu0 0.0
        %2262 = vmatpush1.msra.mxu0 0.0
        %2263 = vmatprep.subr.mxu0 0.0
        %2264 = vmatpush1.msra.mxu0 0.0
        %2265 = vmatprep.subr.mxu0 0.0
        %2266 = vmatpush1.msra.mxu0 0.0
        %2267 = vmatprep.subr.mxu0 0.0
        %2268 = vmatpush1.msra.mxu0 0.0
        %2269 = vmatprep.subr.mxu0 0.0
        %2270 = vmatpush1.msra.mxu0 0.0
        %2271 = vmatprep.subr.mxu0 0.0
        %2272 = vmatpush1.msra.mxu0 0.0
        %2273 = vmatprep.subr.mxu0 0.0
        %2274 = vmatpush1.msra.mxu0 0.0
        %2275 = vmatprep.subr.mxu0 0.0
        %2276 = vmatpush1.msra.mxu0 0.0
        %2277 = vmatprep.subr.mxu0 0.0
        %2278 = vmatpush1.msra.mxu0 0.0
        %2279 = vmatprep.mubr.f32.mxu0 0.0
        %2280 = vmatmul.mubr.f32.gmra.mrb[0].mxu0 %v2213
        %v2281 = vpop.f32.mrb[0].mxu0
        %v2282 = vadd.f32 0.0, %v2281
        %v2283 = vpop.f32.mrb[0].mxu0
        %2284 = vdwg.mxu0
        %v2285 = vsel %vm603, %v2196, 0
        %2287 = vmatprep.subr.mxu0 0.0
        %2288 = vmatpush1.msra.mxu0 %v2199
        %2289 = vmatprep.subr.mxu0 0.0
        %2290 = vmatpush1.msra.mxu0 %v2200
        %2291 = vmatprep.subr.mxu0 0.0
        %2292 = vmatpush1.msra.mxu0 %v2201
        %2293 = vmatprep.subr.mxu0 0.0
        %2294 = vmatpush1.msra.mxu0 %v2202
        %2295 = vmatprep.subr.mxu0 0.0
        %2296 = vmatpush1.msra.mxu0 0.0
        %2297 = vmatprep.subr.mxu0 0.0
        %2298 = vmatpush1.msra.mxu0 0.0
        %2299 = vmatprep.subr.mxu0 0.0
        %2300 = vmatpush1.msra.mxu0 0.0
        %2301 = vmatprep.subr.mxu0 0.0
        %2302 = vmatpush1.msra.mxu0 0.0
        %2303 = vmatprep.subr.mxu0 0.0
        %2304 = vmatpush1.msra.mxu0 0.0
        %2305 = vmatprep.subr.mxu0 0.0
        %2306 = vmatpush1.msra.mxu0 0.0
        %2307 = vmatprep.subr.mxu0 0.0
        %2308 = vmatpush1.msra.mxu0 0.0
        %2309 = vmatprep.subr.mxu0 0.0
        %2310 = vmatpush1.msra.mxu0 0.0
        %2311 = vmatprep.subr.mxu0 0.0
        %2312 = vmatpush1.msra.mxu0 0.0
        %2313 = vmatprep.subr.mxu0 0.0
        %2314 = vmatpush1.msra.mxu0 0.0
        %2315 = vmatprep.subr.mxu0 0.0
        %2316 = vmatpush1.msra.mxu0 0.0
        %2317 = vmatprep.subr.mxu0 0.0
        %2318 = vmatpush1.msra.mxu0 0.0
        %2319 = vmatprep.subr.mxu0 0.0
        %2320 = vmatpush1.msra.mxu0 0.0
        %2321 = vmatprep.subr.mxu0 0.0
        %2322 = vmatpush1.msra.mxu0 0.0
        %2323 = vmatprep.subr.mxu0 0.0
        %2324 = vmatpush1.msra.mxu0 0.0
        %2325 = vmatprep.subr.mxu0 0.0
        %2326 = vmatpush1.msra.mxu0 0.0
        %2327 = vmatprep.subr.mxu0 0.0
        %2328 = vmatpush1.msra.mxu0 0.0
        %2329 = vmatprep.subr.mxu0 0.0
        %2330 = vmatpush1.msra.mxu0 0.0
        %2331 = vmatprep.subr.mxu0 0.0
        %2332 = vmatpush1.msra.mxu0 0.0
        %2333 = vmatprep.subr.mxu0 0.0
        %2334 = vmatpush1.msra.mxu0 0.0
        %2335 = vmatprep.subr.mxu0 0.0
        %2336 = vmatpush1.msra.mxu0 0.0
        %2337 = vmatprep.subr.mxu0 0.0
        %2338 = vmatpush1.msra.mxu0 0.0
        %2339 = vmatprep.subr.mxu0 0.0
        %2340 = vmatpush1.msra.mxu0 0.0
        %2341 = vmatprep.subr.mxu0 0.0
        %2342 = vmatpush1.msra.mxu0 0.0
        %2343 = vmatprep.subr.mxu0 0.0
        %2344 = vmatpush1.msra.mxu0 0.0
        %2345 = vmatprep.subr.mxu0 0.0
        %2346 = vmatpush1.msra.mxu0 0.0
        %2347 = vmatprep.subr.mxu0 0.0
        %2348 = vmatpush1.msra.mxu0 0.0
        %2349 = vmatprep.subr.mxu0 0.0
        %2350 = vmatpush1.msra.mxu0 0.0
        %2351 = vmatprep.mubr.f32.mxu0 0.0
        %2352 = vmatmul.mubr.f32.gmra.mrb[0].mxu0 %v2285
        %v2353 = vpop.f32.mrb[0].mxu0
        %v2354 = vadd.f32 %v2282, %v2353
        %v2355 = vpop.f32.mrb[0].mxu0
        %2356 = vdwg.mxu0
        %s2357 = scalar_lea.vmem %s4, 256
        %v2358 = vld [vmem:[%s2357] sm:$0xff]
        %v2359 = vld [vmem:[%s2357 + $0x8] sm:$0xff]
        %v2360 = vld [vmem:[%s2357 + $0x10] sm:$0xff]
        %v2361 = vld [vmem:[%s2357 + $0x18] sm:$0xff]
        %v2362 = vrot.slane %v2196, 2
        %v2363 = vrot.slane %v2197, 2
        %v2364 = vsel %vm753, %v2362, %v2363
        %v2365 = vsel %vm603, %v2364, 0
        %2367 = vmatprep.subr.mxu0 0.0
        %2368 = vmatpush1.msra.mxu0 %v2358
        %2369 = vmatprep.subr.mxu0 0.0
        %2370 = vmatpush1.msra.mxu0 %v2359
        %2371 = vmatprep.subr.mxu0 0.0
        %2372 = vmatpush1.msra.mxu0 %v2360
        %2373 = vmatprep.subr.mxu0 0.0
        %2374 = vmatpush1.msra.mxu0 %v2361
        %2375 = vmatprep.subr.mxu0 0.0
        %2376 = vmatpush1.msra.mxu0 0.0
        %2377 = vmatprep.subr.mxu0 0.0
        %2378 = vmatpush1.msra.mxu0 0.0
        %2379 = vmatprep.subr.mxu0 0.0
        %2380 = vmatpush1.msra.mxu0 0.0
        %2381 = vmatprep.subr.mxu0 0.0
        %2382 = vmatpush1.msra.mxu0 0.0
        %2383 = vmatprep.subr.mxu0 0.0
        %2384 = vmatpush1.msra.mxu0 0.0
        %2385 = vmatprep.subr.mxu0 0.0
        %2386 = vmatpush1.msra.mxu0 0.0
        %2387 = vmatprep.subr.mxu0 0.0
        %2388 = vmatpush1.msra.mxu0 0.0
        %2389 = vmatprep.subr.mxu0 0.0
        %2390 = vmatpush1.msra.mxu0 0.0
        %2391 = vmatprep.subr.mxu0 0.0
        %2392 = vmatpush1.msra.mxu0 0.0
        %2393 = vmatprep.subr.mxu0 0.0
        %2394 = vmatpush1.msra.mxu0 0.0
        %2395 = vmatprep.subr.mxu0 0.0
        %2396 = vmatpush1.msra.mxu0 0.0
        %2397 = vmatprep.subr.mxu0 0.0
        %2398 = vmatpush1.msra.mxu0 0.0
        %2399 = vmatprep.subr.mxu0 0.0
        %2400 = vmatpush1.msra.mxu0 0.0
        %2401 = vmatprep.subr.mxu0 0.0
        %2402 = vmatpush1.msra.mxu0 0.0
        %2403 = vmatprep.subr.mxu0 0.0
        %2404 = vmatpush1.msra.mxu0 0.0
        %2405 = vmatprep.subr.mxu0 0.0
        %2406 = vmatpush1.msra.mxu0 0.0
        %2407 = vmatprep.subr.mxu0 0.0
        %2408 = vmatpush1.msra.mxu0 0.0
        %2409 = vmatprep.subr.mxu0 0.0
        %2410 = vmatpush1.msra.mxu0 0.0
        %2411 = vmatprep.subr.mxu0 0.0
        %2412 = vmatpush1.msra.mxu0 0.0
        %2413 = vmatprep.subr.mxu0 0.0
        %2414 = vmatpush1.msra.mxu0 0.0
        %2415 = vmatprep.subr.mxu0 0.0
        %2416 = vmatpush1.msra.mxu0 0.0
        %2417 = vmatprep.subr.mxu0 0.0
        %2418 = vmatpush1.msra.mxu0 0.0
        %2419 = vmatprep.subr.mxu0 0.0
        %2420 = vmatpush1.msra.mxu0 0.0
        %2421 = vmatprep.subr.mxu0 0.0
        %2422 = vmatpush1.msra.mxu0 0.0
        %2423 = vmatprep.subr.mxu0 0.0
        %2424 = vmatpush1.msra.mxu0 0.0
        %2425 = vmatprep.subr.mxu0 0.0
        %2426 = vmatpush1.msra.mxu0 0.0
        %2427 = vmatprep.subr.mxu0 0.0
        %2428 = vmatpush1.msra.mxu0 0.0
        %2429 = vmatprep.subr.mxu0 0.0
        %2430 = vmatpush1.msra.mxu0 0.0
        %2431 = vmatprep.mubr.f32.mxu0 0.0
        %2432 = vmatmul.mubr.f32.gmra.mrb[0].mxu0 %v2365
        %v2433 = vpop.f32.mrb[0].mxu0
        %v2434 = vadd.f32 0.0, %v2433
        %v2435 = vpop.f32.mrb[0].mxu0
        %2436 = vdwg.mxu0
        %v2437 = vadd.f32 %v2354, %v2434
        %s2438 = scalar_lea.vmem %s5, 2
        %v2439 = vld [vmem:[%s2438] sm:$0x1]
        %v2441 = vlaneseq
        %v2442 = vshrl.u32 %v2441, 7
        %v2443 = vsub.s32 0, %v2442
        %v2444 = vrot.slane %v2439, %v2443
        %v2446 = vadd.f32 %v2437, %v2444
        %v2447 = vtanh.pop %v2446
        %v2448 = vsub.f32 %v841, %v2447
        %2449 = vst.msk [vmem:[%s286] sm:$0xff] %vm304, %v1913
        %2450 = vst.msk [vmem:[%s293] sm:$0xff] %vm304, %v2448
        %s2451 = sand.u32 %s169, 1
        %s2452 = scalar_lea.sflag [#allocation4], %s2451
        %s2453 = sand.u32 %s169, 1
        %s2454 = smul.addr %s2453, 8
        %s2455 = scalar_lea.vmem [#allocation3], %s2454
        %s2456 = sand.u32 %s195, 1
        %s2457 = scalar_lea.sflag [#allocation6], %s2456
        %s2458 = sand.u32 %s195, 1
        %s2459 = smul.addr %s2458, 8
        %s2460 = scalar_lea.vmem [#allocation5], %s2459
        // Predicated region
        $region45: #{sci_block.1} parent=43 // pred_check
          %p2461 = pneg %p179
        $region46: #{sci_block.1} parent=43 // pred_check_branch
          %2463 = sbr.rel (%p2461) target = $region48
        $region47: #{sci_block.1} parent=43 // pred_region
          %s2465 = ssub.s32 128, 128
          %2466 = vsyncadd %s2452, %s2465
          %s2467 = smul.addr %s25, 128
          %s2468 = scalar_lea.hbm %s6, %s2467
          %s2470 = sshll.u32 %s2455, 4
          %s2471 = int_to_ptr.vmem [resolvable:$true] %s2470
          %2473 = dma.vmem_to_hbm [thread:$0]  %s2471, 128, %s2468, %s2452
        $region48: #{sci_block.1} parent=43 // pred_fallthru
          _
        // Predicated region
        $region49: #{sci_block.1} parent=43 // pred_check
          %p2474 = pneg %p205
        $region50: #{sci_block.1} parent=43 // pred_check_branch
          %2476 = sbr.rel (%p2474) target = $region52
        $region51: #{sci_block.1} parent=43 // pred_region
          %s2478 = ssub.s32 128, 128
          %2479 = vsyncadd %s2457, %s2478
          %s2480 = smul.addr %s25, 128
          %s2481 = scalar_lea.hbm %s7, %s2480
          %s2483 = sshll.u32 %s2460, 4
          %s2484 = int_to_ptr.vmem [resolvable:$true] %s2483
          %2486 = dma.vmem_to_hbm [thread:$0]  %s2484, 128, %s2481, %s2457
        $region52: #{sci_block.1} parent=43 // pred_fallthru
          _
      $region44: #{sci_block.1} parent=5 // pred_fallthru
        _
      %p2487 = scmp.le.s32.totalorder 2, %s20
      // Predicated region
      $region53: #{sci_block.1} parent=5 // pred_check
        %p2488 = pneg %p2487
      $region54: #{sci_block.1} parent=5 // pred_check_branch
        %2490 = sbr.rel (%p2488) target = $region56
      $region55: #{sci_block.1} parent=5 // pred_region
        %s2491 = ssub.s32 %s20, 2
        // Predicated region
        $region57: #{sci_block.1} parent=55 // pred_check
          %p2492 = pneg %p185
        $region58: #{sci_block.1} parent=55 // pred_check_branch
          %2494 = sbr.rel (%p2492) target = $region60
        $region59: #{sci_block.1} parent=55 // pred_region
          %s2495 = sand.u32 %s170, 1
          %s2496 = scalar_lea.sflag [#allocation4], %s2495
          %s2497 = sand.u32 %s170, 1
          %s2498 = smul.addr %s2497, 8
          %s2499 = scalar_lea.vmem [#allocation3], %s2498
          %2500 = dma.done %s2496, 128
        $region60: #{sci_block.1} parent=55 // pred_fallthru
          _
        // Predicated region
        $region61: #{sci_block.1} parent=55 // pred_check
          %p2501 = pneg %p211
        $region62: #{sci_block.1} parent=55 // pred_check_branch
          %2503 = sbr.rel (%p2501) target = $region64
        $region63: #{sci_block.1} parent=55 // pred_region
          %s2504 = sand.u32 %s196, 1
          %s2505 = scalar_lea.sflag [#allocation6], %s2504
          %s2506 = sand.u32 %s196, 1
          %s2507 = smul.addr %s2506, 8
          %s2508 = scalar_lea.vmem [#allocation5], %s2507
          %2509 = dma.done %s2505, 128
        $region64: #{sci_block.1} parent=55 // pred_fallthru
          _
      $region56: #{sci_block.1} parent=5 // pred_fallthru
        _
    $region6: #{sci_block.1} parent=1 // loop_footer
      %s24 = sadd.s32 1, %s20
    $region7: #{sci_block.1} parent=1 // loop_footer_branch
      %19 = sbr.rel target = $region3
    $region8: #{sci_block.1} parent=1 // loop_exit
      _
    %2510 = vsyncpa [#allocation4], 1
    %s2511 = scalar_lea.sflag [#allocation4], 1
    %2512 = vsyncpa %s2511, 1
    %2513 = vsyncpa [#allocation6], 1
    %s2514 = scalar_lea.sflag [#allocation6], 1
    %2515 = vsyncpa %s2514, 1

</llo_original>
